<compile_context>
chip_gen: v5e
topology: v5e:2x2
jax: 0.10.0
libtpu: 0.0.40
codegen_flags: <defaults>
</compile_context>

<pallas_src>
import functools

import jax
import jax.numpy as jnp
import numpy as np
from jax.experimental import pallas as pl
from jax.experimental.pallas import tpu as pltpu


def _round_up(a, b):
    return (a + b - 1) // b * b


def _tpu_generation():
    """Best-effort TPU generation detection (falls back to a safe config)."""
    try:
        kind = jax.devices()[0].device_kind.lower()
    except Exception:
        return "other"
    if "v7" in kind or "7x" in kind:
        return "v7x"
    if "v6" in kind:
        return "v6e"
    if "v5e" in kind or "v5 lite" in kind or "v5lite" in kind:
        return "v5e"
    return "other"


# -----------------------------------------------------------------------------
# B-spline basis (Cox-de-Boor), unrolled at trace time over a static grid.
# Only the first (S - degree) basis functions are nonzero at the final degree
# level (the PyTorch loop never writes the trailing `degree` rows), so only
# those are computed / contracted.
# -----------------------------------------------------------------------------
def bspline_basis_fast(x, grid, degree):
    """In-kernel version. `grid` is a tuple of Python floats; x may be bf16/f32."""
    S = len(grid) - 1
    one = jnp.ones((), x.dtype)
    zero = jnp.zeros((), x.dtype)
    # degree-0 indicator of grid[i] <= x < grid[i+1] from a single >= chain.
    ge = [jnp.where(x >= grid[i], one, zero) for i in range(S + 1)]
    basis = [ge[i] - ge[i + 1] for i in range(S)]
    for d in range(1, degree + 1):
        new_basis = []
        for i in range(S - d):
            den1 = grid[i + d] - grid[i]
            den2 = grid[i + d + 1] - grid[i + 1]
            # Constant reciprocals (sign folded in); x - grid[i] recomputed
            # inline on purpose: 1 VALU op is cheaper than the spill a hoisted
            # `diffs` list forces.
            t1 = ((x - grid[i]) * (1.0 / den1)) * basis[i] if den1 != 0.0 else None
            t2 = ((x - grid[i + d + 1]) * (-1.0 / den2)) * basis[i + 1] if den2 != 0.0 else None
            if t1 is None and t2 is None:
                new_basis.append(jnp.zeros_like(x))
            elif t1 is None:
                new_basis.append(t2)
            elif t2 is None:
                new_basis.append(t1)
            else:
                new_basis.append(t1 + t2)
        basis = new_basis
    return basis  # length S - degree


def bspline_basis_ref(x, grid, degree):
    """Straightforward f32 reference version (per-interval selects + divides)."""
    S = len(grid) - 1
    basis = [
        jnp.where((x >= grid[i]) & (x < grid[i + 1]),
                  jnp.ones_like(x), jnp.zeros_like(x))
        for i in range(S)
    ]
    for d in range(1, degree + 1):
        new_basis = []
        for i in range(S - d):
            den1 = grid[i + d] - grid[i]
            den2 = grid[i + d + 1] - grid[i + 1]
            b1 = (x - grid[i]) * basis[i] / den1 if den1 != 0.0 else jnp.zeros_like(x)
            b2 = (grid[i + d + 1] - x) * basis[i + 1] / den2 if den2 != 0.0 else jnp.zeros_like(x)
            new_basis.append(b1 + b2)
        basis = new_basis
    return basis


# -----------------------------------------------------------------------------
# Pallas kernel: one tile of tile_n patch-columns at a time (lane axis = N).
# -----------------------------------------------------------------------------
def kan_conv_kernel(x_ref, w_ref, o_ref, feat_ref, *, spline_grid, degree, k_pad, strip):
    tile_n = x_ref.shape[1]
    # Evaluate SiLU + the Cox-de-Boor pyramid over lane strips so the live set
    # of (k_pad, strip) temporaries stays close to the 64-vreg register file
    # (cuts spill ld/st that would otherwise fight the feat-slab stores).
    for c0 in range(0, tile_n, strip):
        x = x_ref[:, pl.ds(c0, strip)]
        # chunk 0: SiLU(patch) for the beta path
        feat_ref[pl.ds(0, k_pad), pl.ds(c0, strip)] = (
            x * jax.nn.sigmoid(x)).astype(feat_ref.dtype)
        # chunks 1..S_eff: B-spline basis functions
        basis = bspline_basis_fast(x, spline_grid, degree)
        for s, b in enumerate(basis):
            feat_ref[pl.ds((s + 1) * k_pad, k_pad), pl.ds(c0, strip)] = b.astype(feat_ref.dtype)
    # one MXU contraction over the folded (spline, k) axis -> (Cout_pad, tile_n)
    o_ref[...] = jnp.dot(w_ref[...], feat_ref[...],
                         preferred_element_type=jnp.float32).astype(o_ref.dtype)


# -----------------------------------------------------------------------------
# Generation-aware tile / VMEM selection.
# -----------------------------------------------------------------------------
def _select_tiling(gen, N, K_pad, F_total, Cout_pad, elem_bytes):
    cfg = {
        # budget: what the per-step footprint must fit in; vmem_limit: explicit
        # scoped-VMEM limit passed to the compiler (None -> leave default).
        "v7x":   dict(budget=36 << 20, vmem_limit=48 << 20, max_tile=4096),
        "v6e":   dict(budget=64 << 20, vmem_limit=100 << 20, max_tile=4096),
        "v5e":   dict(budget=48 << 20, vmem_limit=96 << 20, max_tile=4096),
        "other": dict(budget=12 << 20, vmem_limit=None,     max_tile=2048),
    }[gen]
    n_lanes = _round_up(N, 128)

    def footprint(t):
        strip = 256 if t % 256 == 0 else 128
        return (2 * K_pad * t * elem_bytes            # double-buffered input tile
                + 2 * Cout_pad * t * 4                # double-buffered f32 output tile
                + F_total * t * elem_bytes            # feature scratch slab
                + 2 * Cout_pad * F_total * elem_bytes  # resident folded weights
                + 14 * K_pad * strip * elem_bytes)    # live basis-pyramid temporaries

    tile_n = cfg["max_tile"]
    while tile_n > 128 and footprint(tile_n) > cfg["budget"]:
        tile_n -= 128

    # Never tile wider than the (padded) problem.  Only split the N axis on
    # v7x (2 TensorCores) and only if each half still gets >= 512 lanes; on
    # single-TC chips (v5e/v6e) a forced split is pure per-step overhead.
    if n_lanes <= tile_n:
        if gen == "v7x" and n_lanes >= 1024:
            tile_n = _round_up(n_lanes // 2, 128)
        else:
            tile_n = n_lanes
    strip = 256 if tile_n % 256 == 0 else 128
    return tile_n, strip, cfg["vmem_limit"]


# -----------------------------------------------------------------------------
# Wrapper
# -----------------------------------------------------------------------------
def kan_conv2d_pallas(x, beta_weights, spline_weights, coeffs, *,
                      kernel_size, stride, padding, grid, degree,
                      precision="auto"):
    """x: (B, Cin, H, W) NCHW f32. Returns (B, Cout, OH, OW) f32.

    precision: "auto" (bf16 elementwise/slab/MXU-operands on v6e/v7x, f32
    elsewhere), "f32", or "bf16".
    """
    B, Cin, H, W = x.shape
    Cout = beta_weights.shape[0]
    kh, kw = kernel_size
    sh, sw_ = stride
    ph, pw = padding
    OH = (H + 2 * ph - kh) // sh + 1
    OW = (W + 2 * pw - kw) // sw_ + 1
    K = Cin * kh * kw
    S = coeffs.shape[0]
    S_eff = S - degree                 # trailing `degree` basis fns are identically 0
    K_pad = _round_up(K, 8)            # sublane-align each feature chunk
    Cout_pad = _round_up(Cout, 8)      # sublane-align the output rows
    F_total = (S_eff + 1) * K_pad
    N = B * OH * OW

    gen = _tpu_generation()
    if precision == "auto":
        use_bf16 = gen in ("v6e", "v7x")   # bf16 VPU/EUP only on v6e/v7x
    else:
        use_bf16 = (precision == "bf16")
    comp_dt = jnp.bfloat16 if use_bf16 else jnp.float32
    comp_b = jnp.dtype(comp_dt).itemsize

    # ---- im2col glue (plain JAX), transposed so N lands on the lane axis ----
    xp = jnp.pad(x, ((0, 0), (0, 0), (ph, ph), (pw, pw)))
    cols = []
    for p in range(kh):
        for q in range(kw):
            cols.append(xp[:, :, p:p + sh * OH:sh, q:q + sw_ * OW:sw_])  # (B,Cin,OH,OW)
    # (B, Cin, kh*kw, OH, OW) -> (Cin, kh*kw, B, OH, OW) -> (K, N); k=(c,p,q) row-major
    P = jnp.stack(cols, axis=2)
    P = jnp.transpose(P, (1, 2, 0, 3, 4)).reshape(K, N).astype(comp_dt)

    # ---- parameter folding: one (Cout_pad, (S_eff+1)*K_pad) matrix (fold in f32) ----
    pad_k = lambda a: jnp.pad(a, ((0, 0), (0, K_pad - K)))
    chunks = [pad_k(beta_weights.reshape(Cout, K).astype(jnp.float32))]
    sw_full = (spline_weights[None] * coeffs).reshape(S, Cout, K).astype(jnp.float32)
    for s in range(S_eff):
        chunks.append(pad_k(sw_full[s]))
    W_folded = jnp.concatenate(chunks, axis=1)                 # (Cout, F_total)
    W_folded = jnp.pad(W_folded, ((0, Cout_pad - Cout), (0, 0))).astype(comp_dt)

    # ---- generation-aware tile / VMEM selection ----
    tile_n, strip, vmem_limit = _select_tiling(gen, N, K_pad, F_total, Cout_pad, comp_b)
    N_pad = _round_up(N, tile_n)

    # Zero-pad rows/cols; weight columns for padded k are zero, so the (nonzero)
    # basis of padded rows contributes nothing.  Padded N columns are sliced off.
    P = jnp.pad(P, ((0, K_pad - K), (0, N_pad - N)))

    kernel = functools.partial(
        kan_conv_kernel, spline_grid=tuple(float(g) for g in grid),
        degree=degree, k_pad=K_pad, strip=strip)

    cp_kwargs = dict(dimension_semantics=("parallel",))
    if vmem_limit is not None:
        cp_kwargs["vmem_limit_bytes"] = int(vmem_limit)

    cost = pl.CostEstimate(
        flops=int(2 * Cout_pad * F_total * N_pad + 150 * K * N),  # MXU + rough VPU work
        transcendentals=int(K * N),                               # sigmoid
        bytes_accessed=int(K_pad * N_pad * comp_b + Cout_pad * N_pad * 4
                           + Cout_pad * F_total * comp_b),
    )

    out_t = pl.pallas_call(
        kernel,
        out_shape=jax.ShapeDtypeStruct((Cout_pad, N_pad), jnp.float32),
        grid_spec=pltpu.PrefetchScalarGridSpec(
            num_scalar_prefetch=0,
            grid=(N_pad // tile_n,),
            in_specs=[
                pl.BlockSpec((K_pad, tile_n), lambda n: (0, n)),
                pl.BlockSpec((Cout_pad, F_total), lambda n: (0, 0)),
            ],
            out_specs=pl.BlockSpec((Cout_pad, tile_n), lambda n: (0, n)),
            scratch_shapes=[pltpu.VMEM((F_total, tile_n), comp_dt)],
        ),
        compiler_params=pltpu.CompilerParams(**cp_kwargs),
        cost_estimate=cost,
    )(P, W_folded)

    out = out_t[:Cout, :N].reshape(Cout, B, OH, OW)
    return jnp.transpose(out, (1, 0, 2, 3))  # (B, Cout, OH, OW) NCHW


# -----------------------------------------------------------------------------
# Pure-JAX f32 reference (independent layout & math) for correctness check.
# -----------------------------------------------------------------------------
def kan_conv2d_ref(x, beta_weights, spline_weights, coeffs, *,
                   kernel_size, stride, padding, grid, degree):
    B, Cin, H, W = x.shape
    Cout = beta_weights.shape[0]
    kh, kw = kernel_size
    sh, sw_ = stride
    ph, pw = padding
    OH = (H + 2 * ph - kh) // sh + 1
    OW = (W + 2 * pw - kw) // sw_ + 1
    K = Cin * kh * kw
    S = coeffs.shape[0]
    S_eff = S - degree

    xp = jnp.pad(x, ((0, 0), (0, 0), (ph, ph), (pw, pw)))
    cols = []
    for p in range(kh):
        for q in range(kw):
            cols.append(xp[:, :, p:p + sh * OH:sh, q:q + sw_ * OW:sw_])
    P = jnp.stack(cols, axis=2)
    P = jnp.transpose(P, (0, 3, 4, 1, 2)).reshape(B * OH * OW, K).astype(jnp.float32)

    bw_mat = beta_weights.reshape(Cout, K).T
    sw_full = (spline_weights[None] * coeffs).reshape(S, Cout, K)
    sw_mat = jnp.transpose(sw_full[:S_eff], (0, 2, 1))

    silu = P * jax.nn.sigmoid(P)
    out = silu @ bw_mat
    basis = bspline_basis_ref(P, tuple(grid), degree)
    for s in range(len(basis)):
        out = out + basis[s] @ sw_mat[s]
    out = out.reshape(B, OH, OW, Cout)
    return jnp.transpose(out, (0, 3, 1, 2))


def make_extended_grid(knots, degree):
    g = list(np.linspace(-1.0, 1.0, knots))
    bucket = (g[-1] - g[0]) / (knots - 1)
    for _ in range(degree):
        g = [g[0] - bucket] + g + [g[-1] + bucket]
    return [float(v) for v in g]


if __name__ == "__main__":
    # Module hyperparameters (matching the PyTorch __init__ defaults).
    in_channels, out_channels = 4, 8
    kernel_size = (3, 3)
    stride = (1, 1)
    padding = (1, 1)
    spline_points = 5          # knots
    spline_degree = 3
    spline_coeff_var = 0.1

    S = spline_points + 2 * spline_degree - 1   # spline_coefficients = 10
    grid = make_extended_grid(spline_points, spline_degree)

    # Deterministic parameter / input init.
    key = jax.random.PRNGKey(0)
    k_bw, k_sw, k_c, k_x = jax.random.split(key, 4)
    beta_weights = jax.random.normal(
        k_bw, (out_channels, in_channels, *kernel_size), dtype=jnp.float32)
    spline_weights = jax.random.normal(
        k_sw, (out_channels, in_channels, *kernel_size), dtype=jnp.float32)
    coeffs = (np.sqrt(spline_coeff_var) * jax.random.normal(
        k_c, (S, out_channels, in_channels, *kernel_size),
        dtype=jnp.float32)).astype(jnp.float32)

    x = jax.random.normal(k_x, (2, in_channels, 16, 16), dtype=jnp.float32)

    common = dict(kernel_size=kernel_size, stride=stride, padding=padding,
                  grid=grid, degree=spline_degree)

    ref = jax.block_until_ready(
        kan_conv2d_ref(x, beta_weights, spline_weights, coeffs, **common))

    # 1) Tight check of the kernel structure / math in forced-f32 precision.
    out_f32 = jax.block_until_ready(
        kan_conv2d_pallas(x, beta_weights, spline_weights, coeffs,
                          precision="f32", **common))
    assert out_f32.shape == (2, out_channels, 16, 16), out_f32.shape
    np.testing.assert_allclose(np.asarray(out_f32), np.asarray(ref),
                               atol=2e-4, rtol=2e-4)

    # 2) Generation-preferred precision (bf16 elementwise + bf16 slab/MXU
    #    operands on v6e/v7x, f32 accumulation). Tolerance is loose because
    #    bf16 has ~3 significant digits; the exact-math validation is (1).
    out_auto = jax.block_until_ready(
        kan_conv2d_pallas(x, beta_weights, spline_weights, coeffs,
                          precision="auto", **common))
    assert out_auto.shape == (2, out_channels, 16, 16), out_auto.shape
    if _tpu_generation() in ("v6e", "v7x"):
        np.testing.assert_allclose(np.asarray(out_auto), np.asarray(ref),
                                   atol=5e-1, rtol=5e-2)
    else:
        np.testing.assert_allclose(np.asarray(out_auto), np.asarray(ref),
                                   atol=2e-4, rtol=2e-4)

    print("KERNEL_OK")
</pallas_src>

<mosaic_0001>
module attributes {stable_mosaic.version = 11 : i64} {
  func.func @kan_conv_kernel(%arg0: i32, %arg1: memref<40x512xf32, #tpu.memory_space<vmem>>, %arg2: memref<8x320xf32, #tpu.memory_space<vmem>>, %arg3: memref<8x512xf32, #tpu.memory_space<vmem>>, %arg4: memref<320x512xf32, #tpu.memory_space<vmem>>) attributes {dimension_semantics = [#tpu.dimension_semantics<parallel>], iteration_bounds = array<i64: 1>, scalar_prefetch = 0 : i64, scratch_operands = 1 : i64, tpu.core_type = #tpu.core_type<tc>, window_params = [{transform_indices = @transform_0, window_bounds = array<i64: 40, 512>}, {pipeline_mode = #tpu.pipeline_mode<synchronous>, transform_indices = @transform_1, window_bounds = array<i64: 8, 320>}, {transform_indices = @transform_2, window_bounds = array<i64: 8, 512>}]} {
    %c0 = arith.constant 0 : index
    %c0_0 = arith.constant 0 : index
    %0 = vector.load %arg1[%c0, %c0_0] : memref<40x512xf32, #tpu.memory_space<vmem>>, vector<40x256xf32>
    %1 = arith.negf %0 : vector<40x256xf32>
    %2 = math.exp %1 : vector<40x256xf32>
    %cst = arith.constant 1.000000e+00 : f32
    %3 = vector.broadcast %cst : f32 to vector<40x256xf32>
    %4 = arith.addf %3, %2 : vector<40x256xf32>
    %5 = arith.divf %3, %4 : vector<40x256xf32>
    %6 = arith.mulf %0, %5 : vector<40x256xf32>
    %c0_1 = arith.constant 0 : index
    %c0_2 = arith.constant 0 : index
    %7 = vector.load %arg4[%c0_1, %c0_2] : memref<320x512xf32, #tpu.memory_space<vmem>>, vector<40x256xf32>
    tpu.vector_store %arg4[%c0_1, %c0_2], %6 {strides = array<i32>} : memref<320x512xf32, #tpu.memory_space<vmem>>, vector<40x256xf32>,
    %cst_3 = arith.constant -2.500000e+00 : f32
    %8 = vector.broadcast %cst_3 : f32 to vector<40x256xf32>
    %9 = arith.cmpf oge, %0, %8 : vector<40x256xf32>
    %cst_4 = arith.constant 1.000000e+00 : f32
    %cst_5 = arith.constant 0.000000e+00 : f32
    %10 = vector.broadcast %cst_4 : f32 to vector<40x256xf32>
    %11 = vector.broadcast %cst_5 : f32 to vector<40x256xf32>
    %12 = arith.select %9, %10, %11 : vector<40x256xi1>, vector<40x256xf32>
    %cst_6 = arith.constant -2.000000e+00 : f32
    %13 = vector.broadcast %cst_6 : f32 to vector<40x256xf32>
    %14 = arith.cmpf oge, %0, %13 : vector<40x256xf32>
    %cst_7 = arith.constant 1.000000e+00 : f32
    %cst_8 = arith.constant 0.000000e+00 : f32
    %15 = vector.broadcast %cst_7 : f32 to vector<40x256xf32>
    %16 = vector.broadcast %cst_8 : f32 to vector<40x256xf32>
    %17 = arith.select %14, %15, %16 : vector<40x256xi1>, vector<40x256xf32>
    %cst_9 = arith.constant -1.500000e+00 : f32
    %18 = vector.broadcast %cst_9 : f32 to vector<40x256xf32>
    %19 = arith.cmpf oge, %0, %18 : vector<40x256xf32>
    %cst_10 = arith.constant 1.000000e+00 : f32
    %cst_11 = arith.constant 0.000000e+00 : f32
    %20 = vector.broadcast %cst_10 : f32 to vector<40x256xf32>
    %21 = vector.broadcast %cst_11 : f32 to vector<40x256xf32>
    %22 = arith.select %19, %20, %21 : vector<40x256xi1>, vector<40x256xf32>
    %cst_12 = arith.constant -1.000000e+00 : f32
    %23 = vector.broadcast %cst_12 : f32 to vector<40x256xf32>
    %24 = arith.cmpf oge, %0, %23 : vector<40x256xf32>
    %cst_13 = arith.constant 1.000000e+00 : f32
    %cst_14 = arith.constant 0.000000e+00 : f32
    %25 = vector.broadcast %cst_13 : f32 to vector<40x256xf32>
    %26 = vector.broadcast %cst_14 : f32 to vector<40x256xf32>
    %27 = arith.select %24, %25, %26 : vector<40x256xi1>, vector<40x256xf32>
    %cst_15 = arith.constant -5.000000e-01 : f32
    %28 = vector.broadcast %cst_15 : f32 to vector<40x256xf32>
    %29 = arith.cmpf oge, %0, %28 : vector<40x256xf32>
    %cst_16 = arith.constant 1.000000e+00 : f32
    %cst_17 = arith.constant 0.000000e+00 : f32
    %30 = vector.broadcast %cst_16 : f32 to vector<40x256xf32>
    %31 = vector.broadcast %cst_17 : f32 to vector<40x256xf32>
    %32 = arith.select %29, %30, %31 : vector<40x256xi1>, vector<40x256xf32>
    %cst_18 = arith.constant 0.000000e+00 : f32
    %33 = vector.broadcast %cst_18 : f32 to vector<40x256xf32>
    %34 = arith.cmpf oge, %0, %33 : vector<40x256xf32>
    %cst_19 = arith.constant 1.000000e+00 : f32
    %cst_20 = arith.constant 0.000000e+00 : f32
    %35 = vector.broadcast %cst_19 : f32 to vector<40x256xf32>
    %36 = vector.broadcast %cst_20 : f32 to vector<40x256xf32>
    %37 = arith.select %34, %35, %36 : vector<40x256xi1>, vector<40x256xf32>
    %cst_21 = arith.constant 5.000000e-01 : f32
    %38 = vector.broadcast %cst_21 : f32 to vector<40x256xf32>
    %39 = arith.cmpf oge, %0, %38 : vector<40x256xf32>
    %cst_22 = arith.constant 1.000000e+00 : f32
    %cst_23 = arith.constant 0.000000e+00 : f32
    %40 = vector.broadcast %cst_22 : f32 to vector<40x256xf32>
    %41 = vector.broadcast %cst_23 : f32 to vector<40x256xf32>
    %42 = arith.select %39, %40, %41 : vector<40x256xi1>, vector<40x256xf32>
    %cst_24 = arith.constant 1.000000e+00 : f32
    %43 = vector.broadcast %cst_24 : f32 to vector<40x256xf32>
    %44 = arith.cmpf oge, %0, %43 : vector<40x256xf32>
    %cst_25 = arith.constant 1.000000e+00 : f32
    %cst_26 = arith.constant 0.000000e+00 : f32
    %45 = vector.broadcast %cst_25 : f32 to vector<40x256xf32>
    %46 = vector.broadcast %cst_26 : f32 to vector<40x256xf32>
    %47 = arith.select %44, %45, %46 : vector<40x256xi1>, vector<40x256xf32>
    %cst_27 = arith.constant 1.500000e+00 : f32
    %48 = vector.broadcast %cst_27 : f32 to vector<40x256xf32>
    %49 = arith.cmpf oge, %0, %48 : vector<40x256xf32>
    %cst_28 = arith.constant 1.000000e+00 : f32
    %cst_29 = arith.constant 0.000000e+00 : f32
    %50 = vector.broadcast %cst_28 : f32 to vector<40x256xf32>
    %51 = vector.broadcast %cst_29 : f32 to vector<40x256xf32>
    %52 = arith.select %49, %50, %51 : vector<40x256xi1>, vector<40x256xf32>
    %cst_30 = arith.constant 2.000000e+00 : f32
    %53 = vector.broadcast %cst_30 : f32 to vector<40x256xf32>
    %54 = arith.cmpf oge, %0, %53 : vector<40x256xf32>
    %cst_31 = arith.constant 1.000000e+00 : f32
    %cst_32 = arith.constant 0.000000e+00 : f32
    %55 = vector.broadcast %cst_31 : f32 to vector<40x256xf32>
    %56 = vector.broadcast %cst_32 : f32 to vector<40x256xf32>
    %57 = arith.select %54, %55, %56 : vector<40x256xi1>, vector<40x256xf32>
    %cst_33 = arith.constant 2.500000e+00 : f32
    %58 = vector.broadcast %cst_33 : f32 to vector<40x256xf32>
    %59 = arith.cmpf oge, %0, %58 : vector<40x256xf32>
    %cst_34 = arith.constant 1.000000e+00 : f32
    %cst_35 = arith.constant 0.000000e+00 : f32
    %60 = vector.broadcast %cst_34 : f32 to vector<40x256xf32>
    %61 = vector.broadcast %cst_35 : f32 to vector<40x256xf32>
    %62 = arith.select %59, %60, %61 : vector<40x256xi1>, vector<40x256xf32>
    %63 = arith.subf %12, %17 : vector<40x256xf32>
    %64 = arith.subf %17, %22 : vector<40x256xf32>
    %65 = arith.subf %22, %27 : vector<40x256xf32>
    %66 = arith.subf %27, %32 : vector<40x256xf32>
    %67 = arith.subf %32, %37 : vector<40x256xf32>
    %68 = arith.subf %37, %42 : vector<40x256xf32>
    %69 = arith.subf %42, %47 : vector<40x256xf32>
    %70 = arith.subf %47, %52 : vector<40x256xf32>
    %71 = arith.subf %52, %57 : vector<40x256xf32>
    %72 = arith.subf %57, %62 : vector<40x256xf32>
    %cst_36 = arith.constant -2.500000e+00 : f32
    %73 = vector.broadcast %cst_36 : f32 to vector<40x256xf32>
    %74 = arith.subf %0, %73 : vector<40x256xf32>
    %cst_37 = arith.constant 2.000000e+00 : f32
    %75 = vector.broadcast %cst_37 : f32 to vector<40x256xf32>
    %76 = arith.mulf %74, %75 : vector<40x256xf32>
    %77 = arith.mulf %76, %63 : vector<40x256xf32>
    %cst_38 = arith.constant -1.500000e+00 : f32
    %78 = vector.broadcast %cst_38 : f32 to vector<40x256xf32>
    %79 = arith.subf %0, %78 : vector<40x256xf32>
    %cst_39 = arith.constant -2.000000e+00 : f32
    %80 = vector.broadcast %cst_39 : f32 to vector<40x256xf32>
    %81 = arith.mulf %79, %80 : vector<40x256xf32>
    %82 = arith.mulf %81, %64 : vector<40x256xf32>
    %83 = arith.addf %77, %82 : vector<40x256xf32>
    %cst_40 = arith.constant -2.000000e+00 : f32
    %84 = vector.broadcast %cst_40 : f32 to vector<40x256xf32>
    %85 = arith.subf %0, %84 : vector<40x256xf32>
    %cst_41 = arith.constant 2.000000e+00 : f32
    %86 = vector.broadcast %cst_41 : f32 to vector<40x256xf32>
    %87 = arith.mulf %85, %86 : vector<40x256xf32>
    %88 = arith.mulf %87, %64 : vector<40x256xf32>
    %cst_42 = arith.constant -1.000000e+00 : f32
    %89 = vector.broadcast %cst_42 : f32 to vector<40x256xf32>
    %90 = arith.subf %0, %89 : vector<40x256xf32>
    %cst_43 = arith.constant -2.000000e+00 : f32
    %91 = vector.broadcast %cst_43 : f32 to vector<40x256xf32>
    %92 = arith.mulf %90, %91 : vector<40x256xf32>
    %93 = arith.mulf %92, %65 : vector<40x256xf32>
    %94 = arith.addf %88, %93 : vector<40x256xf32>
    %cst_44 = arith.constant -1.500000e+00 : f32
    %95 = vector.broadcast %cst_44 : f32 to vector<40x256xf32>
    %96 = arith.subf %0, %95 : vector<40x256xf32>
    %cst_45 = arith.constant 2.000000e+00 : f32
    %97 = vector.broadcast %cst_45 : f32 to vector<40x256xf32>
    %98 = arith.mulf %96, %97 : vector<40x256xf32>
    %99 = arith.mulf %98, %65 : vector<40x256xf32>
    %cst_46 = arith.constant -5.000000e-01 : f32
    %100 = vector.broadcast %cst_46 : f32 to vector<40x256xf32>
    %101 = arith.subf %0, %100 : vector<40x256xf32>
    %cst_47 = arith.constant -2.000000e+00 : f32
    %102 = vector.broadcast %cst_47 : f32 to vector<40x256xf32>
    %103 = arith.mulf %101, %102 : vector<40x256xf32>
    %104 = arith.mulf %103, %66 : vector<40x256xf32>
    %105 = arith.addf %99, %104 : vector<40x256xf32>
    %cst_48 = arith.constant -1.000000e+00 : f32
    %106 = vector.broadcast %cst_48 : f32 to vector<40x256xf32>
    %107 = arith.subf %0, %106 : vector<40x256xf32>
    %cst_49 = arith.constant 2.000000e+00 : f32
    %108 = vector.broadcast %cst_49 : f32 to vector<40x256xf32>
    %109 = arith.mulf %107, %108 : vector<40x256xf32>
    %110 = arith.mulf %109, %66 : vector<40x256xf32>
    %cst_50 = arith.constant 0.000000e+00 : f32
    %111 = vector.broadcast %cst_50 : f32 to vector<40x256xf32>
    %112 = arith.subf %0, %111 : vector<40x256xf32>
    %cst_51 = arith.constant -2.000000e+00 : f32
    %113 = vector.broadcast %cst_51 : f32 to vector<40x256xf32>
    %114 = arith.mulf %112, %113 : vector<40x256xf32>
    %115 = arith.mulf %114, %67 : vector<40x256xf32>
    %116 = arith.addf %110, %115 : vector<40x256xf32>
    %cst_52 = arith.constant -5.000000e-01 : f32
    %117 = vector.broadcast %cst_52 : f32 to vector<40x256xf32>
    %118 = arith.subf %0, %117 : vector<40x256xf32>
    %cst_53 = arith.constant 2.000000e+00 : f32
    %119 = vector.broadcast %cst_53 : f32 to vector<40x256xf32>
    %120 = arith.mulf %118, %119 : vector<40x256xf32>
    %121 = arith.mulf %120, %67 : vector<40x256xf32>
    %cst_54 = arith.constant 5.000000e-01 : f32
    %122 = vector.broadcast %cst_54 : f32 to vector<40x256xf32>
    %123 = arith.subf %0, %122 : vector<40x256xf32>
    %cst_55 = arith.constant -2.000000e+00 : f32
    %124 = vector.broadcast %cst_55 : f32 to vector<40x256xf32>
    %125 = arith.mulf %123, %124 : vector<40x256xf32>
    %126 = arith.mulf %125, %68 : vector<40x256xf32>
    %127 = arith.addf %121, %126 : vector<40x256xf32>
    %cst_56 = arith.constant 0.000000e+00 : f32
    %128 = vector.broadcast %cst_56 : f32 to vector<40x256xf32>
    %129 = arith.subf %0, %128 : vector<40x256xf32>
    %cst_57 = arith.constant 2.000000e+00 : f32
    %130 = vector.broadcast %cst_57 : f32 to vector<40x256xf32>
    %131 = arith.mulf %129, %130 : vector<40x256xf32>
    %132 = arith.mulf %131, %68 : vector<40x256xf32>
    %cst_58 = arith.constant 1.000000e+00 : f32
    %133 = vector.broadcast %cst_58 : f32 to vector<40x256xf32>
    %134 = arith.subf %0, %133 : vector<40x256xf32>
    %cst_59 = arith.constant -2.000000e+00 : f32
    %135 = vector.broadcast %cst_59 : f32 to vector<40x256xf32>
    %136 = arith.mulf %134, %135 : vector<40x256xf32>
    %137 = arith.mulf %136, %69 : vector<40x256xf32>
    %138 = arith.addf %132, %137 : vector<40x256xf32>
    %cst_60 = arith.constant 5.000000e-01 : f32
    %139 = vector.broadcast %cst_60 : f32 to vector<40x256xf32>
    %140 = arith.subf %0, %139 : vector<40x256xf32>
    %cst_61 = arith.constant 2.000000e+00 : f32
    %141 = vector.broadcast %cst_61 : f32 to vector<40x256xf32>
    %142 = arith.mulf %140, %141 : vector<40x256xf32>
    %143 = arith.mulf %142, %69 : vector<40x256xf32>
    %cst_62 = arith.constant 1.500000e+00 : f32
    %144 = vector.broadcast %cst_62 : f32 to vector<40x256xf32>
    %145 = arith.subf %0, %144 : vector<40x256xf32>
    %cst_63 = arith.constant -2.000000e+00 : f32
    %146 = vector.broadcast %cst_63 : f32 to vector<40x256xf32>
    %147 = arith.mulf %145, %146 : vector<40x256xf32>
    %148 = arith.mulf %147, %70 : vector<40x256xf32>
    %149 = arith.addf %143, %148 : vector<40x256xf32>
    %cst_64 = arith.constant 1.000000e+00 : f32
    %150 = vector.broadcast %cst_64 : f32 to vector<40x256xf32>
    %151 = arith.subf %0, %150 : vector<40x256xf32>
    %cst_65 = arith.constant 2.000000e+00 : f32
    %152 = vector.broadcast %cst_65 : f32 to vector<40x256xf32>
    %153 = arith.mulf %151, %152 : vector<40x256xf32>
    %154 = arith.mulf %153, %70 : vector<40x256xf32>
    %cst_66 = arith.constant 2.000000e+00 : f32
    %155 = vector.broadcast %cst_66 : f32 to vector<40x256xf32>
    %156 = arith.subf %0, %155 : vector<40x256xf32>
    %cst_67 = arith.constant -2.000000e+00 : f32
    %157 = vector.broadcast %cst_67 : f32 to vector<40x256xf32>
    %158 = arith.mulf %156, %157 : vector<40x256xf32>
    %159 = arith.mulf %158, %71 : vector<40x256xf32>
    %160 = arith.addf %154, %159 : vector<40x256xf32>
    %cst_68 = arith.constant 1.500000e+00 : f32
    %161 = vector.broadcast %cst_68 : f32 to vector<40x256xf32>
    %162 = arith.subf %0, %161 : vector<40x256xf32>
    %cst_69 = arith.constant 2.000000e+00 : f32
    %163 = vector.broadcast %cst_69 : f32 to vector<40x256xf32>
    %164 = arith.mulf %162, %163 : vector<40x256xf32>
    %165 = arith.mulf %164, %71 : vector<40x256xf32>
    %cst_70 = arith.constant 2.500000e+00 : f32
    %166 = vector.broadcast %cst_70 : f32 to vector<40x256xf32>
    %167 = arith.subf %0, %166 : vector<40x256xf32>
    %cst_71 = arith.constant -2.000000e+00 : f32
    %168 = vector.broadcast %cst_71 : f32 to vector<40x256xf32>
    %169 = arith.mulf %167, %168 : vector<40x256xf32>
    %170 = arith.mulf %169, %72 : vector<40x256xf32>
    %171 = arith.addf %165, %170 : vector<40x256xf32>
    %cst_72 = arith.constant -2.500000e+00 : f32
    %172 = vector.broadcast %cst_72 : f32 to vector<40x256xf32>
    %173 = arith.subf %0, %172 : vector<40x256xf32>
    %cst_73 = arith.constant 1.000000e+00 : f32
    %174 = vector.broadcast %cst_73 : f32 to vector<40x256xf32>
    %175 = arith.mulf %173, %174 : vector<40x256xf32>
    %176 = arith.mulf %175, %83 : vector<40x256xf32>
    %cst_74 = arith.constant -1.000000e+00 : f32
    %177 = vector.broadcast %cst_74 : f32 to vector<40x256xf32>
    %178 = arith.subf %0, %177 : vector<40x256xf32>
    %cst_75 = arith.constant -1.000000e+00 : f32
    %179 = vector.broadcast %cst_75 : f32 to vector<40x256xf32>
    %180 = arith.mulf %178, %179 : vector<40x256xf32>
    %181 = arith.mulf %180, %94 : vector<40x256xf32>
    %182 = arith.addf %176, %181 : vector<40x256xf32>
    %cst_76 = arith.constant -2.000000e+00 : f32
    %183 = vector.broadcast %cst_76 : f32 to vector<40x256xf32>
    %184 = arith.subf %0, %183 : vector<40x256xf32>
    %cst_77 = arith.constant 1.000000e+00 : f32
    %185 = vector.broadcast %cst_77 : f32 to vector<40x256xf32>
    %186 = arith.mulf %184, %185 : vector<40x256xf32>
    %187 = arith.mulf %186, %94 : vector<40x256xf32>
    %cst_78 = arith.constant -5.000000e-01 : f32
    %188 = vector.broadcast %cst_78 : f32 to vector<40x256xf32>
    %189 = arith.subf %0, %188 : vector<40x256xf32>
    %cst_79 = arith.constant -1.000000e+00 : f32
    %190 = vector.broadcast %cst_79 : f32 to vector<40x256xf32>
    %191 = arith.mulf %189, %190 : vector<40x256xf32>
    %192 = arith.mulf %191, %105 : vector<40x256xf32>
    %193 = arith.addf %187, %192 : vector<40x256xf32>
    %cst_80 = arith.constant -1.500000e+00 : f32
    %194 = vector.broadcast %cst_80 : f32 to vector<40x256xf32>
    %195 = arith.subf %0, %194 : vector<40x256xf32>
    %cst_81 = arith.constant 1.000000e+00 : f32
    %196 = vector.broadcast %cst_81 : f32 to vector<40x256xf32>
    %197 = arith.mulf %195, %196 : vector<40x256xf32>
    %198 = arith.mulf %197, %105 : vector<40x256xf32>
    %cst_82 = arith.constant 0.000000e+00 : f32
    %199 = vector.broadcast %cst_82 : f32 to vector<40x256xf32>
    %200 = arith.subf %0, %199 : vector<40x256xf32>
    %cst_83 = arith.constant -1.000000e+00 : f32
    %201 = vector.broadcast %cst_83 : f32 to vector<40x256xf32>
    %202 = arith.mulf %200, %201 : vector<40x256xf32>
    %203 = arith.mulf %202, %116 : vector<40x256xf32>
    %204 = arith.addf %198, %203 : vector<40x256xf32>
    %cst_84 = arith.constant -1.000000e+00 : f32
    %205 = vector.broadcast %cst_84 : f32 to vector<40x256xf32>
    %206 = arith.subf %0, %205 : vector<40x256xf32>
    %cst_85 = arith.constant 1.000000e+00 : f32
    %207 = vector.broadcast %cst_85 : f32 to vector<40x256xf32>
    %208 = arith.mulf %206, %207 : vector<40x256xf32>
    %209 = arith.mulf %208, %116 : vector<40x256xf32>
    %cst_86 = arith.constant 5.000000e-01 : f32
    %210 = vector.broadcast %cst_86 : f32 to vector<40x256xf32>
    %211 = arith.subf %0, %210 : vector<40x256xf32>
    %cst_87 = arith.constant -1.000000e+00 : f32
    %212 = vector.broadcast %cst_87 : f32 to vector<40x256xf32>
    %213 = arith.mulf %211, %212 : vector<40x256xf32>
    %214 = arith.mulf %213, %127 : vector<40x256xf32>
    %215 = arith.addf %209, %214 : vector<40x256xf32>
    %cst_88 = arith.constant -5.000000e-01 : f32
    %216 = vector.broadcast %cst_88 : f32 to vector<40x256xf32>
    %217 = arith.subf %0, %216 : vector<40x256xf32>
    %cst_89 = arith.constant 1.000000e+00 : f32
    %218 = vector.broadcast %cst_89 : f32 to vector<40x256xf32>
    %219 = arith.mulf %217, %218 : vector<40x256xf32>
    %220 = arith.mulf %219, %127 : vector<40x256xf32>
    %cst_90 = arith.constant 1.000000e+00 : f32
    %221 = vector.broadcast %cst_90 : f32 to vector<40x256xf32>
    %222 = arith.subf %0, %221 : vector<40x256xf32>
    %cst_91 = arith.constant -1.000000e+00 : f32
    %223 = vector.broadcast %cst_91 : f32 to vector<40x256xf32>
    %224 = arith.mulf %222, %223 : vector<40x256xf32>
    %225 = arith.mulf %224, %138 : vector<40x256xf32>
    %226 = arith.addf %220, %225 : vector<40x256xf32>
    %cst_92 = arith.constant 0.000000e+00 : f32
    %227 = vector.broadcast %cst_92 : f32 to vector<40x256xf32>
    %228 = arith.subf %0, %227 : vector<40x256xf32>
    %cst_93 = arith.constant 1.000000e+00 : f32
    %229 = vector.broadcast %cst_93 : f32 to vector<40x256xf32>
    %230 = arith.mulf %228, %229 : vector<40x256xf32>
    %231 = arith.mulf %230, %138 : vector<40x256xf32>
    %cst_94 = arith.constant 1.500000e+00 : f32
    %232 = vector.broadcast %cst_94 : f32 to vector<40x256xf32>
    %233 = arith.subf %0, %232 : vector<40x256xf32>
    %cst_95 = arith.constant -1.000000e+00 : f32
    %234 = vector.broadcast %cst_95 : f32 to vector<40x256xf32>
    %235 = arith.mulf %233, %234 : vector<40x256xf32>
    %236 = arith.mulf %235, %149 : vector<40x256xf32>
    %237 = arith.addf %231, %236 : vector<40x256xf32>
    %cst_96 = arith.constant 5.000000e-01 : f32
    %238 = vector.broadcast %cst_96 : f32 to vector<40x256xf32>
    %239 = arith.subf %0, %238 : vector<40x256xf32>
    %cst_97 = arith.constant 1.000000e+00 : f32
    %240 = vector.broadcast %cst_97 : f32 to vector<40x256xf32>
    %241 = arith.mulf %239, %240 : vector<40x256xf32>
    %242 = arith.mulf %241, %149 : vector<40x256xf32>
    %cst_98 = arith.constant 2.000000e+00 : f32
    %243 = vector.broadcast %cst_98 : f32 to vector<40x256xf32>
    %244 = arith.subf %0, %243 : vector<40x256xf32>
    %cst_99 = arith.constant -1.000000e+00 : f32
    %245 = vector.broadcast %cst_99 : f32 to vector<40x256xf32>
    %246 = arith.mulf %244, %245 : vector<40x256xf32>
    %247 = arith.mulf %246, %160 : vector<40x256xf32>
    %248 = arith.addf %242, %247 : vector<40x256xf32>
    %cst_100 = arith.constant 1.000000e+00 : f32
    %249 = vector.broadcast %cst_100 : f32 to vector<40x256xf32>
    %250 = arith.subf %0, %249 : vector<40x256xf32>
    %cst_101 = arith.constant 1.000000e+00 : f32
    %251 = vector.broadcast %cst_101 : f32 to vector<40x256xf32>
    %252 = arith.mulf %250, %251 : vector<40x256xf32>
    %253 = arith.mulf %252, %160 : vector<40x256xf32>
    %cst_102 = arith.constant 2.500000e+00 : f32
    %254 = vector.broadcast %cst_102 : f32 to vector<40x256xf32>
    %255 = arith.subf %0, %254 : vector<40x256xf32>
    %cst_103 = arith.constant -1.000000e+00 : f32
    %256 = vector.broadcast %cst_103 : f32 to vector<40x256xf32>
    %257 = arith.mulf %255, %256 : vector<40x256xf32>
    %258 = arith.mulf %257, %171 : vector<40x256xf32>
    %259 = arith.addf %253, %258 : vector<40x256xf32>
    %cst_104 = arith.constant -2.500000e+00 : f32
    %260 = vector.broadcast %cst_104 : f32 to vector<40x256xf32>
    %261 = arith.subf %0, %260 : vector<40x256xf32>
    %cst_105 = arith.constant 0.666666686 : f32
    %262 = vector.broadcast %cst_105 : f32 to vector<40x256xf32>
    %263 = arith.mulf %261, %262 : vector<40x256xf32>
    %264 = arith.mulf %263, %182 : vector<40x256xf32>
    %cst_106 = arith.constant -5.000000e-01 : f32
    %265 = vector.broadcast %cst_106 : f32 to vector<40x256xf32>
    %266 = arith.subf %0, %265 : vector<40x256xf32>
    %cst_107 = arith.constant -0.666666686 : f32
    %267 = vector.broadcast %cst_107 : f32 to vector<40x256xf32>
    %268 = arith.mulf %266, %267 : vector<40x256xf32>
    %269 = arith.mulf %268, %193 : vector<40x256xf32>
    %270 = arith.addf %264, %269 : vector<40x256xf32>
    %cst_108 = arith.constant -2.000000e+00 : f32
    %271 = vector.broadcast %cst_108 : f32 to vector<40x256xf32>
    %272 = arith.subf %0, %271 : vector<40x256xf32>
    %cst_109 = arith.constant 0.666666686 : f32
    %273 = vector.broadcast %cst_109 : f32 to vector<40x256xf32>
    %274 = arith.mulf %272, %273 : vector<40x256xf32>
    %275 = arith.mulf %274, %193 : vector<40x256xf32>
    %cst_110 = arith.constant 0.000000e+00 : f32
    %276 = vector.broadcast %cst_110 : f32 to vector<40x256xf32>
    %277 = arith.subf %0, %276 : vector<40x256xf32>
    %cst_111 = arith.constant -0.666666686 : f32
    %278 = vector.broadcast %cst_111 : f32 to vector<40x256xf32>
    %279 = arith.mulf %277, %278 : vector<40x256xf32>
    %280 = arith.mulf %279, %204 : vector<40x256xf32>
    %281 = arith.addf %275, %280 : vector<40x256xf32>
    %cst_112 = arith.constant -1.500000e+00 : f32
    %282 = vector.broadcast %cst_112 : f32 to vector<40x256xf32>
    %283 = arith.subf %0, %282 : vector<40x256xf32>
    %cst_113 = arith.constant 0.666666686 : f32
    %284 = vector.broadcast %cst_113 : f32 to vector<40x256xf32>
    %285 = arith.mulf %283, %284 : vector<40x256xf32>
    %286 = arith.mulf %285, %204 : vector<40x256xf32>
    %cst_114 = arith.constant 5.000000e-01 : f32
    %287 = vector.broadcast %cst_114 : f32 to vector<40x256xf32>
    %288 = arith.subf %0, %287 : vector<40x256xf32>
    %cst_115 = arith.constant -0.666666686 : f32
    %289 = vector.broadcast %cst_115 : f32 to vector<40x256xf32>
    %290 = arith.mulf %288, %289 : vector<40x256xf32>
    %291 = arith.mulf %290, %215 : vector<40x256xf32>
    %292 = arith.addf %286, %291 : vector<40x256xf32>
    %cst_116 = arith.constant -1.000000e+00 : f32
    %293 = vector.broadcast %cst_116 : f32 to vector<40x256xf32>
    %294 = arith.subf %0, %293 : vector<40x256xf32>
    %cst_117 = arith.constant 0.666666686 : f32
    %295 = vector.broadcast %cst_117 : f32 to vector<40x256xf32>
    %296 = arith.mulf %294, %295 : vector<40x256xf32>
    %297 = arith.mulf %296, %215 : vector<40x256xf32>
    %cst_118 = arith.constant 1.000000e+00 : f32
    %298 = vector.broadcast %cst_118 : f32 to vector<40x256xf32>
    %299 = arith.subf %0, %298 : vector<40x256xf32>
    %cst_119 = arith.constant -0.666666686 : f32
    %300 = vector.broadcast %cst_119 : f32 to vector<40x256xf32>
    %301 = arith.mulf %299, %300 : vector<40x256xf32>
    %302 = arith.mulf %301, %226 : vector<40x256xf32>
    %303 = arith.addf %297, %302 : vector<40x256xf32>
    %cst_120 = arith.constant -5.000000e-01 : f32
    %304 = vector.broadcast %cst_120 : f32 to vector<40x256xf32>
    %305 = arith.subf %0, %304 : vector<40x256xf32>
    %cst_121 = arith.constant 0.666666686 : f32
    %306 = vector.broadcast %cst_121 : f32 to vector<40x256xf32>
    %307 = arith.mulf %305, %306 : vector<40x256xf32>
    %308 = arith.mulf %307, %226 : vector<40x256xf32>
    %cst_122 = arith.constant 1.500000e+00 : f32
    %309 = vector.broadcast %cst_122 : f32 to vector<40x256xf32>
    %310 = arith.subf %0, %309 : vector<40x256xf32>
    %cst_123 = arith.constant -0.666666686 : f32
    %311 = vector.broadcast %cst_123 : f32 to vector<40x256xf32>
    %312 = arith.mulf %310, %311 : vector<40x256xf32>
    %313 = arith.mulf %312, %237 : vector<40x256xf32>
    %314 = arith.addf %308, %313 : vector<40x256xf32>
    %cst_124 = arith.constant 0.000000e+00 : f32
    %315 = vector.broadcast %cst_124 : f32 to vector<40x256xf32>
    %316 = arith.subf %0, %315 : vector<40x256xf32>
    %cst_125 = arith.constant 0.666666686 : f32
    %317 = vector.broadcast %cst_125 : f32 to vector<40x256xf32>
    %318 = arith.mulf %316, %317 : vector<40x256xf32>
    %319 = arith.mulf %318, %237 : vector<40x256xf32>
    %cst_126 = arith.constant 2.000000e+00 : f32
    %320 = vector.broadcast %cst_126 : f32 to vector<40x256xf32>
    %321 = arith.subf %0, %320 : vector<40x256xf32>
    %cst_127 = arith.constant -0.666666686 : f32
    %322 = vector.broadcast %cst_127 : f32 to vector<40x256xf32>
    %323 = arith.mulf %321, %322 : vector<40x256xf32>
    %324 = arith.mulf %323, %248 : vector<40x256xf32>
    %325 = arith.addf %319, %324 : vector<40x256xf32>
    %cst_128 = arith.constant 5.000000e-01 : f32
    %326 = vector.broadcast %cst_128 : f32 to vector<40x256xf32>
    %327 = arith.subf %0, %326 : vector<40x256xf32>
    %cst_129 = arith.constant 0.666666686 : f32
    %328 = vector.broadcast %cst_129 : f32 to vector<40x256xf32>
    %329 = arith.mulf %327, %328 : vector<40x256xf32>
    %330 = arith.mulf %329, %248 : vector<40x256xf32>
    %cst_130 = arith.constant 2.500000e+00 : f32
    %331 = vector.broadcast %cst_130 : f32 to vector<40x256xf32>
    %332 = arith.subf %0, %331 : vector<40x256xf32>
    %cst_131 = arith.constant -0.666666686 : f32
    %333 = vector.broadcast %cst_131 : f32 to vector<40x256xf32>
    %334 = arith.mulf %332, %333 : vector<40x256xf32>
    %335 = arith.mulf %334, %259 : vector<40x256xf32>
    %336 = arith.addf %330, %335 : vector<40x256xf32>
    %c40 = arith.constant 40 : index
    %c0_132 = arith.constant 0 : index
    %337 = vector.load %arg4[%c40, %c0_132] : memref<320x512xf32, #tpu.memory_space<vmem>>, vector<40x256xf32>
    tpu.vector_store %arg4[%c40, %c0_132], %270 {strides = array<i32>} : memref<320x512xf32, #tpu.memory_space<vmem>>, vector<40x256xf32>,
    %c80 = arith.constant 80 : index
    %c0_133 = arith.constant 0 : index
    %338 = vector.load %arg4[%c80, %c0_133] : memref<320x512xf32, #tpu.memory_space<vmem>>, vector<40x256xf32>
    tpu.vector_store %arg4[%c80, %c0_133], %281 {strides = array<i32>} : memref<320x512xf32, #tpu.memory_space<vmem>>, vector<40x256xf32>,
    %c120 = arith.constant 120 : index
    %c0_134 = arith.constant 0 : index
    %339 = vector.load %arg4[%c120, %c0_134] : memref<320x512xf32, #tpu.memory_space<vmem>>, vector<40x256xf32>
    tpu.vector_store %arg4[%c120, %c0_134], %292 {strides = array<i32>} : memref<320x512xf32, #tpu.memory_space<vmem>>, vector<40x256xf32>,
    %c160 = arith.constant 160 : index
    %c0_135 = arith.constant 0 : index
    %340 = vector.load %arg4[%c160, %c0_135] : memref<320x512xf32, #tpu.memory_space<vmem>>, vector<40x256xf32>
    tpu.vector_store %arg4[%c160, %c0_135], %303 {strides = array<i32>} : memref<320x512xf32, #tpu.memory_space<vmem>>, vector<40x256xf32>,
    %c200 = arith.constant 200 : index
    %c0_136 = arith.constant 0 : index
    %341 = vector.load %arg4[%c200, %c0_136] : memref<320x512xf32, #tpu.memory_space<vmem>>, vector<40x256xf32>
    tpu.vector_store %arg4[%c200, %c0_136], %314 {strides = array<i32>} : memref<320x512xf32, #tpu.memory_space<vmem>>, vector<40x256xf32>,
    %c240 = arith.constant 240 : index
    %c0_137 = arith.constant 0 : index
    %342 = vector.load %arg4[%c240, %c0_137] : memref<320x512xf32, #tpu.memory_space<vmem>>, vector<40x256xf32>
    tpu.vector_store %arg4[%c240, %c0_137], %325 {strides = array<i32>} : memref<320x512xf32, #tpu.memory_space<vmem>>, vector<40x256xf32>,
    %c280 = arith.constant 280 : index
    %c0_138 = arith.constant 0 : index
    %343 = vector.load %arg4[%c280, %c0_138] : memref<320x512xf32, #tpu.memory_space<vmem>>, vector<40x256xf32>
    tpu.vector_store %arg4[%c280, %c0_138], %336 {strides = array<i32>} : memref<320x512xf32, #tpu.memory_space<vmem>>, vector<40x256xf32>,
    %c0_139 = arith.constant 0 : index
    %c256 = arith.constant 256 : index
    %344 = vector.load %arg1[%c0_139, %c256] : memref<40x512xf32, #tpu.memory_space<vmem>>, vector<40x256xf32>
    %345 = arith.negf %344 : vector<40x256xf32>
    %346 = math.exp %345 : vector<40x256xf32>
    %cst_140 = arith.constant 1.000000e+00 : f32
    %347 = vector.broadcast %cst_140 : f32 to vector<40x256xf32>
    %348 = arith.addf %347, %346 : vector<40x256xf32>
    %349 = arith.divf %347, %348 : vector<40x256xf32>
    %350 = arith.mulf %344, %349 : vector<40x256xf32>
    %c0_141 = arith.constant 0 : index
    %c256_142 = arith.constant 256 : index
    %351 = vector.load %arg4[%c0_141, %c256_142] : memref<320x512xf32, #tpu.memory_space<vmem>>, vector<40x256xf32>
    tpu.vector_store %arg4[%c0_141, %c256_142], %350 {strides = array<i32>} : memref<320x512xf32, #tpu.memory_space<vmem>>, vector<40x256xf32>,
    %cst_143 = arith.constant -2.500000e+00 : f32
    %352 = vector.broadcast %cst_143 : f32 to vector<40x256xf32>
    %353 = arith.cmpf oge, %344, %352 : vector<40x256xf32>
    %cst_144 = arith.constant 1.000000e+00 : f32
    %cst_145 = arith.constant 0.000000e+00 : f32
    %354 = vector.broadcast %cst_144 : f32 to vector<40x256xf32>
    %355 = vector.broadcast %cst_145 : f32 to vector<40x256xf32>
    %356 = arith.select %353, %354, %355 : vector<40x256xi1>, vector<40x256xf32>
    %cst_146 = arith.constant -2.000000e+00 : f32
    %357 = vector.broadcast %cst_146 : f32 to vector<40x256xf32>
    %358 = arith.cmpf oge, %344, %357 : vector<40x256xf32>
    %cst_147 = arith.constant 1.000000e+00 : f32
    %cst_148 = arith.constant 0.000000e+00 : f32
    %359 = vector.broadcast %cst_147 : f32 to vector<40x256xf32>
    %360 = vector.broadcast %cst_148 : f32 to vector<40x256xf32>
    %361 = arith.select %358, %359, %360 : vector<40x256xi1>, vector<40x256xf32>
    %cst_149 = arith.constant -1.500000e+00 : f32
    %362 = vector.broadcast %cst_149 : f32 to vector<40x256xf32>
    %363 = arith.cmpf oge, %344, %362 : vector<40x256xf32>
    %cst_150 = arith.constant 1.000000e+00 : f32
    %cst_151 = arith.constant 0.000000e+00 : f32
    %364 = vector.broadcast %cst_150 : f32 to vector<40x256xf32>
    %365 = vector.broadcast %cst_151 : f32 to vector<40x256xf32>
    %366 = arith.select %363, %364, %365 : vector<40x256xi1>, vector<40x256xf32>
    %cst_152 = arith.constant -1.000000e+00 : f32
    %367 = vector.broadcast %cst_152 : f32 to vector<40x256xf32>
    %368 = arith.cmpf oge, %344, %367 : vector<40x256xf32>
    %cst_153 = arith.constant 1.000000e+00 : f32
    %cst_154 = arith.constant 0.000000e+00 : f32
    %369 = vector.broadcast %cst_153 : f32 to vector<40x256xf32>
    %370 = vector.broadcast %cst_154 : f32 to vector<40x256xf32>
    %371 = arith.select %368, %369, %370 : vector<40x256xi1>, vector<40x256xf32>
    %cst_155 = arith.constant -5.000000e-01 : f32
    %372 = vector.broadcast %cst_155 : f32 to vector<40x256xf32>
    %373 = arith.cmpf oge, %344, %372 : vector<40x256xf32>
    %cst_156 = arith.constant 1.000000e+00 : f32
    %cst_157 = arith.constant 0.000000e+00 : f32
    %374 = vector.broadcast %cst_156 : f32 to vector<40x256xf32>
    %375 = vector.broadcast %cst_157 : f32 to vector<40x256xf32>
    %376 = arith.select %373, %374, %375 : vector<40x256xi1>, vector<40x256xf32>
    %cst_158 = arith.constant 0.000000e+00 : f32
    %377 = vector.broadcast %cst_158 : f32 to vector<40x256xf32>
    %378 = arith.cmpf oge, %344, %377 : vector<40x256xf32>
    %cst_159 = arith.constant 1.000000e+00 : f32
    %cst_160 = arith.constant 0.000000e+00 : f32
    %379 = vector.broadcast %cst_159 : f32 to vector<40x256xf32>
    %380 = vector.broadcast %cst_160 : f32 to vector<40x256xf32>
    %381 = arith.select %378, %379, %380 : vector<40x256xi1>, vector<40x256xf32>
    %cst_161 = arith.constant 5.000000e-01 : f32
    %382 = vector.broadcast %cst_161 : f32 to vector<40x256xf32>
    %383 = arith.cmpf oge, %344, %382 : vector<40x256xf32>
    %cst_162 = arith.constant 1.000000e+00 : f32
    %cst_163 = arith.constant 0.000000e+00 : f32
    %384 = vector.broadcast %cst_162 : f32 to vector<40x256xf32>
    %385 = vector.broadcast %cst_163 : f32 to vector<40x256xf32>
    %386 = arith.select %383, %384, %385 : vector<40x256xi1>, vector<40x256xf32>
    %cst_164 = arith.constant 1.000000e+00 : f32
    %387 = vector.broadcast %cst_164 : f32 to vector<40x256xf32>
    %388 = arith.cmpf oge, %344, %387 : vector<40x256xf32>
    %cst_165 = arith.constant 1.000000e+00 : f32
    %cst_166 = arith.constant 0.000000e+00 : f32
    %389 = vector.broadcast %cst_165 : f32 to vector<40x256xf32>
    %390 = vector.broadcast %cst_166 : f32 to vector<40x256xf32>
    %391 = arith.select %388, %389, %390 : vector<40x256xi1>, vector<40x256xf32>
    %cst_167 = arith.constant 1.500000e+00 : f32
    %392 = vector.broadcast %cst_167 : f32 to vector<40x256xf32>
    %393 = arith.cmpf oge, %344, %392 : vector<40x256xf32>
    %cst_168 = arith.constant 1.000000e+00 : f32
    %cst_169 = arith.constant 0.000000e+00 : f32
    %394 = vector.broadcast %cst_168 : f32 to vector<40x256xf32>
    %395 = vector.broadcast %cst_169 : f32 to vector<40x256xf32>
    %396 = arith.select %393, %394, %395 : vector<40x256xi1>, vector<40x256xf32>
    %cst_170 = arith.constant 2.000000e+00 : f32
    %397 = vector.broadcast %cst_170 : f32 to vector<40x256xf32>
    %398 = arith.cmpf oge, %344, %397 : vector<40x256xf32>
    %cst_171 = arith.constant 1.000000e+00 : f32
    %cst_172 = arith.constant 0.000000e+00 : f32
    %399 = vector.broadcast %cst_171 : f32 to vector<40x256xf32>
    %400 = vector.broadcast %cst_172 : f32 to vector<40x256xf32>
    %401 = arith.select %398, %399, %400 : vector<40x256xi1>, vector<40x256xf32>
    %cst_173 = arith.constant 2.500000e+00 : f32
    %402 = vector.broadcast %cst_173 : f32 to vector<40x256xf32>
    %403 = arith.cmpf oge, %344, %402 : vector<40x256xf32>
    %cst_174 = arith.constant 1.000000e+00 : f32
    %cst_175 = arith.constant 0.000000e+00 : f32
    %404 = vector.broadcast %cst_174 : f32 to vector<40x256xf32>
    %405 = vector.broadcast %cst_175 : f32 to vector<40x256xf32>
    %406 = arith.select %403, %404, %405 : vector<40x256xi1>, vector<40x256xf32>
    %407 = arith.subf %356, %361 : vector<40x256xf32>
    %408 = arith.subf %361, %366 : vector<40x256xf32>
    %409 = arith.subf %366, %371 : vector<40x256xf32>
    %410 = arith.subf %371, %376 : vector<40x256xf32>
    %411 = arith.subf %376, %381 : vector<40x256xf32>
    %412 = arith.subf %381, %386 : vector<40x256xf32>
    %413 = arith.subf %386, %391 : vector<40x256xf32>
    %414 = arith.subf %391, %396 : vector<40x256xf32>
    %415 = arith.subf %396, %401 : vector<40x256xf32>
    %416 = arith.subf %401, %406 : vector<40x256xf32>
    %cst_176 = arith.constant -2.500000e+00 : f32
    %417 = vector.broadcast %cst_176 : f32 to vector<40x256xf32>
    %418 = arith.subf %344, %417 : vector<40x256xf32>
    %cst_177 = arith.constant 2.000000e+00 : f32
    %419 = vector.broadcast %cst_177 : f32 to vector<40x256xf32>
    %420 = arith.mulf %418, %419 : vector<40x256xf32>
    %421 = arith.mulf %420, %407 : vector<40x256xf32>
    %cst_178 = arith.constant -1.500000e+00 : f32
    %422 = vector.broadcast %cst_178 : f32 to vector<40x256xf32>
    %423 = arith.subf %344, %422 : vector<40x256xf32>
    %cst_179 = arith.constant -2.000000e+00 : f32
    %424 = vector.broadcast %cst_179 : f32 to vector<40x256xf32>
    %425 = arith.mulf %423, %424 : vector<40x256xf32>
    %426 = arith.mulf %425, %408 : vector<40x256xf32>
    %427 = arith.addf %421, %426 : vector<40x256xf32>
    %cst_180 = arith.constant -2.000000e+00 : f32
    %428 = vector.broadcast %cst_180 : f32 to vector<40x256xf32>
    %429 = arith.subf %344, %428 : vector<40x256xf32>
    %cst_181 = arith.constant 2.000000e+00 : f32
    %430 = vector.broadcast %cst_181 : f32 to vector<40x256xf32>
    %431 = arith.mulf %429, %430 : vector<40x256xf32>
    %432 = arith.mulf %431, %408 : vector<40x256xf32>
    %cst_182 = arith.constant -1.000000e+00 : f32
    %433 = vector.broadcast %cst_182 : f32 to vector<40x256xf32>
    %434 = arith.subf %344, %433 : vector<40x256xf32>
    %cst_183 = arith.constant -2.000000e+00 : f32
    %435 = vector.broadcast %cst_183 : f32 to vector<40x256xf32>
    %436 = arith.mulf %434, %435 : vector<40x256xf32>
    %437 = arith.mulf %436, %409 : vector<40x256xf32>
    %438 = arith.addf %432, %437 : vector<40x256xf32>
    %cst_184 = arith.constant -1.500000e+00 : f32
    %439 = vector.broadcast %cst_184 : f32 to vector<40x256xf32>
    %440 = arith.subf %344, %439 : vector<40x256xf32>
    %cst_185 = arith.constant 2.000000e+00 : f32
    %441 = vector.broadcast %cst_185 : f32 to vector<40x256xf32>
    %442 = arith.mulf %440, %441 : vector<40x256xf32>
    %443 = arith.mulf %442, %409 : vector<40x256xf32>
    %cst_186 = arith.constant -5.000000e-01 : f32
    %444 = vector.broadcast %cst_186 : f32 to vector<40x256xf32>
    %445 = arith.subf %344, %444 : vector<40x256xf32>
    %cst_187 = arith.constant -2.000000e+00 : f32
    %446 = vector.broadcast %cst_187 : f32 to vector<40x256xf32>
    %447 = arith.mulf %445, %446 : vector<40x256xf32>
    %448 = arith.mulf %447, %410 : vector<40x256xf32>
    %449 = arith.addf %443, %448 : vector<40x256xf32>
    %cst_188 = arith.constant -1.000000e+00 : f32
    %450 = vector.broadcast %cst_188 : f32 to vector<40x256xf32>
    %451 = arith.subf %344, %450 : vector<40x256xf32>
    %cst_189 = arith.constant 2.000000e+00 : f32
    %452 = vector.broadcast %cst_189 : f32 to vector<40x256xf32>
    %453 = arith.mulf %451, %452 : vector<40x256xf32>
    %454 = arith.mulf %453, %410 : vector<40x256xf32>
    %cst_190 = arith.constant 0.000000e+00 : f32
    %455 = vector.broadcast %cst_190 : f32 to vector<40x256xf32>
    %456 = arith.subf %344, %455 : vector<40x256xf32>
    %cst_191 = arith.constant -2.000000e+00 : f32
    %457 = vector.broadcast %cst_191 : f32 to vector<40x256xf32>
    %458 = arith.mulf %456, %457 : vector<40x256xf32>
    %459 = arith.mulf %458, %411 : vector<40x256xf32>
    %460 = arith.addf %454, %459 : vector<40x256xf32>
    %cst_192 = arith.constant -5.000000e-01 : f32
    %461 = vector.broadcast %cst_192 : f32 to vector<40x256xf32>
    %462 = arith.subf %344, %461 : vector<40x256xf32>
    %cst_193 = arith.constant 2.000000e+00 : f32
    %463 = vector.broadcast %cst_193 : f32 to vector<40x256xf32>
    %464 = arith.mulf %462, %463 : vector<40x256xf32>
    %465 = arith.mulf %464, %411 : vector<40x256xf32>
    %cst_194 = arith.constant 5.000000e-01 : f32
    %466 = vector.broadcast %cst_194 : f32 to vector<40x256xf32>
    %467 = arith.subf %344, %466 : vector<40x256xf32>
    %cst_195 = arith.constant -2.000000e+00 : f32
    %468 = vector.broadcast %cst_195 : f32 to vector<40x256xf32>
    %469 = arith.mulf %467, %468 : vector<40x256xf32>
    %470 = arith.mulf %469, %412 : vector<40x256xf32>
    %471 = arith.addf %465, %470 : vector<40x256xf32>
    %cst_196 = arith.constant 0.000000e+00 : f32
    %472 = vector.broadcast %cst_196 : f32 to vector<40x256xf32>
    %473 = arith.subf %344, %472 : vector<40x256xf32>
    %cst_197 = arith.constant 2.000000e+00 : f32
    %474 = vector.broadcast %cst_197 : f32 to vector<40x256xf32>
    %475 = arith.mulf %473, %474 : vector<40x256xf32>
    %476 = arith.mulf %475, %412 : vector<40x256xf32>
    %cst_198 = arith.constant 1.000000e+00 : f32
    %477 = vector.broadcast %cst_198 : f32 to vector<40x256xf32>
    %478 = arith.subf %344, %477 : vector<40x256xf32>
    %cst_199 = arith.constant -2.000000e+00 : f32
    %479 = vector.broadcast %cst_199 : f32 to vector<40x256xf32>
    %480 = arith.mulf %478, %479 : vector<40x256xf32>
    %481 = arith.mulf %480, %413 : vector<40x256xf32>
    %482 = arith.addf %476, %481 : vector<40x256xf32>
    %cst_200 = arith.constant 5.000000e-01 : f32
    %483 = vector.broadcast %cst_200 : f32 to vector<40x256xf32>
    %484 = arith.subf %344, %483 : vector<40x256xf32>
    %cst_201 = arith.constant 2.000000e+00 : f32
    %485 = vector.broadcast %cst_201 : f32 to vector<40x256xf32>
    %486 = arith.mulf %484, %485 : vector<40x256xf32>
    %487 = arith.mulf %486, %413 : vector<40x256xf32>
    %cst_202 = arith.constant 1.500000e+00 : f32
    %488 = vector.broadcast %cst_202 : f32 to vector<40x256xf32>
    %489 = arith.subf %344, %488 : vector<40x256xf32>
    %cst_203 = arith.constant -2.000000e+00 : f32
    %490 = vector.broadcast %cst_203 : f32 to vector<40x256xf32>
    %491 = arith.mulf %489, %490 : vector<40x256xf32>
    %492 = arith.mulf %491, %414 : vector<40x256xf32>
    %493 = arith.addf %487, %492 : vector<40x256xf32>
    %cst_204 = arith.constant 1.000000e+00 : f32
    %494 = vector.broadcast %cst_204 : f32 to vector<40x256xf32>
    %495 = arith.subf %344, %494 : vector<40x256xf32>
    %cst_205 = arith.constant 2.000000e+00 : f32
    %496 = vector.broadcast %cst_205 : f32 to vector<40x256xf32>
    %497 = arith.mulf %495, %496 : vector<40x256xf32>
    %498 = arith.mulf %497, %414 : vector<40x256xf32>
    %cst_206 = arith.constant 2.000000e+00 : f32
    %499 = vector.broadcast %cst_206 : f32 to vector<40x256xf32>
    %500 = arith.subf %344, %499 : vector<40x256xf32>
    %cst_207 = arith.constant -2.000000e+00 : f32
    %501 = vector.broadcast %cst_207 : f32 to vector<40x256xf32>
    %502 = arith.mulf %500, %501 : vector<40x256xf32>
    %503 = arith.mulf %502, %415 : vector<40x256xf32>
    %504 = arith.addf %498, %503 : vector<40x256xf32>
    %cst_208 = arith.constant 1.500000e+00 : f32
    %505 = vector.broadcast %cst_208 : f32 to vector<40x256xf32>
    %506 = arith.subf %344, %505 : vector<40x256xf32>
    %cst_209 = arith.constant 2.000000e+00 : f32
    %507 = vector.broadcast %cst_209 : f32 to vector<40x256xf32>
    %508 = arith.mulf %506, %507 : vector<40x256xf32>
    %509 = arith.mulf %508, %415 : vector<40x256xf32>
    %cst_210 = arith.constant 2.500000e+00 : f32
    %510 = vector.broadcast %cst_210 : f32 to vector<40x256xf32>
    %511 = arith.subf %344, %510 : vector<40x256xf32>
    %cst_211 = arith.constant -2.000000e+00 : f32
    %512 = vector.broadcast %cst_211 : f32 to vector<40x256xf32>
    %513 = arith.mulf %511, %512 : vector<40x256xf32>
    %514 = arith.mulf %513, %416 : vector<40x256xf32>
    %515 = arith.addf %509, %514 : vector<40x256xf32>
    %cst_212 = arith.constant -2.500000e+00 : f32
    %516 = vector.broadcast %cst_212 : f32 to vector<40x256xf32>
    %517 = arith.subf %344, %516 : vector<40x256xf32>
    %cst_213 = arith.constant 1.000000e+00 : f32
    %518 = vector.broadcast %cst_213 : f32 to vector<40x256xf32>
    %519 = arith.mulf %517, %518 : vector<40x256xf32>
    %520 = arith.mulf %519, %427 : vector<40x256xf32>
    %cst_214 = arith.constant -1.000000e+00 : f32
    %521 = vector.broadcast %cst_214 : f32 to vector<40x256xf32>
    %522 = arith.subf %344, %521 : vector<40x256xf32>
    %cst_215 = arith.constant -1.000000e+00 : f32
    %523 = vector.broadcast %cst_215 : f32 to vector<40x256xf32>
    %524 = arith.mulf %522, %523 : vector<40x256xf32>
    %525 = arith.mulf %524, %438 : vector<40x256xf32>
    %526 = arith.addf %520, %525 : vector<40x256xf32>
    %cst_216 = arith.constant -2.000000e+00 : f32
    %527 = vector.broadcast %cst_216 : f32 to vector<40x256xf32>
    %528 = arith.subf %344, %527 : vector<40x256xf32>
    %cst_217 = arith.constant 1.000000e+00 : f32
    %529 = vector.broadcast %cst_217 : f32 to vector<40x256xf32>
    %530 = arith.mulf %528, %529 : vector<40x256xf32>
    %531 = arith.mulf %530, %438 : vector<40x256xf32>
    %cst_218 = arith.constant -5.000000e-01 : f32
    %532 = vector.broadcast %cst_218 : f32 to vector<40x256xf32>
    %533 = arith.subf %344, %532 : vector<40x256xf32>
    %cst_219 = arith.constant -1.000000e+00 : f32
    %534 = vector.broadcast %cst_219 : f32 to vector<40x256xf32>
    %535 = arith.mulf %533, %534 : vector<40x256xf32>
    %536 = arith.mulf %535, %449 : vector<40x256xf32>
    %537 = arith.addf %531, %536 : vector<40x256xf32>
    %cst_220 = arith.constant -1.500000e+00 : f32
    %538 = vector.broadcast %cst_220 : f32 to vector<40x256xf32>
    %539 = arith.subf %344, %538 : vector<40x256xf32>
    %cst_221 = arith.constant 1.000000e+00 : f32
    %540 = vector.broadcast %cst_221 : f32 to vector<40x256xf32>
    %541 = arith.mulf %539, %540 : vector<40x256xf32>
    %542 = arith.mulf %541, %449 : vector<40x256xf32>
    %cst_222 = arith.constant 0.000000e+00 : f32
    %543 = vector.broadcast %cst_222 : f32 to vector<40x256xf32>
    %544 = arith.subf %344, %543 : vector<40x256xf32>
    %cst_223 = arith.constant -1.000000e+00 : f32
    %545 = vector.broadcast %cst_223 : f32 to vector<40x256xf32>
    %546 = arith.mulf %544, %545 : vector<40x256xf32>
    %547 = arith.mulf %546, %460 : vector<40x256xf32>
    %548 = arith.addf %542, %547 : vector<40x256xf32>
    %cst_224 = arith.constant -1.000000e+00 : f32
    %549 = vector.broadcast %cst_224 : f32 to vector<40x256xf32>
    %550 = arith.subf %344, %549 : vector<40x256xf32>
    %cst_225 = arith.constant 1.000000e+00 : f32
    %551 = vector.broadcast %cst_225 : f32 to vector<40x256xf32>
    %552 = arith.mulf %550, %551 : vector<40x256xf32>
    %553 = arith.mulf %552, %460 : vector<40x256xf32>
    %cst_226 = arith.constant 5.000000e-01 : f32
    %554 = vector.broadcast %cst_226 : f32 to vector<40x256xf32>
    %555 = arith.subf %344, %554 : vector<40x256xf32>
    %cst_227 = arith.constant -1.000000e+00 : f32
    %556 = vector.broadcast %cst_227 : f32 to vector<40x256xf32>
    %557 = arith.mulf %555, %556 : vector<40x256xf32>
    %558 = arith.mulf %557, %471 : vector<40x256xf32>
    %559 = arith.addf %553, %558 : vector<40x256xf32>
    %cst_228 = arith.constant -5.000000e-01 : f32
    %560 = vector.broadcast %cst_228 : f32 to vector<40x256xf32>
    %561 = arith.subf %344, %560 : vector<40x256xf32>
    %cst_229 = arith.constant 1.000000e+00 : f32
    %562 = vector.broadcast %cst_229 : f32 to vector<40x256xf32>
    %563 = arith.mulf %561, %562 : vector<40x256xf32>
    %564 = arith.mulf %563, %471 : vector<40x256xf32>
    %cst_230 = arith.constant 1.000000e+00 : f32
    %565 = vector.broadcast %cst_230 : f32 to vector<40x256xf32>
    %566 = arith.subf %344, %565 : vector<40x256xf32>
    %cst_231 = arith.constant -1.000000e+00 : f32
    %567 = vector.broadcast %cst_231 : f32 to vector<40x256xf32>
    %568 = arith.mulf %566, %567 : vector<40x256xf32>
    %569 = arith.mulf %568, %482 : vector<40x256xf32>
    %570 = arith.addf %564, %569 : vector<40x256xf32>
    %cst_232 = arith.constant 0.000000e+00 : f32
    %571 = vector.broadcast %cst_232 : f32 to vector<40x256xf32>
    %572 = arith.subf %344, %571 : vector<40x256xf32>
    %cst_233 = arith.constant 1.000000e+00 : f32
    %573 = vector.broadcast %cst_233 : f32 to vector<40x256xf32>
    %574 = arith.mulf %572, %573 : vector<40x256xf32>
    %575 = arith.mulf %574, %482 : vector<40x256xf32>
    %cst_234 = arith.constant 1.500000e+00 : f32
    %576 = vector.broadcast %cst_234 : f32 to vector<40x256xf32>
    %577 = arith.subf %344, %576 : vector<40x256xf32>
    %cst_235 = arith.constant -1.000000e+00 : f32
    %578 = vector.broadcast %cst_235 : f32 to vector<40x256xf32>
    %579 = arith.mulf %577, %578 : vector<40x256xf32>
    %580 = arith.mulf %579, %493 : vector<40x256xf32>
    %581 = arith.addf %575, %580 : vector<40x256xf32>
    %cst_236 = arith.constant 5.000000e-01 : f32
    %582 = vector.broadcast %cst_236 : f32 to vector<40x256xf32>
    %583 = arith.subf %344, %582 : vector<40x256xf32>
    %cst_237 = arith.constant 1.000000e+00 : f32
    %584 = vector.broadcast %cst_237 : f32 to vector<40x256xf32>
    %585 = arith.mulf %583, %584 : vector<40x256xf32>
    %586 = arith.mulf %585, %493 : vector<40x256xf32>
    %cst_238 = arith.constant 2.000000e+00 : f32
    %587 = vector.broadcast %cst_238 : f32 to vector<40x256xf32>
    %588 = arith.subf %344, %587 : vector<40x256xf32>
    %cst_239 = arith.constant -1.000000e+00 : f32
    %589 = vector.broadcast %cst_239 : f32 to vector<40x256xf32>
    %590 = arith.mulf %588, %589 : vector<40x256xf32>
    %591 = arith.mulf %590, %504 : vector<40x256xf32>
    %592 = arith.addf %586, %591 : vector<40x256xf32>
    %cst_240 = arith.constant 1.000000e+00 : f32
    %593 = vector.broadcast %cst_240 : f32 to vector<40x256xf32>
    %594 = arith.subf %344, %593 : vector<40x256xf32>
    %cst_241 = arith.constant 1.000000e+00 : f32
    %595 = vector.broadcast %cst_241 : f32 to vector<40x256xf32>
    %596 = arith.mulf %594, %595 : vector<40x256xf32>
    %597 = arith.mulf %596, %504 : vector<40x256xf32>
    %cst_242 = arith.constant 2.500000e+00 : f32
    %598 = vector.broadcast %cst_242 : f32 to vector<40x256xf32>
    %599 = arith.subf %344, %598 : vector<40x256xf32>
    %cst_243 = arith.constant -1.000000e+00 : f32
    %600 = vector.broadcast %cst_243 : f32 to vector<40x256xf32>
    %601 = arith.mulf %599, %600 : vector<40x256xf32>
    %602 = arith.mulf %601, %515 : vector<40x256xf32>
    %603 = arith.addf %597, %602 : vector<40x256xf32>
    %cst_244 = arith.constant -2.500000e+00 : f32
    %604 = vector.broadcast %cst_244 : f32 to vector<40x256xf32>
    %605 = arith.subf %344, %604 : vector<40x256xf32>
    %cst_245 = arith.constant 0.666666686 : f32
    %606 = vector.broadcast %cst_245 : f32 to vector<40x256xf32>
    %607 = arith.mulf %605, %606 : vector<40x256xf32>
    %608 = arith.mulf %607, %526 : vector<40x256xf32>
    %cst_246 = arith.constant -5.000000e-01 : f32
    %609 = vector.broadcast %cst_246 : f32 to vector<40x256xf32>
    %610 = arith.subf %344, %609 : vector<40x256xf32>
    %cst_247 = arith.constant -0.666666686 : f32
    %611 = vector.broadcast %cst_247 : f32 to vector<40x256xf32>
    %612 = arith.mulf %610, %611 : vector<40x256xf32>
    %613 = arith.mulf %612, %537 : vector<40x256xf32>
    %614 = arith.addf %608, %613 : vector<40x256xf32>
    %cst_248 = arith.constant -2.000000e+00 : f32
    %615 = vector.broadcast %cst_248 : f32 to vector<40x256xf32>
    %616 = arith.subf %344, %615 : vector<40x256xf32>
    %cst_249 = arith.constant 0.666666686 : f32
    %617 = vector.broadcast %cst_249 : f32 to vector<40x256xf32>
    %618 = arith.mulf %616, %617 : vector<40x256xf32>
    %619 = arith.mulf %618, %537 : vector<40x256xf32>
    %cst_250 = arith.constant 0.000000e+00 : f32
    %620 = vector.broadcast %cst_250 : f32 to vector<40x256xf32>
    %621 = arith.subf %344, %620 : vector<40x256xf32>
    %cst_251 = arith.constant -0.666666686 : f32
    %622 = vector.broadcast %cst_251 : f32 to vector<40x256xf32>
    %623 = arith.mulf %621, %622 : vector<40x256xf32>
    %624 = arith.mulf %623, %548 : vector<40x256xf32>
    %625 = arith.addf %619, %624 : vector<40x256xf32>
    %cst_252 = arith.constant -1.500000e+00 : f32
    %626 = vector.broadcast %cst_252 : f32 to vector<40x256xf32>
    %627 = arith.subf %344, %626 : vector<40x256xf32>
    %cst_253 = arith.constant 0.666666686 : f32
    %628 = vector.broadcast %cst_253 : f32 to vector<40x256xf32>
    %629 = arith.mulf %627, %628 : vector<40x256xf32>
    %630 = arith.mulf %629, %548 : vector<40x256xf32>
    %cst_254 = arith.constant 5.000000e-01 : f32
    %631 = vector.broadcast %cst_254 : f32 to vector<40x256xf32>
    %632 = arith.subf %344, %631 : vector<40x256xf32>
    %cst_255 = arith.constant -0.666666686 : f32
    %633 = vector.broadcast %cst_255 : f32 to vector<40x256xf32>
    %634 = arith.mulf %632, %633 : vector<40x256xf32>
    %635 = arith.mulf %634, %559 : vector<40x256xf32>
    %636 = arith.addf %630, %635 : vector<40x256xf32>
    %cst_256 = arith.constant -1.000000e+00 : f32
    %637 = vector.broadcast %cst_256 : f32 to vector<40x256xf32>
    %638 = arith.subf %344, %637 : vector<40x256xf32>
    %cst_257 = arith.constant 0.666666686 : f32
    %639 = vector.broadcast %cst_257 : f32 to vector<40x256xf32>
    %640 = arith.mulf %638, %639 : vector<40x256xf32>
    %641 = arith.mulf %640, %559 : vector<40x256xf32>
    %cst_258 = arith.constant 1.000000e+00 : f32
    %642 = vector.broadcast %cst_258 : f32 to vector<40x256xf32>
    %643 = arith.subf %344, %642 : vector<40x256xf32>
    %cst_259 = arith.constant -0.666666686 : f32
    %644 = vector.broadcast %cst_259 : f32 to vector<40x256xf32>
    %645 = arith.mulf %643, %644 : vector<40x256xf32>
    %646 = arith.mulf %645, %570 : vector<40x256xf32>
    %647 = arith.addf %641, %646 : vector<40x256xf32>
    %cst_260 = arith.constant -5.000000e-01 : f32
    %648 = vector.broadcast %cst_260 : f32 to vector<40x256xf32>
    %649 = arith.subf %344, %648 : vector<40x256xf32>
    %cst_261 = arith.constant 0.666666686 : f32
    %650 = vector.broadcast %cst_261 : f32 to vector<40x256xf32>
    %651 = arith.mulf %649, %650 : vector<40x256xf32>
    %652 = arith.mulf %651, %570 : vector<40x256xf32>
    %cst_262 = arith.constant 1.500000e+00 : f32
    %653 = vector.broadcast %cst_262 : f32 to vector<40x256xf32>
    %654 = arith.subf %344, %653 : vector<40x256xf32>
    %cst_263 = arith.constant -0.666666686 : f32
    %655 = vector.broadcast %cst_263 : f32 to vector<40x256xf32>
    %656 = arith.mulf %654, %655 : vector<40x256xf32>
    %657 = arith.mulf %656, %581 : vector<40x256xf32>
    %658 = arith.addf %652, %657 : vector<40x256xf32>
    %cst_264 = arith.constant 0.000000e+00 : f32
    %659 = vector.broadcast %cst_264 : f32 to vector<40x256xf32>
    %660 = arith.subf %344, %659 : vector<40x256xf32>
    %cst_265 = arith.constant 0.666666686 : f32
    %661 = vector.broadcast %cst_265 : f32 to vector<40x256xf32>
    %662 = arith.mulf %660, %661 : vector<40x256xf32>
    %663 = arith.mulf %662, %581 : vector<40x256xf32>
    %cst_266 = arith.constant 2.000000e+00 : f32
    %664 = vector.broadcast %cst_266 : f32 to vector<40x256xf32>
    %665 = arith.subf %344, %664 : vector<40x256xf32>
    %cst_267 = arith.constant -0.666666686 : f32
    %666 = vector.broadcast %cst_267 : f32 to vector<40x256xf32>
    %667 = arith.mulf %665, %666 : vector<40x256xf32>
    %668 = arith.mulf %667, %592 : vector<40x256xf32>
    %669 = arith.addf %663, %668 : vector<40x256xf32>
    %cst_268 = arith.constant 5.000000e-01 : f32
    %670 = vector.broadcast %cst_268 : f32 to vector<40x256xf32>
    %671 = arith.subf %344, %670 : vector<40x256xf32>
    %cst_269 = arith.constant 0.666666686 : f32
    %672 = vector.broadcast %cst_269 : f32 to vector<40x256xf32>
    %673 = arith.mulf %671, %672 : vector<40x256xf32>
    %674 = arith.mulf %673, %592 : vector<40x256xf32>
    %cst_270 = arith.constant 2.500000e+00 : f32
    %675 = vector.broadcast %cst_270 : f32 to vector<40x256xf32>
    %676 = arith.subf %344, %675 : vector<40x256xf32>
    %cst_271 = arith.constant -0.666666686 : f32
    %677 = vector.broadcast %cst_271 : f32 to vector<40x256xf32>
    %678 = arith.mulf %676, %677 : vector<40x256xf32>
    %679 = arith.mulf %678, %603 : vector<40x256xf32>
    %680 = arith.addf %674, %679 : vector<40x256xf32>
    %c40_272 = arith.constant 40 : index
    %c256_273 = arith.constant 256 : index
    %681 = vector.load %arg4[%c40_272, %c256_273] : memref<320x512xf32, #tpu.memory_space<vmem>>, vector<40x256xf32>
    tpu.vector_store %arg4[%c40_272, %c256_273], %614 {strides = array<i32>} : memref<320x512xf32, #tpu.memory_space<vmem>>, vector<40x256xf32>,
    %c80_274 = arith.constant 80 : index
    %c256_275 = arith.constant 256 : index
    %682 = vector.load %arg4[%c80_274, %c256_275] : memref<320x512xf32, #tpu.memory_space<vmem>>, vector<40x256xf32>
    tpu.vector_store %arg4[%c80_274, %c256_275], %625 {strides = array<i32>} : memref<320x512xf32, #tpu.memory_space<vmem>>, vector<40x256xf32>,
    %c120_276 = arith.constant 120 : index
    %c256_277 = arith.constant 256 : index
    %683 = vector.load %arg4[%c120_276, %c256_277] : memref<320x512xf32, #tpu.memory_space<vmem>>, vector<40x256xf32>
    tpu.vector_store %arg4[%c120_276, %c256_277], %636 {strides = array<i32>} : memref<320x512xf32, #tpu.memory_space<vmem>>, vector<40x256xf32>,
    %c160_278 = arith.constant 160 : index
    %c256_279 = arith.constant 256 : index
    %684 = vector.load %arg4[%c160_278, %c256_279] : memref<320x512xf32, #tpu.memory_space<vmem>>, vector<40x256xf32>
    tpu.vector_store %arg4[%c160_278, %c256_279], %647 {strides = array<i32>} : memref<320x512xf32, #tpu.memory_space<vmem>>, vector<40x256xf32>,
    %c200_280 = arith.constant 200 : index
    %c256_281 = arith.constant 256 : index
    %685 = vector.load %arg4[%c200_280, %c256_281] : memref<320x512xf32, #tpu.memory_space<vmem>>, vector<40x256xf32>
    tpu.vector_store %arg4[%c200_280, %c256_281], %658 {strides = array<i32>} : memref<320x512xf32, #tpu.memory_space<vmem>>, vector<40x256xf32>,
    %c240_282 = arith.constant 240 : index
    %c256_283 = arith.constant 256 : index
    %686 = vector.load %arg4[%c240_282, %c256_283] : memref<320x512xf32, #tpu.memory_space<vmem>>, vector<40x256xf32>
    tpu.vector_store %arg4[%c240_282, %c256_283], %669 {strides = array<i32>} : memref<320x512xf32, #tpu.memory_space<vmem>>, vector<40x256xf32>,
    %c280_284 = arith.constant 280 : index
    %c256_285 = arith.constant 256 : index
    %687 = vector.load %arg4[%c280_284, %c256_285] : memref<320x512xf32, #tpu.memory_space<vmem>>, vector<40x256xf32>
    tpu.vector_store %arg4[%c280_284, %c256_285], %680 {strides = array<i32>} : memref<320x512xf32, #tpu.memory_space<vmem>>, vector<40x256xf32>,
    %c0_286 = arith.constant 0 : index
    %c0_287 = arith.constant 0 : index
    %688 = vector.load %arg2[%c0_286, %c0_287] : memref<8x320xf32, #tpu.memory_space<vmem>>, vector<8x320xf32>
    %c0_288 = arith.constant 0 : index
    %c0_289 = arith.constant 0 : index
    %689 = vector.load %arg4[%c0_288, %c0_289] : memref<320x512xf32, #tpu.memory_space<vmem>>, vector<320x512xf32>
    %cst_290 = arith.constant dense<0.000000e+00> : vector<8x512xf32>
    %690 = tpu.matmul %688, %689, %cst_290 {dimension_numbers = #tpu.dot_dimension_numbers<[1], [0], [0], [1], [0, 0, 1, 1], [], []>} : vector<8x320xf32>, vector<320x512xf32>, vector<8x512xf32> -> vector<8x512xf32>
    %c0_291 = arith.constant 0 : index
    %c0_292 = arith.constant 0 : index
    %691 = vector.load %arg3[%c0_291, %c0_292] : memref<8x512xf32, #tpu.memory_space<vmem>>, vector<8x512xf32>
    tpu.vector_store %arg3[%c0_291, %c0_292], %690 {strides = array<i32>} : memref<8x512xf32, #tpu.memory_space<vmem>>, vector<8x512xf32>,
    return
  }
  func.func @transform_0(%arg0: i32) -> (i32, i32) {
    %c0_i32 = arith.constant 0 : i32
    %c0_i32_0 = arith.constant 0 : i32
    return %c0_i32, %arg0 : i32, i32
  }
  func.func @transform_1(%arg0: i32) -> (i32, i32) {
    %c0_i32 = arith.constant 0 : i32
    %c0_i32_0 = arith.constant 0 : i32
    %c0_i32_1 = arith.constant 0 : i32
    return %c0_i32, %c0_i32_0 : i32, i32
  }
  func.func @transform_2(%arg0: i32) -> (i32, i32) {
    %c0_i32 = arith.constant 0 : i32
    %c0_i32_0 = arith.constant 0 : i32
    return %c0_i32, %arg0 : i32, i32
  }
}

</mosaic_0001>

<llo_original>
// kernel: tpu_custom_call.1
$region0: #{tpu_custom_call.1}
  #allocation0 [shape = 'u32[]', space=smem, size = 0x4, offset = 0x4, fixed_abs, tag = 'smem constant byte address 0x4 - core index']
  #allocation1 [shape = 'u32[72,128]{1,0:T(1,128)}', space=vmem, size = 0x9000, scoped, tag = 'internal scratch']
  #allocation2 [shape = 'f32[320,512]{1,0:T(8,128)}', space=vmem, size = 0xa0000, scoped, tag = 'scratch operand']
  %s0 = inlined_call_operand.hbm [shape: f32[40,512], index: 0, kind: input, shape index: {}]
  %s1 = inlined_call_operand.hbm [shape: f32[8,320], index: 1, kind: input, shape index: {}]
  %s2 = inlined_call_operand.hbm [shape: f32[8,512], index: 2, kind: output, shape index: {}]
  %s3 = sld [smem:[#allocation0]]
  $region26: #{tpu_custom_call.1} parent=0
    _
  %s5 = ssub.s32 1, %s3
  %s6 = scalar_select 0, %s5, %s3
  $region1: #{tpu_custom_call.1} parent=0
    #allocation3 [shape = 'u8[81920]{0}', space=vmem, size = 0x14000, scoped, tag = 'input window, operand 0, single buffered']
    #allocation4 [shape = 's32[1]{0}', space=sflag, size = 0x4, scoped, tag = 'scoped memory for tpu_custom_call.1']
    #allocation5 [shape = 's32[1]{0}', space=sflag, size = 0x4, scoped, tag = 'scoped memory for tpu_custom_call.1']
    #allocation6 [shape = 'u8[12288]{0}', space=vmem, size = 0x3000, scoped, tag = 'input window, operand 1, single buffered']
    #allocation7 [shape = 's32[1]{0}', space=sflag, size = 0x4, scoped, tag = 'scoped memory for tpu_custom_call.1']
    #allocation8 [shape = 'u8[16384]{0}', space=vmem, size = 0x4000, scoped, tag = 'output window, operand 0, single buffered']
    %7 = vsyncpa [#allocation4], 0
    %8 = vsyncpa [#allocation7], 0
    %9 = vsyncpa [#allocation5], 0
    // Predicated region
    $region2: #{tpu_custom_call.1} parent=1 // pred_check
      _
    $region3: #{tpu_custom_call.1} parent=1 // pred_check_branch
      %11 = sbr.rel (0) target = $region5
    $region4: #{tpu_custom_call.1} parent=1 // pred_region
      %13 = vsyncadd [#allocation4], 0
      %s14 = sshll.u32 %s0, 4
      %s15 = int_to_ptr.hbm [resolvable:$true] %s14
      %s16 = sshll.u32 [#allocation3], 4
      %s17 = int_to_ptr.vmem [resolvable:$true] %s16
      %22 = dma.hbm_to_vmem [thread:$0]  %s15, 2560, %s17, [#allocation4], 512, 512, 32
    $region5: #{tpu_custom_call.1} parent=1 // pred_fallthru
      _
    // Predicated region
    $region6: #{tpu_custom_call.1} parent=1 // pred_check
      _
    $region7: #{tpu_custom_call.1} parent=1 // pred_check_branch
      %24 = sbr.rel (0) target = $region9
    $region8: #{tpu_custom_call.1} parent=1 // pred_region
      %26 = vsyncadd [#allocation7], 0
      %s28 = sshll.u32 %s1, 4
      %s29 = int_to_ptr.hbm [resolvable:$true] %s28
      %s30 = sshll.u32 [#allocation6], 4
      %s31 = int_to_ptr.vmem [resolvable:$true] %s30
      %33 = dma.hbm_to_vmem [thread:$0]  %s29, 384, %s31, [#allocation7]
    $region9: #{tpu_custom_call.1} parent=1 // pred_fallthru
      _
    // Predicated region
    $region10: #{tpu_custom_call.1} parent=1 // pred_check
      _
    $region11: #{tpu_custom_call.1} parent=1 // pred_check_branch
      %35 = sbr.rel (0) target = $region13
    $region12: #{tpu_custom_call.1} parent=1 // pred_region
      %37 = dma.done [#allocation4], 2560
    $region13: #{tpu_custom_call.1} parent=1 // pred_fallthru
      _
    // Predicated region
    $region14: #{tpu_custom_call.1} parent=1 // pred_check
      _
    $region15: #{tpu_custom_call.1} parent=1 // pred_check_branch
      %39 = sbr.rel (0) target = $region17
    $region16: #{tpu_custom_call.1} parent=1 // pred_region
      %41 = dma.done [#allocation7], 384
    $region17: #{tpu_custom_call.1} parent=1 // pred_fallthru
      _
    %v42 = vld [vmem:[#allocation3] sm:$0xff]
    %v43 = vld [vmem:[#allocation3 + $0x8] sm:$0xff]
    %v44 = vld [vmem:[#allocation3 + $0x20] sm:$0xff]
    %v45 = vld [vmem:[#allocation3 + $0x28] sm:$0xff]
    %v46 = vld [vmem:[#allocation3 + $0x40] sm:$0xff]
    %v47 = vld [vmem:[#allocation3 + $0x48] sm:$0xff]
    %v48 = vld [vmem:[#allocation3 + $0x60] sm:$0xff]
    %v49 = vld [vmem:[#allocation3 + $0x68] sm:$0xff]
    %v50 = vld [vmem:[#allocation3 + $0x80] sm:$0xff]
    %v51 = vld [vmem:[#allocation3 + $0x88] sm:$0xff]
    %v52 = vxor.u32 %v42, 2147483648
    %v53 = vxor.u32 %v43, 2147483648
    %v54 = vxor.u32 %v44, 2147483648
    %v55 = vxor.u32 %v45, 2147483648
    %v56 = vxor.u32 %v46, 2147483648
    %v57 = vxor.u32 %v47, 2147483648
    %v58 = vxor.u32 %v48, 2147483648
    %v59 = vxor.u32 %v49, 2147483648
    %v60 = vxor.u32 %v50, 2147483648
    %v61 = vxor.u32 %v51, 2147483648
    %v62 = vmul.f32 %v52, 1.442695
    %v63 = vpow.pop %v62
    %v64 = vmul.f32 %v53, 1.442695
    %v65 = vpow.pop %v64
    %v66 = vmul.f32 %v54, 1.442695
    %v67 = vpow.pop %v66
    %v68 = vmul.f32 %v55, 1.442695
    %v69 = vpow.pop %v68
    %v70 = vmul.f32 %v56, 1.442695
    %v71 = vpow.pop %v70
    %v72 = vmul.f32 %v57, 1.442695
    %v73 = vpow.pop %v72
    %v74 = vmul.f32 %v58, 1.442695
    %v75 = vpow.pop %v74
    %v76 = vmul.f32 %v59, 1.442695
    %v77 = vpow.pop %v76
    %v78 = vmul.f32 %v60, 1.442695
    %v79 = vpow.pop %v78
    %v80 = vmul.f32 %v61, 1.442695
    %v81 = vpow.pop %v80
    %v82 = vadd.f32 %v63, 1.0
    %v83 = vadd.f32 %v65, 1.0
    %v84 = vadd.f32 %v67, 1.0
    %v85 = vadd.f32 %v69, 1.0
    %v86 = vadd.f32 %v71, 1.0
    %v87 = vadd.f32 %v73, 1.0
    %v88 = vadd.f32 %v75, 1.0
    %v89 = vadd.f32 %v77, 1.0
    %v90 = vadd.f32 %v79, 1.0
    %v91 = vadd.f32 %v81, 1.0
    %v92 = vrcp.pop %v82
    %v93 = vmul.f32 %v82, %v92
    %v94 = vsub.f32 1.0, %v93
    %v95 = vmul.f32 %v92, %v94
    %v96 = vadd.f32 %v92, %v95
    %vm97 = vweird.f32 %v82
    %vm98 = vweird.f32 %v92
    %vm99 = vmor %vm97, %vm98
    %v100 = vsel %vm99, %v92, %v96
    %v101 = vand.u32 2147483647, %v82
    %vm102 = vcmp.eq.f32.partialorder %v101, 8.507059e+37
    %v103 = vand.u32 %v82, 2147483648
    %v104 = vor.u32 1.1754944e-38, %v103
    %v105 = vsel %vm102, %v104, %v100
    %v106 = vmul.f32 1.0, %v105
    %v107 = vrcp.pop %v83
    %v108 = vmul.f32 %v83, %v107
    %v109 = vsub.f32 1.0, %v108
    %v110 = vmul.f32 %v107, %v109
    %v111 = vadd.f32 %v107, %v110
    %vm112 = vweird.f32 %v83
    %vm113 = vweird.f32 %v107
    %vm114 = vmor %vm112, %vm113
    %v115 = vsel %vm114, %v107, %v111
    %v116 = vand.u32 2147483647, %v83
    %vm117 = vcmp.eq.f32.partialorder %v116, 8.507059e+37
    %v118 = vand.u32 %v83, 2147483648
    %v119 = vor.u32 1.1754944e-38, %v118
    %v120 = vsel %vm117, %v119, %v115
    %v121 = vmul.f32 1.0, %v120
    %v122 = vrcp.pop %v84
    %v123 = vmul.f32 %v84, %v122
    %v124 = vsub.f32 1.0, %v123
    %v125 = vmul.f32 %v122, %v124
    %v126 = vadd.f32 %v122, %v125
    %vm127 = vweird.f32 %v84
    %vm128 = vweird.f32 %v122
    %vm129 = vmor %vm127, %vm128
    %v130 = vsel %vm129, %v122, %v126
    %v131 = vand.u32 2147483647, %v84
    %vm132 = vcmp.eq.f32.partialorder %v131, 8.507059e+37
    %v133 = vand.u32 %v84, 2147483648
    %v134 = vor.u32 1.1754944e-38, %v133
    %v135 = vsel %vm132, %v134, %v130
    %v136 = vmul.f32 1.0, %v135
    %v137 = vrcp.pop %v85
    %v138 = vmul.f32 %v85, %v137
    %v139 = vsub.f32 1.0, %v138
    %v140 = vmul.f32 %v137, %v139
    %v141 = vadd.f32 %v137, %v140
    %vm142 = vweird.f32 %v85
    %vm143 = vweird.f32 %v137
    %vm144 = vmor %vm142, %vm143
    %v145 = vsel %vm144, %v137, %v141
    %v146 = vand.u32 2147483647, %v85
    %vm147 = vcmp.eq.f32.partialorder %v146, 8.507059e+37
    %v148 = vand.u32 %v85, 2147483648
    %v149 = vor.u32 1.1754944e-38, %v148
    %v150 = vsel %vm147, %v149, %v145
    %v151 = vmul.f32 1.0, %v150
    %v152 = vrcp.pop %v86
    %v153 = vmul.f32 %v86, %v152
    %v154 = vsub.f32 1.0, %v153
    %v155 = vmul.f32 %v152, %v154
    %v156 = vadd.f32 %v152, %v155
    %vm157 = vweird.f32 %v86
    %vm158 = vweird.f32 %v152
    %vm159 = vmor %vm157, %vm158
    %v160 = vsel %vm159, %v152, %v156
    %v161 = vand.u32 2147483647, %v86
    %vm162 = vcmp.eq.f32.partialorder %v161, 8.507059e+37
    %v163 = vand.u32 %v86, 2147483648
    %v164 = vor.u32 1.1754944e-38, %v163
    %v165 = vsel %vm162, %v164, %v160
    %v166 = vmul.f32 1.0, %v165
    %v167 = vrcp.pop %v87
    %v168 = vmul.f32 %v87, %v167
    %v169 = vsub.f32 1.0, %v168
    %v170 = vmul.f32 %v167, %v169
    %v171 = vadd.f32 %v167, %v170
    %vm172 = vweird.f32 %v87
    %vm173 = vweird.f32 %v167
    %vm174 = vmor %vm172, %vm173
    %v175 = vsel %vm174, %v167, %v171
    %v176 = vand.u32 2147483647, %v87
    %vm177 = vcmp.eq.f32.partialorder %v176, 8.507059e+37
    %v178 = vand.u32 %v87, 2147483648
    %v179 = vor.u32 1.1754944e-38, %v178
    %v180 = vsel %vm177, %v179, %v175
    %v181 = vmul.f32 1.0, %v180
    %v182 = vrcp.pop %v88
    %v183 = vmul.f32 %v88, %v182
    %v184 = vsub.f32 1.0, %v183
    %v185 = vmul.f32 %v182, %v184
    %v186 = vadd.f32 %v182, %v185
    %vm187 = vweird.f32 %v88
    %vm188 = vweird.f32 %v182
    %vm189 = vmor %vm187, %vm188
    %v190 = vsel %vm189, %v182, %v186
    %v191 = vand.u32 2147483647, %v88
    %vm192 = vcmp.eq.f32.partialorder %v191, 8.507059e+37
    %v193 = vand.u32 %v88, 2147483648
    %v194 = vor.u32 1.1754944e-38, %v193
    %v195 = vsel %vm192, %v194, %v190
    %v196 = vmul.f32 1.0, %v195
    %v197 = vrcp.pop %v89
    %v198 = vmul.f32 %v89, %v197
    %v199 = vsub.f32 1.0, %v198
    %v200 = vmul.f32 %v197, %v199
    %v201 = vadd.f32 %v197, %v200
    %vm202 = vweird.f32 %v89
    %vm203 = vweird.f32 %v197
    %vm204 = vmor %vm202, %vm203
    %v205 = vsel %vm204, %v197, %v201
    %v206 = vand.u32 2147483647, %v89
    %vm207 = vcmp.eq.f32.partialorder %v206, 8.507059e+37
    %v208 = vand.u32 %v89, 2147483648
    %v209 = vor.u32 1.1754944e-38, %v208
    %v210 = vsel %vm207, %v209, %v205
    %v211 = vmul.f32 1.0, %v210
    %v212 = vrcp.pop %v90
    %v213 = vmul.f32 %v90, %v212
    %v214 = vsub.f32 1.0, %v213
    %v215 = vmul.f32 %v212, %v214
    %v216 = vadd.f32 %v212, %v215
    %vm217 = vweird.f32 %v90
    %vm218 = vweird.f32 %v212
    %vm219 = vmor %vm217, %vm218
    %v220 = vsel %vm219, %v212, %v216
    %v221 = vand.u32 2147483647, %v90
    %vm222 = vcmp.eq.f32.partialorder %v221, 8.507059e+37
    %v223 = vand.u32 %v90, 2147483648
    %v224 = vor.u32 1.1754944e-38, %v223
    %v225 = vsel %vm222, %v224, %v220
    %v226 = vmul.f32 1.0, %v225
    %v227 = vrcp.pop %v91
    %v228 = vmul.f32 %v91, %v227
    %v229 = vsub.f32 1.0, %v228
    %v230 = vmul.f32 %v227, %v229
    %v231 = vadd.f32 %v227, %v230
    %vm232 = vweird.f32 %v91
    %vm233 = vweird.f32 %v227
    %vm234 = vmor %vm232, %vm233
    %v235 = vsel %vm234, %v227, %v231
    %v236 = vand.u32 2147483647, %v91
    %vm237 = vcmp.eq.f32.partialorder %v236, 8.507059e+37
    %v238 = vand.u32 %v91, 2147483648
    %v239 = vor.u32 1.1754944e-38, %v238
    %v240 = vsel %vm237, %v239, %v235
    %v241 = vmul.f32 1.0, %v240
    %v242 = vmul.f32 %v42, %v106
    %v243 = vmul.f32 %v43, %v121
    %v244 = vmul.f32 %v44, %v136
    %v245 = vmul.f32 %v45, %v151
    %v246 = vmul.f32 %v46, %v166
    %v247 = vmul.f32 %v47, %v181
    %v248 = vmul.f32 %v48, %v196
    %v249 = vmul.f32 %v49, %v211
    %v250 = vmul.f32 %v50, %v226
    %v251 = vmul.f32 %v51, %v241
    %252 = vst [vmem:[#allocation2] sm:$0xff] %v242
    %253 = vst [vmem:[#allocation2 + $0x8] sm:$0xff] %v243
    %254 = vst [vmem:[#allocation2 + $0x20] sm:$0xff] %v244
    %255 = vst [vmem:[#allocation2 + $0x28] sm:$0xff] %v245
    %256 = vst [vmem:[#allocation2 + $0x40] sm:$0xff] %v246
    %257 = vst [vmem:[#allocation2 + $0x48] sm:$0xff] %v247
    %258 = vst [vmem:[#allocation2 + $0x60] sm:$0xff] %v248
    %259 = vst [vmem:[#allocation2 + $0x68] sm:$0xff] %v249
    %260 = vst [vmem:[#allocation2 + $0x80] sm:$0xff] %v250
    %261 = vst [vmem:[#allocation2 + $0x88] sm:$0xff] %v251
    %vm262 = vcmp.ge.f32.partialorder %v42, -2.5
    %vm263 = vcmp.ge.f32.partialorder %v43, -2.5
    %vm264 = vcmp.ge.f32.partialorder %v44, -2.5
    %vm265 = vcmp.ge.f32.partialorder %v45, -2.5
    %vm266 = vcmp.ge.f32.partialorder %v46, -2.5
    %vm267 = vcmp.ge.f32.partialorder %v47, -2.5
    %vm268 = vcmp.ge.f32.partialorder %v48, -2.5
    %vm269 = vcmp.ge.f32.partialorder %v49, -2.5
    %vm270 = vcmp.ge.f32.partialorder %v50, -2.5
    %vm271 = vcmp.ge.f32.partialorder %v51, -2.5
    %v272 = vsel %vm262, 1.0, 0.0
    %v273 = vsel %vm263, 1.0, 0.0
    %v274 = vsel %vm264, 1.0, 0.0
    %v275 = vsel %vm265, 1.0, 0.0
    %v276 = vsel %vm266, 1.0, 0.0
    %v277 = vsel %vm267, 1.0, 0.0
    %v278 = vsel %vm268, 1.0, 0.0
    %v279 = vsel %vm269, 1.0, 0.0
    %v280 = vsel %vm270, 1.0, 0.0
    %v281 = vsel %vm271, 1.0, 0.0
    %vm282 = vcmp.ge.f32.partialorder %v42, -2.0
    %vm283 = vcmp.ge.f32.partialorder %v43, -2.0
    %vm284 = vcmp.ge.f32.partialorder %v44, -2.0
    %vm285 = vcmp.ge.f32.partialorder %v45, -2.0
    %vm286 = vcmp.ge.f32.partialorder %v46, -2.0
    %vm287 = vcmp.ge.f32.partialorder %v47, -2.0
    %vm288 = vcmp.ge.f32.partialorder %v48, -2.0
    %vm289 = vcmp.ge.f32.partialorder %v49, -2.0
    %vm290 = vcmp.ge.f32.partialorder %v50, -2.0
    %vm291 = vcmp.ge.f32.partialorder %v51, -2.0
    %v292 = vsel %vm282, 1.0, 0.0
    %v293 = vsel %vm283, 1.0, 0.0
    %v294 = vsel %vm284, 1.0, 0.0
    %v295 = vsel %vm285, 1.0, 0.0
    %v296 = vsel %vm286, 1.0, 0.0
    %v297 = vsel %vm287, 1.0, 0.0
    %v298 = vsel %vm288, 1.0, 0.0
    %v299 = vsel %vm289, 1.0, 0.0
    %v300 = vsel %vm290, 1.0, 0.0
    %v301 = vsel %vm291, 1.0, 0.0
    %vm302 = vcmp.ge.f32.partialorder %v42, -1.5
    %vm303 = vcmp.ge.f32.partialorder %v43, -1.5
    %vm304 = vcmp.ge.f32.partialorder %v44, -1.5
    %vm305 = vcmp.ge.f32.partialorder %v45, -1.5
    %vm306 = vcmp.ge.f32.partialorder %v46, -1.5
    %vm307 = vcmp.ge.f32.partialorder %v47, -1.5
    %vm308 = vcmp.ge.f32.partialorder %v48, -1.5
    %vm309 = vcmp.ge.f32.partialorder %v49, -1.5
    %vm310 = vcmp.ge.f32.partialorder %v50, -1.5
    %vm311 = vcmp.ge.f32.partialorder %v51, -1.5
    %v312 = vsel %vm302, 1.0, 0.0
    %v313 = vsel %vm303, 1.0, 0.0
    %v314 = vsel %vm304, 1.0, 0.0
    %v315 = vsel %vm305, 1.0, 0.0
    %v316 = vsel %vm306, 1.0, 0.0
    %v317 = vsel %vm307, 1.0, 0.0
    %v318 = vsel %vm308, 1.0, 0.0
    %v319 = vsel %vm309, 1.0, 0.0
    %v320 = vsel %vm310, 1.0, 0.0
    %v321 = vsel %vm311, 1.0, 0.0
    %vm322 = vcmp.ge.f32.partialorder %v42, -1.0
    %vm323 = vcmp.ge.f32.partialorder %v43, -1.0
    %vm324 = vcmp.ge.f32.partialorder %v44, -1.0
    %vm325 = vcmp.ge.f32.partialorder %v45, -1.0
    %vm326 = vcmp.ge.f32.partialorder %v46, -1.0
    %vm327 = vcmp.ge.f32.partialorder %v47, -1.0
    %vm328 = vcmp.ge.f32.partialorder %v48, -1.0
    %vm329 = vcmp.ge.f32.partialorder %v49, -1.0
    %vm330 = vcmp.ge.f32.partialorder %v50, -1.0
    %vm331 = vcmp.ge.f32.partialorder %v51, -1.0
    %v332 = vsel %vm322, 1.0, 0.0
    %v333 = vsel %vm323, 1.0, 0.0
    %v334 = vsel %vm324, 1.0, 0.0
    %v335 = vsel %vm325, 1.0, 0.0
    %v336 = vsel %vm326, 1.0, 0.0
    %v337 = vsel %vm327, 1.0, 0.0
    %v338 = vsel %vm328, 1.0, 0.0
    %v339 = vsel %vm329, 1.0, 0.0
    %v340 = vsel %vm330, 1.0, 0.0
    %v341 = vsel %vm331, 1.0, 0.0
    %vm342 = vcmp.ge.f32.partialorder %v42, -0.5
    %vm343 = vcmp.ge.f32.partialorder %v43, -0.5
    %vm344 = vcmp.ge.f32.partialorder %v44, -0.5
    %vm345 = vcmp.ge.f32.partialorder %v45, -0.5
    %vm346 = vcmp.ge.f32.partialorder %v46, -0.5
    %vm347 = vcmp.ge.f32.partialorder %v47, -0.5
    %vm348 = vcmp.ge.f32.partialorder %v48, -0.5
    %vm349 = vcmp.ge.f32.partialorder %v49, -0.5
    %vm350 = vcmp.ge.f32.partialorder %v50, -0.5
    %vm351 = vcmp.ge.f32.partialorder %v51, -0.5
    %v352 = vsel %vm342, 1.0, 0.0
    %v353 = vsel %vm343, 1.0, 0.0
    %v354 = vsel %vm344, 1.0, 0.0
    %v355 = vsel %vm345, 1.0, 0.0
    %v356 = vsel %vm346, 1.0, 0.0
    %v357 = vsel %vm347, 1.0, 0.0
    %v358 = vsel %vm348, 1.0, 0.0
    %v359 = vsel %vm349, 1.0, 0.0
    %v360 = vsel %vm350, 1.0, 0.0
    %v361 = vsel %vm351, 1.0, 0.0
    %vm362 = vcmp.ge.f32.partialorder %v42, 0.0
    %vm363 = vcmp.ge.f32.partialorder %v43, 0.0
    %vm364 = vcmp.ge.f32.partialorder %v44, 0.0
    %vm365 = vcmp.ge.f32.partialorder %v45, 0.0
    %vm366 = vcmp.ge.f32.partialorder %v46, 0.0
    %vm367 = vcmp.ge.f32.partialorder %v47, 0.0
    %vm368 = vcmp.ge.f32.partialorder %v48, 0.0
    %vm369 = vcmp.ge.f32.partialorder %v49, 0.0
    %vm370 = vcmp.ge.f32.partialorder %v50, 0.0
    %vm371 = vcmp.ge.f32.partialorder %v51, 0.0
    %v372 = vsel %vm362, 1.0, 0.0
    %v373 = vsel %vm363, 1.0, 0.0
    %v374 = vsel %vm364, 1.0, 0.0
    %v375 = vsel %vm365, 1.0, 0.0
    %v376 = vsel %vm366, 1.0, 0.0
    %v377 = vsel %vm367, 1.0, 0.0
    %v378 = vsel %vm368, 1.0, 0.0
    %v379 = vsel %vm369, 1.0, 0.0
    %v380 = vsel %vm370, 1.0, 0.0
    %v381 = vsel %vm371, 1.0, 0.0
    %vm382 = vcmp.ge.f32.partialorder %v42, 0.5
    %vm383 = vcmp.ge.f32.partialorder %v43, 0.5
    %vm384 = vcmp.ge.f32.partialorder %v44, 0.5
    %vm385 = vcmp.ge.f32.partialorder %v45, 0.5
    %vm386 = vcmp.ge.f32.partialorder %v46, 0.5
    %vm387 = vcmp.ge.f32.partialorder %v47, 0.5
    %vm388 = vcmp.ge.f32.partialorder %v48, 0.5
    %vm389 = vcmp.ge.f32.partialorder %v49, 0.5
    %vm390 = vcmp.ge.f32.partialorder %v50, 0.5
    %vm391 = vcmp.ge.f32.partialorder %v51, 0.5
    %v392 = vsel %vm382, 1.0, 0.0
    %v393 = vsel %vm383, 1.0, 0.0
    %v394 = vsel %vm384, 1.0, 0.0
    %v395 = vsel %vm385, 1.0, 0.0
    %v396 = vsel %vm386, 1.0, 0.0
    %v397 = vsel %vm387, 1.0, 0.0
    %v398 = vsel %vm388, 1.0, 0.0
    %v399 = vsel %vm389, 1.0, 0.0
    %v400 = vsel %vm390, 1.0, 0.0
    %v401 = vsel %vm391, 1.0, 0.0
    %vm402 = vcmp.ge.f32.partialorder %v42, 1.0
    %vm403 = vcmp.ge.f32.partialorder %v43, 1.0
    %vm404 = vcmp.ge.f32.partialorder %v44, 1.0
    %vm405 = vcmp.ge.f32.partialorder %v45, 1.0
    %vm406 = vcmp.ge.f32.partialorder %v46, 1.0
    %vm407 = vcmp.ge.f32.partialorder %v47, 1.0
    %vm408 = vcmp.ge.f32.partialorder %v48, 1.0
    %vm409 = vcmp.ge.f32.partialorder %v49, 1.0
    %vm410 = vcmp.ge.f32.partialorder %v50, 1.0
    %vm411 = vcmp.ge.f32.partialorder %v51, 1.0
    %v412 = vsel %vm402, 1.0, 0.0
    %v413 = vsel %vm403, 1.0, 0.0
    %v414 = vsel %vm404, 1.0, 0.0
    %v415 = vsel %vm405, 1.0, 0.0
    %v416 = vsel %vm406, 1.0, 0.0
    %v417 = vsel %vm407, 1.0, 0.0
    %v418 = vsel %vm408, 1.0, 0.0
    %v419 = vsel %vm409, 1.0, 0.0
    %v420 = vsel %vm410, 1.0, 0.0
    %v421 = vsel %vm411, 1.0, 0.0
    %vm422 = vcmp.ge.f32.partialorder %v42, 1.5
    %vm423 = vcmp.ge.f32.partialorder %v43, 1.5
    %vm424 = vcmp.ge.f32.partialorder %v44, 1.5
    %vm425 = vcmp.ge.f32.partialorder %v45, 1.5
    %vm426 = vcmp.ge.f32.partialorder %v46, 1.5
    %vm427 = vcmp.ge.f32.partialorder %v47, 1.5
    %vm428 = vcmp.ge.f32.partialorder %v48, 1.5
    %vm429 = vcmp.ge.f32.partialorder %v49, 1.5
    %vm430 = vcmp.ge.f32.partialorder %v50, 1.5
    %vm431 = vcmp.ge.f32.partialorder %v51, 1.5
    %v432 = vsel %vm422, 1.0, 0.0
    %v433 = vsel %vm423, 1.0, 0.0
    %v434 = vsel %vm424, 1.0, 0.0
    %v435 = vsel %vm425, 1.0, 0.0
    %v436 = vsel %vm426, 1.0, 0.0
    %v437 = vsel %vm427, 1.0, 0.0
    %v438 = vsel %vm428, 1.0, 0.0
    %v439 = vsel %vm429, 1.0, 0.0
    %v440 = vsel %vm430, 1.0, 0.0
    %v441 = vsel %vm431, 1.0, 0.0
    %vm442 = vcmp.ge.f32.partialorder %v42, 2.0
    %vm443 = vcmp.ge.f32.partialorder %v43, 2.0
    %vm444 = vcmp.ge.f32.partialorder %v44, 2.0
    %vm445 = vcmp.ge.f32.partialorder %v45, 2.0
    %vm446 = vcmp.ge.f32.partialorder %v46, 2.0
    %vm447 = vcmp.ge.f32.partialorder %v47, 2.0
    %vm448 = vcmp.ge.f32.partialorder %v48, 2.0
    %vm449 = vcmp.ge.f32.partialorder %v49, 2.0
    %vm450 = vcmp.ge.f32.partialorder %v50, 2.0
    %vm451 = vcmp.ge.f32.partialorder %v51, 2.0
    %v452 = vsel %vm442, 1.0, 0.0
    %v453 = vsel %vm443, 1.0, 0.0
    %v454 = vsel %vm444, 1.0, 0.0
    %v455 = vsel %vm445, 1.0, 0.0
    %v456 = vsel %vm446, 1.0, 0.0
    %v457 = vsel %vm447, 1.0, 0.0
    %v458 = vsel %vm448, 1.0, 0.0
    %v459 = vsel %vm449, 1.0, 0.0
    %v460 = vsel %vm450, 1.0, 0.0
    %v461 = vsel %vm451, 1.0, 0.0
    %vm462 = vcmp.ge.f32.partialorder %v42, 2.5
    %vm463 = vcmp.ge.f32.partialorder %v43, 2.5
    %vm464 = vcmp.ge.f32.partialorder %v44, 2.5
    %vm465 = vcmp.ge.f32.partialorder %v45, 2.5
    %vm466 = vcmp.ge.f32.partialorder %v46, 2.5
    %vm467 = vcmp.ge.f32.partialorder %v47, 2.5
    %vm468 = vcmp.ge.f32.partialorder %v48, 2.5
    %vm469 = vcmp.ge.f32.partialorder %v49, 2.5
    %vm470 = vcmp.ge.f32.partialorder %v50, 2.5
    %vm471 = vcmp.ge.f32.partialorder %v51, 2.5
    %v472 = vsel %vm462, 1.0, 0.0
    %v473 = vsel %vm463, 1.0, 0.0
    %v474 = vsel %vm464, 1.0, 0.0
    %v475 = vsel %vm465, 1.0, 0.0
    %v476 = vsel %vm466, 1.0, 0.0
    %v477 = vsel %vm467, 1.0, 0.0
    %v478 = vsel %vm468, 1.0, 0.0
    %v479 = vsel %vm469, 1.0, 0.0
    %v480 = vsel %vm470, 1.0, 0.0
    %v481 = vsel %vm471, 1.0, 0.0
    %v482 = vsub.f32 %v272, %v292
    %v483 = vsub.f32 %v273, %v293
    %v484 = vsub.f32 %v274, %v294
    %v485 = vsub.f32 %v275, %v295
    %v486 = vsub.f32 %v276, %v296
    %v487 = vsub.f32 %v277, %v297
    %v488 = vsub.f32 %v278, %v298
    %v489 = vsub.f32 %v279, %v299
    %v490 = vsub.f32 %v280, %v300
    %v491 = vsub.f32 %v281, %v301
    %v492 = vsub.f32 %v292, %v312
    %v493 = vsub.f32 %v293, %v313
    %v494 = vsub.f32 %v294, %v314
    %v495 = vsub.f32 %v295, %v315
    %v496 = vsub.f32 %v296, %v316
    %v497 = vsub.f32 %v297, %v317
    %v498 = vsub.f32 %v298, %v318
    %v499 = vsub.f32 %v299, %v319
    %v500 = vsub.f32 %v300, %v320
    %v501 = vsub.f32 %v301, %v321
    %v502 = vsub.f32 %v312, %v332
    %v503 = vsub.f32 %v313, %v333
    %v504 = vsub.f32 %v314, %v334
    %v505 = vsub.f32 %v315, %v335
    %v506 = vsub.f32 %v316, %v336
    %v507 = vsub.f32 %v317, %v337
    %v508 = vsub.f32 %v318, %v338
    %v509 = vsub.f32 %v319, %v339
    %v510 = vsub.f32 %v320, %v340
    %v511 = vsub.f32 %v321, %v341
    %v512 = vsub.f32 %v332, %v352
    %v513 = vsub.f32 %v333, %v353
    %v514 = vsub.f32 %v334, %v354
    %v515 = vsub.f32 %v335, %v355
    %v516 = vsub.f32 %v336, %v356
    %v517 = vsub.f32 %v337, %v357
    %v518 = vsub.f32 %v338, %v358
    %v519 = vsub.f32 %v339, %v359
    %v520 = vsub.f32 %v340, %v360
    %v521 = vsub.f32 %v341, %v361
    %v522 = vsub.f32 %v352, %v372
    %v523 = vsub.f32 %v353, %v373
    %v524 = vsub.f32 %v354, %v374
    %v525 = vsub.f32 %v355, %v375
    %v526 = vsub.f32 %v356, %v376
    %v527 = vsub.f32 %v357, %v377
    %v528 = vsub.f32 %v358, %v378
    %v529 = vsub.f32 %v359, %v379
    %v530 = vsub.f32 %v360, %v380
    %v531 = vsub.f32 %v361, %v381
    %v532 = vsub.f32 %v372, %v392
    %v533 = vsub.f32 %v373, %v393
    %v534 = vsub.f32 %v374, %v394
    %v535 = vsub.f32 %v375, %v395
    %v536 = vsub.f32 %v376, %v396
    %v537 = vsub.f32 %v377, %v397
    %v538 = vsub.f32 %v378, %v398
    %v539 = vsub.f32 %v379, %v399
    %v540 = vsub.f32 %v380, %v400
    %v541 = vsub.f32 %v381, %v401
    %v542 = vsub.f32 %v392, %v412
    %v543 = vsub.f32 %v393, %v413
    %v544 = vsub.f32 %v394, %v414
    %v545 = vsub.f32 %v395, %v415
    %v546 = vsub.f32 %v396, %v416
    %v547 = vsub.f32 %v397, %v417
    %v548 = vsub.f32 %v398, %v418
    %v549 = vsub.f32 %v399, %v419
    %v550 = vsub.f32 %v400, %v420
    %v551 = vsub.f32 %v401, %v421
    %v552 = vsub.f32 %v412, %v432
    %v553 = vsub.f32 %v413, %v433
    %v554 = vsub.f32 %v414, %v434
    %v555 = vsub.f32 %v415, %v435
    %v556 = vsub.f32 %v416, %v436
    %v557 = vsub.f32 %v417, %v437
    %v558 = vsub.f32 %v418, %v438
    %v559 = vsub.f32 %v419, %v439
    %v560 = vsub.f32 %v420, %v440
    %v561 = vsub.f32 %v421, %v441
    %v562 = vsub.f32 %v432, %v452
    %v563 = vsub.f32 %v433, %v453
    %v564 = vsub.f32 %v434, %v454
    %v565 = vsub.f32 %v435, %v455
    %v566 = vsub.f32 %v436, %v456
    %v567 = vsub.f32 %v437, %v457
    %v568 = vsub.f32 %v438, %v458
    %v569 = vsub.f32 %v439, %v459
    %v570 = vsub.f32 %v440, %v460
    %v571 = vsub.f32 %v441, %v461
    %v572 = vsub.f32 %v452, %v472
    %v573 = vsub.f32 %v453, %v473
    %v574 = vsub.f32 %v454, %v474
    %v575 = vsub.f32 %v455, %v475
    %v576 = vsub.f32 %v456, %v476
    %v577 = vsub.f32 %v457, %v477
    %v578 = vsub.f32 %v458, %v478
    %v579 = vsub.f32 %v459, %v479
    %v580 = vsub.f32 %v460, %v480
    %v581 = vsub.f32 %v461, %v481
    %v582 = vsub.f32 %v42, -2.5
    %v583 = vsub.f32 %v43, -2.5
    %v584 = vsub.f32 %v44, -2.5
    %v585 = vsub.f32 %v45, -2.5
    %v586 = vsub.f32 %v46, -2.5
    %v587 = vsub.f32 %v47, -2.5
    %v588 = vsub.f32 %v48, -2.5
    %v589 = vsub.f32 %v49, -2.5
    %v590 = vsub.f32 %v50, -2.5
    %v591 = vsub.f32 %v51, -2.5
    %v592 = vmul.f32 %v582, 2.0
    %v593 = vmul.f32 %v583, 2.0
    %v594 = vmul.f32 %v584, 2.0
    %v595 = vmul.f32 %v585, 2.0
    %v596 = vmul.f32 %v586, 2.0
    %v597 = vmul.f32 %v587, 2.0
    %v598 = vmul.f32 %v588, 2.0
    %v599 = vmul.f32 %v589, 2.0
    %v600 = vmul.f32 %v590, 2.0
    %v601 = vmul.f32 %v591, 2.0
    %v602 = vmul.f32 %v592, %v482
    %v603 = vmul.f32 %v593, %v483
    %v604 = vmul.f32 %v594, %v484
    %v605 = vmul.f32 %v595, %v485
    %v606 = vmul.f32 %v596, %v486
    %v607 = vmul.f32 %v597, %v487
    %v608 = vmul.f32 %v598, %v488
    %v609 = vmul.f32 %v599, %v489
    %v610 = vmul.f32 %v600, %v490
    %v611 = vmul.f32 %v601, %v491
    %v612 = vsub.f32 %v42, -1.5
    %v613 = vsub.f32 %v43, -1.5
    %v614 = vsub.f32 %v44, -1.5
    %v615 = vsub.f32 %v45, -1.5
    %v616 = vsub.f32 %v46, -1.5
    %v617 = vsub.f32 %v47, -1.5
    %v618 = vsub.f32 %v48, -1.5
    %v619 = vsub.f32 %v49, -1.5
    %v620 = vsub.f32 %v50, -1.5
    %v621 = vsub.f32 %v51, -1.5
    %v622 = vmul.f32 %v612, -2.0
    %v623 = vmul.f32 %v613, -2.0
    %v624 = vmul.f32 %v614, -2.0
    %v625 = vmul.f32 %v615, -2.0
    %v626 = vmul.f32 %v616, -2.0
    %v627 = vmul.f32 %v617, -2.0
    %v628 = vmul.f32 %v618, -2.0
    %v629 = vmul.f32 %v619, -2.0
    %v630 = vmul.f32 %v620, -2.0
    %v631 = vmul.f32 %v621, -2.0
    %v632 = vmul.f32 %v622, %v492
    %v633 = vmul.f32 %v623, %v493
    %v634 = vmul.f32 %v624, %v494
    %v635 = vmul.f32 %v625, %v495
    %v636 = vmul.f32 %v626, %v496
    %v637 = vmul.f32 %v627, %v497
    %v638 = vmul.f32 %v628, %v498
    %v639 = vmul.f32 %v629, %v499
    %v640 = vmul.f32 %v630, %v500
    %v641 = vmul.f32 %v631, %v501
    %v642 = vadd.f32 %v602, %v632
    %v643 = vadd.f32 %v603, %v633
    %v644 = vadd.f32 %v604, %v634
    %v645 = vadd.f32 %v605, %v635
    %v646 = vadd.f32 %v606, %v636
    %v647 = vadd.f32 %v607, %v637
    %v648 = vadd.f32 %v608, %v638
    %v649 = vadd.f32 %v609, %v639
    %v650 = vadd.f32 %v610, %v640
    %v651 = vadd.f32 %v611, %v641
    %v652 = vsub.f32 %v42, -2.0
    %v653 = vsub.f32 %v43, -2.0
    %v654 = vsub.f32 %v44, -2.0
    %v655 = vsub.f32 %v45, -2.0
    %v656 = vsub.f32 %v46, -2.0
    %v657 = vsub.f32 %v47, -2.0
    %v658 = vsub.f32 %v48, -2.0
    %v659 = vsub.f32 %v49, -2.0
    %v660 = vsub.f32 %v50, -2.0
    %v661 = vsub.f32 %v51, -2.0
    %v662 = vmul.f32 %v652, 2.0
    %v663 = vmul.f32 %v653, 2.0
    %v664 = vmul.f32 %v654, 2.0
    %v665 = vmul.f32 %v655, 2.0
    %v666 = vmul.f32 %v656, 2.0
    %v667 = vmul.f32 %v657, 2.0
    %v668 = vmul.f32 %v658, 2.0
    %v669 = vmul.f32 %v659, 2.0
    %v670 = vmul.f32 %v660, 2.0
    %v671 = vmul.f32 %v661, 2.0
    %v672 = vmul.f32 %v662, %v492
    %v673 = vmul.f32 %v663, %v493
    %v674 = vmul.f32 %v664, %v494
    %v675 = vmul.f32 %v665, %v495
    %v676 = vmul.f32 %v666, %v496
    %v677 = vmul.f32 %v667, %v497
    %v678 = vmul.f32 %v668, %v498
    %v679 = vmul.f32 %v669, %v499
    %v680 = vmul.f32 %v670, %v500
    %v681 = vmul.f32 %v671, %v501
    %v682 = vsub.f32 %v42, -1.0
    %v683 = vsub.f32 %v43, -1.0
    %v684 = vsub.f32 %v44, -1.0
    %v685 = vsub.f32 %v45, -1.0
    %v686 = vsub.f32 %v46, -1.0
    %v687 = vsub.f32 %v47, -1.0
    %v688 = vsub.f32 %v48, -1.0
    %v689 = vsub.f32 %v49, -1.0
    %v690 = vsub.f32 %v50, -1.0
    %v691 = vsub.f32 %v51, -1.0
    %v692 = vmul.f32 %v682, -2.0
    %v693 = vmul.f32 %v683, -2.0
    %v694 = vmul.f32 %v684, -2.0
    %v695 = vmul.f32 %v685, -2.0
    %v696 = vmul.f32 %v686, -2.0
    %v697 = vmul.f32 %v687, -2.0
    %v698 = vmul.f32 %v688, -2.0
    %v699 = vmul.f32 %v689, -2.0
    %v700 = vmul.f32 %v690, -2.0
    %v701 = vmul.f32 %v691, -2.0
    %v702 = vmul.f32 %v692, %v502
    %v703 = vmul.f32 %v693, %v503
    %v704 = vmul.f32 %v694, %v504
    %v705 = vmul.f32 %v695, %v505
    %v706 = vmul.f32 %v696, %v506
    %v707 = vmul.f32 %v697, %v507
    %v708 = vmul.f32 %v698, %v508
    %v709 = vmul.f32 %v699, %v509
    %v710 = vmul.f32 %v700, %v510
    %v711 = vmul.f32 %v701, %v511
    %v712 = vadd.f32 %v672, %v702
    %v713 = vadd.f32 %v673, %v703
    %v714 = vadd.f32 %v674, %v704
    %v715 = vadd.f32 %v675, %v705
    %v716 = vadd.f32 %v676, %v706
    %v717 = vadd.f32 %v677, %v707
    %v718 = vadd.f32 %v678, %v708
    %v719 = vadd.f32 %v679, %v709
    %v720 = vadd.f32 %v680, %v710
    %v721 = vadd.f32 %v681, %v711
    %v722 = vmul.f32 %v612, 2.0
    %v723 = vmul.f32 %v613, 2.0
    %v724 = vmul.f32 %v614, 2.0
    %v725 = vmul.f32 %v615, 2.0
    %v726 = vmul.f32 %v616, 2.0
    %v727 = vmul.f32 %v617, 2.0
    %v728 = vmul.f32 %v618, 2.0
    %v729 = vmul.f32 %v619, 2.0
    %v730 = vmul.f32 %v620, 2.0
    %v731 = vmul.f32 %v621, 2.0
    %v732 = vmul.f32 %v722, %v502
    %v733 = vmul.f32 %v723, %v503
    %v734 = vmul.f32 %v724, %v504
    %v735 = vmul.f32 %v725, %v505
    %v736 = vmul.f32 %v726, %v506
    %v737 = vmul.f32 %v727, %v507
    %v738 = vmul.f32 %v728, %v508
    %v739 = vmul.f32 %v729, %v509
    %v740 = vmul.f32 %v730, %v510
    %v741 = vmul.f32 %v731, %v511
    %v742 = vsub.f32 %v42, -0.5
    %v743 = vsub.f32 %v43, -0.5
    %v744 = vsub.f32 %v44, -0.5
    %v745 = vsub.f32 %v45, -0.5
    %v746 = vsub.f32 %v46, -0.5
    %v747 = vsub.f32 %v47, -0.5
    %v748 = vsub.f32 %v48, -0.5
    %v749 = vsub.f32 %v49, -0.5
    %v750 = vsub.f32 %v50, -0.5
    %v751 = vsub.f32 %v51, -0.5
    %v752 = vmul.f32 %v742, -2.0
    %v753 = vmul.f32 %v743, -2.0
    %v754 = vmul.f32 %v744, -2.0
    %v755 = vmul.f32 %v745, -2.0
    %v756 = vmul.f32 %v746, -2.0
    %v757 = vmul.f32 %v747, -2.0
    %v758 = vmul.f32 %v748, -2.0
    %v759 = vmul.f32 %v749, -2.0
    %v760 = vmul.f32 %v750, -2.0
    %v761 = vmul.f32 %v751, -2.0
    %v762 = vmul.f32 %v752, %v512
    %v763 = vmul.f32 %v753, %v513
    %v764 = vmul.f32 %v754, %v514
    %v765 = vmul.f32 %v755, %v515
    %v766 = vmul.f32 %v756, %v516
    %v767 = vmul.f32 %v757, %v517
    %v768 = vmul.f32 %v758, %v518
    %v769 = vmul.f32 %v759, %v519
    %v770 = vmul.f32 %v760, %v520
    %v771 = vmul.f32 %v761, %v521
    %v772 = vadd.f32 %v732, %v762
    %v773 = vadd.f32 %v733, %v763
    %v774 = vadd.f32 %v734, %v764
    %v775 = vadd.f32 %v735, %v765
    %v776 = vadd.f32 %v736, %v766
    %v777 = vadd.f32 %v737, %v767
    %v778 = vadd.f32 %v738, %v768
    %v779 = vadd.f32 %v739, %v769
    %v780 = vadd.f32 %v740, %v770
    %v781 = vadd.f32 %v741, %v771
    %v782 = vmul.f32 %v682, 2.0
    %v783 = vmul.f32 %v683, 2.0
    %v784 = vmul.f32 %v684, 2.0
    %v785 = vmul.f32 %v685, 2.0
    %v786 = vmul.f32 %v686, 2.0
    %v787 = vmul.f32 %v687, 2.0
    %v788 = vmul.f32 %v688, 2.0
    %v789 = vmul.f32 %v689, 2.0
    %v790 = vmul.f32 %v690, 2.0
    %v791 = vmul.f32 %v691, 2.0
    %v792 = vmul.f32 %v782, %v512
    %v793 = vmul.f32 %v783, %v513
    %v794 = vmul.f32 %v784, %v514
    %v795 = vmul.f32 %v785, %v515
    %v796 = vmul.f32 %v786, %v516
    %v797 = vmul.f32 %v787, %v517
    %v798 = vmul.f32 %v788, %v518
    %v799 = vmul.f32 %v789, %v519
    %v800 = vmul.f32 %v790, %v520
    %v801 = vmul.f32 %v791, %v521
    %v802 = vmul.f32 %v42, -2.0
    %v803 = vmul.f32 %v43, -2.0
    %v804 = vmul.f32 %v44, -2.0
    %v805 = vmul.f32 %v45, -2.0
    %v806 = vmul.f32 %v46, -2.0
    %v807 = vmul.f32 %v47, -2.0
    %v808 = vmul.f32 %v48, -2.0
    %v809 = vmul.f32 %v49, -2.0
    %v810 = vmul.f32 %v50, -2.0
    %v811 = vmul.f32 %v51, -2.0
    %v812 = vmul.f32 %v802, %v522
    %v813 = vmul.f32 %v803, %v523
    %v814 = vmul.f32 %v804, %v524
    %v815 = vmul.f32 %v805, %v525
    %v816 = vmul.f32 %v806, %v526
    %v817 = vmul.f32 %v807, %v527
    %v818 = vmul.f32 %v808, %v528
    %v819 = vmul.f32 %v809, %v529
    %v820 = vmul.f32 %v810, %v530
    %v821 = vmul.f32 %v811, %v531
    %v822 = vadd.f32 %v792, %v812
    %v823 = vadd.f32 %v793, %v813
    %v824 = vadd.f32 %v794, %v814
    %v825 = vadd.f32 %v795, %v815
    %v826 = vadd.f32 %v796, %v816
    %v827 = vadd.f32 %v797, %v817
    %v828 = vadd.f32 %v798, %v818
    %v829 = vadd.f32 %v799, %v819
    %v830 = vadd.f32 %v800, %v820
    %v831 = vadd.f32 %v801, %v821
    %v832 = vmul.f32 %v742, 2.0
    %v833 = vmul.f32 %v743, 2.0
    %v834 = vmul.f32 %v744, 2.0
    %v835 = vmul.f32 %v745, 2.0
    %v836 = vmul.f32 %v746, 2.0
    %v837 = vmul.f32 %v747, 2.0
    %v838 = vmul.f32 %v748, 2.0
    %v839 = vmul.f32 %v749, 2.0
    %v840 = vmul.f32 %v750, 2.0
    %v841 = vmul.f32 %v751, 2.0
    %v842 = vmul.f32 %v832, %v522
    %v843 = vmul.f32 %v833, %v523
    %v844 = vmul.f32 %v834, %v524
    %v845 = vmul.f32 %v835, %v525
    %v846 = vmul.f32 %v836, %v526
    %v847 = vmul.f32 %v837, %v527
    %v848 = vmul.f32 %v838, %v528
    %v849 = vmul.f32 %v839, %v529
    %v850 = vmul.f32 %v840, %v530
    %v851 = vmul.f32 %v841, %v531
    %v852 = vsub.f32 %v42, 0.5
    %v853 = vsub.f32 %v43, 0.5
    %v854 = vsub.f32 %v44, 0.5
    %v855 = vsub.f32 %v45, 0.5
    %v856 = vsub.f32 %v46, 0.5
    %v857 = vsub.f32 %v47, 0.5
    %v858 = vsub.f32 %v48, 0.5
    %v859 = vsub.f32 %v49, 0.5
    %v860 = vsub.f32 %v50, 0.5
    %v861 = vsub.f32 %v51, 0.5
    %v862 = vmul.f32 %v852, -2.0
    %v863 = vmul.f32 %v853, -2.0
    %v864 = vmul.f32 %v854, -2.0
    %v865 = vmul.f32 %v855, -2.0
    %v866 = vmul.f32 %v856, -2.0
    %v867 = vmul.f32 %v857, -2.0
    %v868 = vmul.f32 %v858, -2.0
    %v869 = vmul.f32 %v859, -2.0
    %v870 = vmul.f32 %v860, -2.0
    %v871 = vmul.f32 %v861, -2.0
    %v872 = vmul.f32 %v862, %v532
    %v873 = vmul.f32 %v863, %v533
    %v874 = vmul.f32 %v864, %v534
    %v875 = vmul.f32 %v865, %v535
    %v876 = vmul.f32 %v866, %v536
    %v877 = vmul.f32 %v867, %v537
    %v878 = vmul.f32 %v868, %v538
    %v879 = vmul.f32 %v869, %v539
    %v880 = vmul.f32 %v870, %v540
    %v881 = vmul.f32 %v871, %v541
    %v882 = vadd.f32 %v842, %v872
    %v883 = vadd.f32 %v843, %v873
    %v884 = vadd.f32 %v844, %v874
    %v885 = vadd.f32 %v845, %v875
    %v886 = vadd.f32 %v846, %v876
    %v887 = vadd.f32 %v847, %v877
    %v888 = vadd.f32 %v848, %v878
    %v889 = vadd.f32 %v849, %v879
    %v890 = vadd.f32 %v850, %v880
    %v891 = vadd.f32 %v851, %v881
    %v892 = vmul.f32 %v42, 2.0
    %v893 = vmul.f32 %v43, 2.0
    %v894 = vmul.f32 %v44, 2.0
    %v895 = vmul.f32 %v45, 2.0
    %v896 = vmul.f32 %v46, 2.0
    %v897 = vmul.f32 %v47, 2.0
    %v898 = vmul.f32 %v48, 2.0
    %v899 = vmul.f32 %v49, 2.0
    %v900 = vmul.f32 %v50, 2.0
    %v901 = vmul.f32 %v51, 2.0
    %v902 = vmul.f32 %v892, %v532
    %v903 = vmul.f32 %v893, %v533
    %v904 = vmul.f32 %v894, %v534
    %v905 = vmul.f32 %v895, %v535
    %v906 = vmul.f32 %v896, %v536
    %v907 = vmul.f32 %v897, %v537
    %v908 = vmul.f32 %v898, %v538
    %v909 = vmul.f32 %v899, %v539
    %v910 = vmul.f32 %v900, %v540
    %v911 = vmul.f32 %v901, %v541
    %v912 = vsub.f32 %v42, 1.0
    %v913 = vsub.f32 %v43, 1.0
    %v914 = vsub.f32 %v44, 1.0
    %v915 = vsub.f32 %v45, 1.0
    %v916 = vsub.f32 %v46, 1.0
    %v917 = vsub.f32 %v47, 1.0
    %v918 = vsub.f32 %v48, 1.0
    %v919 = vsub.f32 %v49, 1.0
    %v920 = vsub.f32 %v50, 1.0
    %v921 = vsub.f32 %v51, 1.0
    %v922 = vmul.f32 %v912, -2.0
    %v923 = vmul.f32 %v913, -2.0
    %v924 = vmul.f32 %v914, -2.0
    %v925 = vmul.f32 %v915, -2.0
    %v926 = vmul.f32 %v916, -2.0
    %v927 = vmul.f32 %v917, -2.0
    %v928 = vmul.f32 %v918, -2.0
    %v929 = vmul.f32 %v919, -2.0
    %v930 = vmul.f32 %v920, -2.0
    %v931 = vmul.f32 %v921, -2.0
    %v932 = vmul.f32 %v922, %v542
    %v933 = vmul.f32 %v923, %v543
    %v934 = vmul.f32 %v924, %v544
    %v935 = vmul.f32 %v925, %v545
    %v936 = vmul.f32 %v926, %v546
    %v937 = vmul.f32 %v927, %v547
    %v938 = vmul.f32 %v928, %v548
    %v939 = vmul.f32 %v929, %v549
    %v940 = vmul.f32 %v930, %v550
    %v941 = vmul.f32 %v931, %v551
    %v942 = vadd.f32 %v902, %v932
    %v943 = vadd.f32 %v903, %v933
    %v944 = vadd.f32 %v904, %v934
    %v945 = vadd.f32 %v905, %v935
    %v946 = vadd.f32 %v906, %v936
    %v947 = vadd.f32 %v907, %v937
    %v948 = vadd.f32 %v908, %v938
    %v949 = vadd.f32 %v909, %v939
    %v950 = vadd.f32 %v910, %v940
    %v951 = vadd.f32 %v911, %v941
    %v952 = vmul.f32 %v852, 2.0
    %v953 = vmul.f32 %v853, 2.0
    %v954 = vmul.f32 %v854, 2.0
    %v955 = vmul.f32 %v855, 2.0
    %v956 = vmul.f32 %v856, 2.0
    %v957 = vmul.f32 %v857, 2.0
    %v958 = vmul.f32 %v858, 2.0
    %v959 = vmul.f32 %v859, 2.0
    %v960 = vmul.f32 %v860, 2.0
    %v961 = vmul.f32 %v861, 2.0
    %v962 = vmul.f32 %v952, %v542
    %v963 = vmul.f32 %v953, %v543
    %v964 = vmul.f32 %v954, %v544
    %v965 = vmul.f32 %v955, %v545
    %v966 = vmul.f32 %v956, %v546
    %v967 = vmul.f32 %v957, %v547
    %v968 = vmul.f32 %v958, %v548
    %v969 = vmul.f32 %v959, %v549
    %v970 = vmul.f32 %v960, %v550
    %v971 = vmul.f32 %v961, %v551
    %v972 = vsub.f32 %v42, 1.5
    %v973 = vsub.f32 %v43, 1.5
    %v974 = vsub.f32 %v44, 1.5
    %v975 = vsub.f32 %v45, 1.5
    %v976 = vsub.f32 %v46, 1.5
    %v977 = vsub.f32 %v47, 1.5
    %v978 = vsub.f32 %v48, 1.5
    %v979 = vsub.f32 %v49, 1.5
    %v980 = vsub.f32 %v50, 1.5
    %v981 = vsub.f32 %v51, 1.5
    %v982 = vmul.f32 %v972, -2.0
    %v983 = vmul.f32 %v973, -2.0
    %v984 = vmul.f32 %v974, -2.0
    %v985 = vmul.f32 %v975, -2.0
    %v986 = vmul.f32 %v976, -2.0
    %v987 = vmul.f32 %v977, -2.0
    %v988 = vmul.f32 %v978, -2.0
    %v989 = vmul.f32 %v979, -2.0
    %v990 = vmul.f32 %v980, -2.0
    %v991 = vmul.f32 %v981, -2.0
    %v992 = vmul.f32 %v982, %v552
    %v993 = vmul.f32 %v983, %v553
    %v994 = vmul.f32 %v984, %v554
    %v995 = vmul.f32 %v985, %v555
    %v996 = vmul.f32 %v986, %v556
    %v997 = vmul.f32 %v987, %v557
    %v998 = vmul.f32 %v988, %v558
    %v999 = vmul.f32 %v989, %v559
    %v1000 = vmul.f32 %v990, %v560
    %v1001 = vmul.f32 %v991, %v561
    %v1002 = vadd.f32 %v962, %v992
    %v1003 = vadd.f32 %v963, %v993
    %v1004 = vadd.f32 %v964, %v994
    %v1005 = vadd.f32 %v965, %v995
    %v1006 = vadd.f32 %v966, %v996
    %v1007 = vadd.f32 %v967, %v997
    %v1008 = vadd.f32 %v968, %v998
    %v1009 = vadd.f32 %v969, %v999
    %v1010 = vadd.f32 %v970, %v1000
    %v1011 = vadd.f32 %v971, %v1001
    %v1012 = vmul.f32 %v912, 2.0
    %v1013 = vmul.f32 %v913, 2.0
    %v1014 = vmul.f32 %v914, 2.0
    %v1015 = vmul.f32 %v915, 2.0
    %v1016 = vmul.f32 %v916, 2.0
    %v1017 = vmul.f32 %v917, 2.0
    %v1018 = vmul.f32 %v918, 2.0
    %v1019 = vmul.f32 %v919, 2.0
    %v1020 = vmul.f32 %v920, 2.0
    %v1021 = vmul.f32 %v921, 2.0
    %v1022 = vmul.f32 %v1012, %v552
    %v1023 = vmul.f32 %v1013, %v553
    %v1024 = vmul.f32 %v1014, %v554
    %v1025 = vmul.f32 %v1015, %v555
    %v1026 = vmul.f32 %v1016, %v556
    %v1027 = vmul.f32 %v1017, %v557
    %v1028 = vmul.f32 %v1018, %v558
    %v1029 = vmul.f32 %v1019, %v559
    %v1030 = vmul.f32 %v1020, %v560
    %v1031 = vmul.f32 %v1021, %v561
    %v1032 = vsub.f32 %v42, 2.0
    %v1033 = vsub.f32 %v43, 2.0
    %v1034 = vsub.f32 %v44, 2.0
    %v1035 = vsub.f32 %v45, 2.0
    %v1036 = vsub.f32 %v46, 2.0
    %v1037 = vsub.f32 %v47, 2.0
    %v1038 = vsub.f32 %v48, 2.0
    %v1039 = vsub.f32 %v49, 2.0
    %v1040 = vsub.f32 %v50, 2.0
    %v1041 = vsub.f32 %v51, 2.0
    %v1042 = vmul.f32 %v1032, -2.0
    %v1043 = vmul.f32 %v1033, -2.0
    %v1044 = vmul.f32 %v1034, -2.0
    %v1045 = vmul.f32 %v1035, -2.0
    %v1046 = vmul.f32 %v1036, -2.0
    %v1047 = vmul.f32 %v1037, -2.0
    %v1048 = vmul.f32 %v1038, -2.0
    %v1049 = vmul.f32 %v1039, -2.0
    %v1050 = vmul.f32 %v1040, -2.0
    %v1051 = vmul.f32 %v1041, -2.0
    %v1052 = vmul.f32 %v1042, %v562
    %v1053 = vmul.f32 %v1043, %v563
    %v1054 = vmul.f32 %v1044, %v564
    %v1055 = vmul.f32 %v1045, %v565
    %v1056 = vmul.f32 %v1046, %v566
    %v1057 = vmul.f32 %v1047, %v567
    %v1058 = vmul.f32 %v1048, %v568
    %v1059 = vmul.f32 %v1049, %v569
    %v1060 = vmul.f32 %v1050, %v570
    %v1061 = vmul.f32 %v1051, %v571
    %v1062 = vadd.f32 %v1022, %v1052
    %v1063 = vadd.f32 %v1023, %v1053
    %v1064 = vadd.f32 %v1024, %v1054
    %v1065 = vadd.f32 %v1025, %v1055
    %v1066 = vadd.f32 %v1026, %v1056
    %v1067 = vadd.f32 %v1027, %v1057
    %v1068 = vadd.f32 %v1028, %v1058
    %v1069 = vadd.f32 %v1029, %v1059
    %v1070 = vadd.f32 %v1030, %v1060
    %v1071 = vadd.f32 %v1031, %v1061
    %v1072 = vmul.f32 %v972, 2.0
    %v1073 = vmul.f32 %v973, 2.0
    %v1074 = vmul.f32 %v974, 2.0
    %v1075 = vmul.f32 %v975, 2.0
    %v1076 = vmul.f32 %v976, 2.0
    %v1077 = vmul.f32 %v977, 2.0
    %v1078 = vmul.f32 %v978, 2.0
    %v1079 = vmul.f32 %v979, 2.0
    %v1080 = vmul.f32 %v980, 2.0
    %v1081 = vmul.f32 %v981, 2.0
    %v1082 = vmul.f32 %v1072, %v562
    %v1083 = vmul.f32 %v1073, %v563
    %v1084 = vmul.f32 %v1074, %v564
    %v1085 = vmul.f32 %v1075, %v565
    %v1086 = vmul.f32 %v1076, %v566
    %v1087 = vmul.f32 %v1077, %v567
    %v1088 = vmul.f32 %v1078, %v568
    %v1089 = vmul.f32 %v1079, %v569
    %v1090 = vmul.f32 %v1080, %v570
    %v1091 = vmul.f32 %v1081, %v571
    %v1092 = vsub.f32 %v42, 2.5
    %v1093 = vsub.f32 %v43, 2.5
    %v1094 = vsub.f32 %v44, 2.5
    %v1095 = vsub.f32 %v45, 2.5
    %v1096 = vsub.f32 %v46, 2.5
    %v1097 = vsub.f32 %v47, 2.5
    %v1098 = vsub.f32 %v48, 2.5
    %v1099 = vsub.f32 %v49, 2.5
    %v1100 = vsub.f32 %v50, 2.5
    %v1101 = vsub.f32 %v51, 2.5
    %v1102 = vmul.f32 %v1092, -2.0
    %v1103 = vmul.f32 %v1093, -2.0
    %v1104 = vmul.f32 %v1094, -2.0
    %v1105 = vmul.f32 %v1095, -2.0
    %v1106 = vmul.f32 %v1096, -2.0
    %v1107 = vmul.f32 %v1097, -2.0
    %v1108 = vmul.f32 %v1098, -2.0
    %v1109 = vmul.f32 %v1099, -2.0
    %v1110 = vmul.f32 %v1100, -2.0
    %v1111 = vmul.f32 %v1101, -2.0
    %v1112 = vmul.f32 %v1102, %v572
    %v1113 = vmul.f32 %v1103, %v573
    %v1114 = vmul.f32 %v1104, %v574
    %v1115 = vmul.f32 %v1105, %v575
    %v1116 = vmul.f32 %v1106, %v576
    %v1117 = vmul.f32 %v1107, %v577
    %v1118 = vmul.f32 %v1108, %v578
    %v1119 = vmul.f32 %v1109, %v579
    %v1120 = vmul.f32 %v1110, %v580
    %v1121 = vmul.f32 %v1111, %v581
    %v1122 = vadd.f32 %v1082, %v1112
    %v1123 = vadd.f32 %v1083, %v1113
    %v1124 = vadd.f32 %v1084, %v1114
    %v1125 = vadd.f32 %v1085, %v1115
    %v1126 = vadd.f32 %v1086, %v1116
    %v1127 = vadd.f32 %v1087, %v1117
    %v1128 = vadd.f32 %v1088, %v1118
    %v1129 = vadd.f32 %v1089, %v1119
    %v1130 = vadd.f32 %v1090, %v1120
    %v1131 = vadd.f32 %v1091, %v1121
    %v1132 = vmul.f32 %v582, %v642
    %v1133 = vmul.f32 %v583, %v643
    %v1134 = vmul.f32 %v584, %v644
    %v1135 = vmul.f32 %v585, %v645
    %v1136 = vmul.f32 %v586, %v646
    %v1137 = vmul.f32 %v587, %v647
    %v1138 = vmul.f32 %v588, %v648
    %v1139 = vmul.f32 %v589, %v649
    %v1140 = vmul.f32 %v590, %v650
    %v1141 = vmul.f32 %v591, %v651
    %v1142 = vmul.f32 %v682, -1.0
    %v1143 = vmul.f32 %v683, -1.0
    %v1144 = vmul.f32 %v684, -1.0
    %v1145 = vmul.f32 %v685, -1.0
    %v1146 = vmul.f32 %v686, -1.0
    %v1147 = vmul.f32 %v687, -1.0
    %v1148 = vmul.f32 %v688, -1.0
    %v1149 = vmul.f32 %v689, -1.0
    %v1150 = vmul.f32 %v690, -1.0
    %v1151 = vmul.f32 %v691, -1.0
    %v1152 = vmul.f32 %v1142, %v712
    %v1153 = vmul.f32 %v1143, %v713
    %v1154 = vmul.f32 %v1144, %v714
    %v1155 = vmul.f32 %v1145, %v715
    %v1156 = vmul.f32 %v1146, %v716
    %v1157 = vmul.f32 %v1147, %v717
    %v1158 = vmul.f32 %v1148, %v718
    %v1159 = vmul.f32 %v1149, %v719
    %v1160 = vmul.f32 %v1150, %v720
    %v1161 = vmul.f32 %v1151, %v721
    %v1162 = vadd.f32 %v1132, %v1152
    %v1163 = vadd.f32 %v1133, %v1153
    %v1164 = vadd.f32 %v1134, %v1154
    %v1165 = vadd.f32 %v1135, %v1155
    %v1166 = vadd.f32 %v1136, %v1156
    %v1167 = vadd.f32 %v1137, %v1157
    %v1168 = vadd.f32 %v1138, %v1158
    %v1169 = vadd.f32 %v1139, %v1159
    %v1170 = vadd.f32 %v1140, %v1160
    %v1171 = vadd.f32 %v1141, %v1161
    %v1172 = vmul.f32 %v652, %v712
    %v1173 = vmul.f32 %v653, %v713
    %v1174 = vmul.f32 %v654, %v714
    %v1175 = vmul.f32 %v655, %v715
    %v1176 = vmul.f32 %v656, %v716
    %v1177 = vmul.f32 %v657, %v717
    %v1178 = vmul.f32 %v658, %v718
    %v1179 = vmul.f32 %v659, %v719
    %v1180 = vmul.f32 %v660, %v720
    %v1181 = vmul.f32 %v661, %v721
    %v1182 = vmul.f32 %v742, -1.0
    %v1183 = vmul.f32 %v743, -1.0
    %v1184 = vmul.f32 %v744, -1.0
    %v1185 = vmul.f32 %v745, -1.0
    %v1186 = vmul.f32 %v746, -1.0
    %v1187 = vmul.f32 %v747, -1.0
    %v1188 = vmul.f32 %v748, -1.0
    %v1189 = vmul.f32 %v749, -1.0
    %v1190 = vmul.f32 %v750, -1.0
    %v1191 = vmul.f32 %v751, -1.0
    %v1192 = vmul.f32 %v1182, %v772
    %v1193 = vmul.f32 %v1183, %v773
    %v1194 = vmul.f32 %v1184, %v774
    %v1195 = vmul.f32 %v1185, %v775
    %v1196 = vmul.f32 %v1186, %v776
    %v1197 = vmul.f32 %v1187, %v777
    %v1198 = vmul.f32 %v1188, %v778
    %v1199 = vmul.f32 %v1189, %v779
    %v1200 = vmul.f32 %v1190, %v780
    %v1201 = vmul.f32 %v1191, %v781
    %v1202 = vadd.f32 %v1172, %v1192
    %v1203 = vadd.f32 %v1173, %v1193
    %v1204 = vadd.f32 %v1174, %v1194
    %v1205 = vadd.f32 %v1175, %v1195
    %v1206 = vadd.f32 %v1176, %v1196
    %v1207 = vadd.f32 %v1177, %v1197
    %v1208 = vadd.f32 %v1178, %v1198
    %v1209 = vadd.f32 %v1179, %v1199
    %v1210 = vadd.f32 %v1180, %v1200
    %v1211 = vadd.f32 %v1181, %v1201
    %v1212 = vmul.f32 %v612, %v772
    %v1213 = vmul.f32 %v613, %v773
    %v1214 = vmul.f32 %v614, %v774
    %v1215 = vmul.f32 %v615, %v775
    %v1216 = vmul.f32 %v616, %v776
    %v1217 = vmul.f32 %v617, %v777
    %v1218 = vmul.f32 %v618, %v778
    %v1219 = vmul.f32 %v619, %v779
    %v1220 = vmul.f32 %v620, %v780
    %v1221 = vmul.f32 %v621, %v781
    %v1222 = vmul.f32 %v42, -1.0
    %v1223 = vmul.f32 %v43, -1.0
    %v1224 = vmul.f32 %v44, -1.0
    %v1225 = vmul.f32 %v45, -1.0
    %v1226 = vmul.f32 %v46, -1.0
    %v1227 = vmul.f32 %v47, -1.0
    %v1228 = vmul.f32 %v48, -1.0
    %v1229 = vmul.f32 %v49, -1.0
    %v1230 = vmul.f32 %v50, -1.0
    %v1231 = vmul.f32 %v51, -1.0
    %v1232 = vmul.f32 %v1222, %v822
    %v1233 = vmul.f32 %v1223, %v823
    %v1234 = vmul.f32 %v1224, %v824
    %v1235 = vmul.f32 %v1225, %v825
    %v1236 = vmul.f32 %v1226, %v826
    %v1237 = vmul.f32 %v1227, %v827
    %v1238 = vmul.f32 %v1228, %v828
    %v1239 = vmul.f32 %v1229, %v829
    %v1240 = vmul.f32 %v1230, %v830
    %v1241 = vmul.f32 %v1231, %v831
    %v1242 = vadd.f32 %v1212, %v1232
    %v1243 = vadd.f32 %v1213, %v1233
    %v1244 = vadd.f32 %v1214, %v1234
    %v1245 = vadd.f32 %v1215, %v1235
    %v1246 = vadd.f32 %v1216, %v1236
    %v1247 = vadd.f32 %v1217, %v1237
    %v1248 = vadd.f32 %v1218, %v1238
    %v1249 = vadd.f32 %v1219, %v1239
    %v1250 = vadd.f32 %v1220, %v1240
    %v1251 = vadd.f32 %v1221, %v1241
    %v1252 = vmul.f32 %v682, %v822
    %v1253 = vmul.f32 %v683, %v823
    %v1254 = vmul.f32 %v684, %v824
    %v1255 = vmul.f32 %v685, %v825
    %v1256 = vmul.f32 %v686, %v826
    %v1257 = vmul.f32 %v687, %v827
    %v1258 = vmul.f32 %v688, %v828
    %v1259 = vmul.f32 %v689, %v829
    %v1260 = vmul.f32 %v690, %v830
    %v1261 = vmul.f32 %v691, %v831
    %v1262 = vmul.f32 %v852, -1.0
    %v1263 = vmul.f32 %v853, -1.0
    %v1264 = vmul.f32 %v854, -1.0
    %v1265 = vmul.f32 %v855, -1.0
    %v1266 = vmul.f32 %v856, -1.0
    %v1267 = vmul.f32 %v857, -1.0
    %v1268 = vmul.f32 %v858, -1.0
    %v1269 = vmul.f32 %v859, -1.0
    %v1270 = vmul.f32 %v860, -1.0
    %v1271 = vmul.f32 %v861, -1.0
    %v1272 = vmul.f32 %v1262, %v882
    %v1273 = vmul.f32 %v1263, %v883
    %v1274 = vmul.f32 %v1264, %v884
    %v1275 = vmul.f32 %v1265, %v885
    %v1276 = vmul.f32 %v1266, %v886
    %v1277 = vmul.f32 %v1267, %v887
    %v1278 = vmul.f32 %v1268, %v888
    %v1279 = vmul.f32 %v1269, %v889
    %v1280 = vmul.f32 %v1270, %v890
    %v1281 = vmul.f32 %v1271, %v891
    %v1282 = vadd.f32 %v1252, %v1272
    %v1283 = vadd.f32 %v1253, %v1273
    %v1284 = vadd.f32 %v1254, %v1274
    %v1285 = vadd.f32 %v1255, %v1275
    %v1286 = vadd.f32 %v1256, %v1276
    %v1287 = vadd.f32 %v1257, %v1277
    %v1288 = vadd.f32 %v1258, %v1278
    %v1289 = vadd.f32 %v1259, %v1279
    %v1290 = vadd.f32 %v1260, %v1280
    %v1291 = vadd.f32 %v1261, %v1281
    %v1292 = vmul.f32 %v742, %v882
    %v1293 = vmul.f32 %v743, %v883
    %v1294 = vmul.f32 %v744, %v884
    %v1295 = vmul.f32 %v745, %v885
    %v1296 = vmul.f32 %v746, %v886
    %v1297 = vmul.f32 %v747, %v887
    %v1298 = vmul.f32 %v748, %v888
    %v1299 = vmul.f32 %v749, %v889
    %v1300 = vmul.f32 %v750, %v890
    %v1301 = vmul.f32 %v751, %v891
    %v1302 = vmul.f32 %v912, -1.0
    %v1303 = vmul.f32 %v913, -1.0
    %v1304 = vmul.f32 %v914, -1.0
    %v1305 = vmul.f32 %v915, -1.0
    %v1306 = vmul.f32 %v916, -1.0
    %v1307 = vmul.f32 %v917, -1.0
    %v1308 = vmul.f32 %v918, -1.0
    %v1309 = vmul.f32 %v919, -1.0
    %v1310 = vmul.f32 %v920, -1.0
    %v1311 = vmul.f32 %v921, -1.0
    %v1312 = vmul.f32 %v1302, %v942
    %v1313 = vmul.f32 %v1303, %v943
    %v1314 = vmul.f32 %v1304, %v944
    %v1315 = vmul.f32 %v1305, %v945
    %v1316 = vmul.f32 %v1306, %v946
    %v1317 = vmul.f32 %v1307, %v947
    %v1318 = vmul.f32 %v1308, %v948
    %v1319 = vmul.f32 %v1309, %v949
    %v1320 = vmul.f32 %v1310, %v950
    %v1321 = vmul.f32 %v1311, %v951
    %v1322 = vadd.f32 %v1292, %v1312
    %v1323 = vadd.f32 %v1293, %v1313
    %v1324 = vadd.f32 %v1294, %v1314
    %v1325 = vadd.f32 %v1295, %v1315
    %v1326 = vadd.f32 %v1296, %v1316
    %v1327 = vadd.f32 %v1297, %v1317
    %v1328 = vadd.f32 %v1298, %v1318
    %v1329 = vadd.f32 %v1299, %v1319
    %v1330 = vadd.f32 %v1300, %v1320
    %v1331 = vadd.f32 %v1301, %v1321
    %v1332 = vmul.f32 %v42, %v942
    %v1333 = vmul.f32 %v43, %v943
    %v1334 = vmul.f32 %v44, %v944
    %v1335 = vmul.f32 %v45, %v945
    %v1336 = vmul.f32 %v46, %v946
    %v1337 = vmul.f32 %v47, %v947
    %v1338 = vmul.f32 %v48, %v948
    %v1339 = vmul.f32 %v49, %v949
    %v1340 = vmul.f32 %v50, %v950
    %v1341 = vmul.f32 %v51, %v951
    %v1342 = vmul.f32 %v972, -1.0
    %v1343 = vmul.f32 %v973, -1.0
    %v1344 = vmul.f32 %v974, -1.0
    %v1345 = vmul.f32 %v975, -1.0
    %v1346 = vmul.f32 %v976, -1.0
    %v1347 = vmul.f32 %v977, -1.0
    %v1348 = vmul.f32 %v978, -1.0
    %v1349 = vmul.f32 %v979, -1.0
    %v1350 = vmul.f32 %v980, -1.0
    %v1351 = vmul.f32 %v981, -1.0
    %v1352 = vmul.f32 %v1342, %v1002
    %v1353 = vmul.f32 %v1343, %v1003
    %v1354 = vmul.f32 %v1344, %v1004
    %v1355 = vmul.f32 %v1345, %v1005
    %v1356 = vmul.f32 %v1346, %v1006
    %v1357 = vmul.f32 %v1347, %v1007
    %v1358 = vmul.f32 %v1348, %v1008
    %v1359 = vmul.f32 %v1349, %v1009
    %v1360 = vmul.f32 %v1350, %v1010
    %v1361 = vmul.f32 %v1351, %v1011
    %v1362 = vadd.f32 %v1332, %v1352
    %v1363 = vadd.f32 %v1333, %v1353
    %v1364 = vadd.f32 %v1334, %v1354
    %v1365 = vadd.f32 %v1335, %v1355
    %v1366 = vadd.f32 %v1336, %v1356
    %v1367 = vadd.f32 %v1337, %v1357
    %v1368 = vadd.f32 %v1338, %v1358
    %v1369 = vadd.f32 %v1339, %v1359
    %v1370 = vadd.f32 %v1340, %v1360
    %v1371 = vadd.f32 %v1341, %v1361
    %v1372 = vmul.f32 %v852, %v1002
    %v1373 = vmul.f32 %v853, %v1003
    %v1374 = vmul.f32 %v854, %v1004
    %v1375 = vmul.f32 %v855, %v1005
    %v1376 = vmul.f32 %v856, %v1006
    %v1377 = vmul.f32 %v857, %v1007
    %v1378 = vmul.f32 %v858, %v1008
    %v1379 = vmul.f32 %v859, %v1009
    %v1380 = vmul.f32 %v860, %v1010
    %v1381 = vmul.f32 %v861, %v1011
    %v1382 = vmul.f32 %v1032, -1.0
    %v1383 = vmul.f32 %v1033, -1.0
    %v1384 = vmul.f32 %v1034, -1.0
    %v1385 = vmul.f32 %v1035, -1.0
    %v1386 = vmul.f32 %v1036, -1.0
    %v1387 = vmul.f32 %v1037, -1.0
    %v1388 = vmul.f32 %v1038, -1.0
    %v1389 = vmul.f32 %v1039, -1.0
    %v1390 = vmul.f32 %v1040, -1.0
    %v1391 = vmul.f32 %v1041, -1.0
    %v1392 = vmul.f32 %v1382, %v1062
    %v1393 = vmul.f32 %v1383, %v1063
    %v1394 = vmul.f32 %v1384, %v1064
    %v1395 = vmul.f32 %v1385, %v1065
    %v1396 = vmul.f32 %v1386, %v1066
    %v1397 = vmul.f32 %v1387, %v1067
    %v1398 = vmul.f32 %v1388, %v1068
    %v1399 = vmul.f32 %v1389, %v1069
    %v1400 = vmul.f32 %v1390, %v1070
    %v1401 = vmul.f32 %v1391, %v1071
    %v1402 = vadd.f32 %v1372, %v1392
    %v1403 = vadd.f32 %v1373, %v1393
    %v1404 = vadd.f32 %v1374, %v1394
    %v1405 = vadd.f32 %v1375, %v1395
    %v1406 = vadd.f32 %v1376, %v1396
    %v1407 = vadd.f32 %v1377, %v1397
    %v1408 = vadd.f32 %v1378, %v1398
    %v1409 = vadd.f32 %v1379, %v1399
    %v1410 = vadd.f32 %v1380, %v1400
    %v1411 = vadd.f32 %v1381, %v1401
    %v1412 = vmul.f32 %v912, %v1062
    %v1413 = vmul.f32 %v913, %v1063
    %v1414 = vmul.f32 %v914, %v1064
    %v1415 = vmul.f32 %v915, %v1065
    %v1416 = vmul.f32 %v916, %v1066
    %v1417 = vmul.f32 %v917, %v1067
    %v1418 = vmul.f32 %v918, %v1068
    %v1419 = vmul.f32 %v919, %v1069
    %v1420 = vmul.f32 %v920, %v1070
    %v1421 = vmul.f32 %v921, %v1071
    %v1422 = vmul.f32 %v1092, -1.0
    %v1423 = vmul.f32 %v1093, -1.0
    %v1424 = vmul.f32 %v1094, -1.0
    %v1425 = vmul.f32 %v1095, -1.0
    %v1426 = vmul.f32 %v1096, -1.0
    %v1427 = vmul.f32 %v1097, -1.0
    %v1428 = vmul.f32 %v1098, -1.0
    %v1429 = vmul.f32 %v1099, -1.0
    %v1430 = vmul.f32 %v1100, -1.0
    %v1431 = vmul.f32 %v1101, -1.0
    %v1432 = vmul.f32 %v1422, %v1122
    %v1433 = vmul.f32 %v1423, %v1123
    %v1434 = vmul.f32 %v1424, %v1124
    %v1435 = vmul.f32 %v1425, %v1125
    %v1436 = vmul.f32 %v1426, %v1126
    %v1437 = vmul.f32 %v1427, %v1127
    %v1438 = vmul.f32 %v1428, %v1128
    %v1439 = vmul.f32 %v1429, %v1129
    %v1440 = vmul.f32 %v1430, %v1130
    %v1441 = vmul.f32 %v1431, %v1131
    %v1442 = vadd.f32 %v1412, %v1432
    %v1443 = vadd.f32 %v1413, %v1433
    %v1444 = vadd.f32 %v1414, %v1434
    %v1445 = vadd.f32 %v1415, %v1435
    %v1446 = vadd.f32 %v1416, %v1436
    %v1447 = vadd.f32 %v1417, %v1437
    %v1448 = vadd.f32 %v1418, %v1438
    %v1449 = vadd.f32 %v1419, %v1439
    %v1450 = vadd.f32 %v1420, %v1440
    %v1451 = vadd.f32 %v1421, %v1441
    %v1452 = vmul.f32 %v582, 0.6666667
    %v1453 = vmul.f32 %v583, 0.6666667
    %v1454 = vmul.f32 %v584, 0.6666667
    %v1455 = vmul.f32 %v585, 0.6666667
    %v1456 = vmul.f32 %v586, 0.6666667
    %v1457 = vmul.f32 %v587, 0.6666667
    %v1458 = vmul.f32 %v588, 0.6666667
    %v1459 = vmul.f32 %v589, 0.6666667
    %v1460 = vmul.f32 %v590, 0.6666667
    %v1461 = vmul.f32 %v591, 0.6666667
    %v1462 = vmul.f32 %v1452, %v1162
    %v1463 = vmul.f32 %v1453, %v1163
    %v1464 = vmul.f32 %v1454, %v1164
    %v1465 = vmul.f32 %v1455, %v1165
    %v1466 = vmul.f32 %v1456, %v1166
    %v1467 = vmul.f32 %v1457, %v1167
    %v1468 = vmul.f32 %v1458, %v1168
    %v1469 = vmul.f32 %v1459, %v1169
    %v1470 = vmul.f32 %v1460, %v1170
    %v1471 = vmul.f32 %v1461, %v1171
    %v1472 = vmul.f32 %v742, -0.6666667
    %v1473 = vmul.f32 %v743, -0.6666667
    %v1474 = vmul.f32 %v744, -0.6666667
    %v1475 = vmul.f32 %v745, -0.6666667
    %v1476 = vmul.f32 %v746, -0.6666667
    %v1477 = vmul.f32 %v747, -0.6666667
    %v1478 = vmul.f32 %v748, -0.6666667
    %v1479 = vmul.f32 %v749, -0.6666667
    %v1480 = vmul.f32 %v750, -0.6666667
    %v1481 = vmul.f32 %v751, -0.6666667
    %v1482 = vmul.f32 %v1472, %v1202
    %v1483 = vmul.f32 %v1473, %v1203
    %v1484 = vmul.f32 %v1474, %v1204
    %v1485 = vmul.f32 %v1475, %v1205
    %v1486 = vmul.f32 %v1476, %v1206
    %v1487 = vmul.f32 %v1477, %v1207
    %v1488 = vmul.f32 %v1478, %v1208
    %v1489 = vmul.f32 %v1479, %v1209
    %v1490 = vmul.f32 %v1480, %v1210
    %v1491 = vmul.f32 %v1481, %v1211
    %v1492 = vadd.f32 %v1462, %v1482
    %v1493 = vadd.f32 %v1463, %v1483
    %v1494 = vadd.f32 %v1464, %v1484
    %v1495 = vadd.f32 %v1465, %v1485
    %v1496 = vadd.f32 %v1466, %v1486
    %v1497 = vadd.f32 %v1467, %v1487
    %v1498 = vadd.f32 %v1468, %v1488
    %v1499 = vadd.f32 %v1469, %v1489
    %v1500 = vadd.f32 %v1470, %v1490
    %v1501 = vadd.f32 %v1471, %v1491
    %v1502 = vmul.f32 %v652, 0.6666667
    %v1503 = vmul.f32 %v653, 0.6666667
    %v1504 = vmul.f32 %v654, 0.6666667
    %v1505 = vmul.f32 %v655, 0.6666667
    %v1506 = vmul.f32 %v656, 0.6666667
    %v1507 = vmul.f32 %v657, 0.6666667
    %v1508 = vmul.f32 %v658, 0.6666667
    %v1509 = vmul.f32 %v659, 0.6666667
    %v1510 = vmul.f32 %v660, 0.6666667
    %v1511 = vmul.f32 %v661, 0.6666667
    %v1512 = vmul.f32 %v1502, %v1202
    %v1513 = vmul.f32 %v1503, %v1203
    %v1514 = vmul.f32 %v1504, %v1204
    %v1515 = vmul.f32 %v1505, %v1205
    %v1516 = vmul.f32 %v1506, %v1206
    %v1517 = vmul.f32 %v1507, %v1207
    %v1518 = vmul.f32 %v1508, %v1208
    %v1519 = vmul.f32 %v1509, %v1209
    %v1520 = vmul.f32 %v1510, %v1210
    %v1521 = vmul.f32 %v1511, %v1211
    %v1522 = vmul.f32 %v42, -0.6666667
    %v1523 = vmul.f32 %v43, -0.6666667
    %v1524 = vmul.f32 %v44, -0.6666667
    %v1525 = vmul.f32 %v45, -0.6666667
    %v1526 = vmul.f32 %v46, -0.6666667
    %v1527 = vmul.f32 %v47, -0.6666667
    %v1528 = vmul.f32 %v48, -0.6666667
    %v1529 = vmul.f32 %v49, -0.6666667
    %v1530 = vmul.f32 %v50, -0.6666667
    %v1531 = vmul.f32 %v51, -0.6666667
    %v1532 = vmul.f32 %v1522, %v1242
    %v1533 = vmul.f32 %v1523, %v1243
    %v1534 = vmul.f32 %v1524, %v1244
    %v1535 = vmul.f32 %v1525, %v1245
    %v1536 = vmul.f32 %v1526, %v1246
    %v1537 = vmul.f32 %v1527, %v1247
    %v1538 = vmul.f32 %v1528, %v1248
    %v1539 = vmul.f32 %v1529, %v1249
    %v1540 = vmul.f32 %v1530, %v1250
    %v1541 = vmul.f32 %v1531, %v1251
    %v1542 = vadd.f32 %v1512, %v1532
    %v1543 = vadd.f32 %v1513, %v1533
    %v1544 = vadd.f32 %v1514, %v1534
    %v1545 = vadd.f32 %v1515, %v1535
    %v1546 = vadd.f32 %v1516, %v1536
    %v1547 = vadd.f32 %v1517, %v1537
    %v1548 = vadd.f32 %v1518, %v1538
    %v1549 = vadd.f32 %v1519, %v1539
    %v1550 = vadd.f32 %v1520, %v1540
    %v1551 = vadd.f32 %v1521, %v1541
    %v1552 = vmul.f32 %v612, 0.6666667
    %v1553 = vmul.f32 %v613, 0.6666667
    %v1554 = vmul.f32 %v614, 0.6666667
    %v1555 = vmul.f32 %v615, 0.6666667
    %v1556 = vmul.f32 %v616, 0.6666667
    %v1557 = vmul.f32 %v617, 0.6666667
    %v1558 = vmul.f32 %v618, 0.6666667
    %v1559 = vmul.f32 %v619, 0.6666667
    %v1560 = vmul.f32 %v620, 0.6666667
    %v1561 = vmul.f32 %v621, 0.6666667
    %v1562 = vmul.f32 %v1552, %v1242
    %v1563 = vmul.f32 %v1553, %v1243
    %v1564 = vmul.f32 %v1554, %v1244
    %v1565 = vmul.f32 %v1555, %v1245
    %v1566 = vmul.f32 %v1556, %v1246
    %v1567 = vmul.f32 %v1557, %v1247
    %v1568 = vmul.f32 %v1558, %v1248
    %v1569 = vmul.f32 %v1559, %v1249
    %v1570 = vmul.f32 %v1560, %v1250
    %v1571 = vmul.f32 %v1561, %v1251
    %v1572 = vmul.f32 %v852, -0.6666667
    %v1573 = vmul.f32 %v853, -0.6666667
    %v1574 = vmul.f32 %v854, -0.6666667
    %v1575 = vmul.f32 %v855, -0.6666667
    %v1576 = vmul.f32 %v856, -0.6666667
    %v1577 = vmul.f32 %v857, -0.6666667
    %v1578 = vmul.f32 %v858, -0.6666667
    %v1579 = vmul.f32 %v859, -0.6666667
    %v1580 = vmul.f32 %v860, -0.6666667
    %v1581 = vmul.f32 %v861, -0.6666667
    %v1582 = vmul.f32 %v1572, %v1282
    %v1583 = vmul.f32 %v1573, %v1283
    %v1584 = vmul.f32 %v1574, %v1284
    %v1585 = vmul.f32 %v1575, %v1285
    %v1586 = vmul.f32 %v1576, %v1286
    %v1587 = vmul.f32 %v1577, %v1287
    %v1588 = vmul.f32 %v1578, %v1288
    %v1589 = vmul.f32 %v1579, %v1289
    %v1590 = vmul.f32 %v1580, %v1290
    %v1591 = vmul.f32 %v1581, %v1291
    %v1592 = vadd.f32 %v1562, %v1582
    %v1593 = vadd.f32 %v1563, %v1583
    %v1594 = vadd.f32 %v1564, %v1584
    %v1595 = vadd.f32 %v1565, %v1585
    %v1596 = vadd.f32 %v1566, %v1586
    %v1597 = vadd.f32 %v1567, %v1587
    %v1598 = vadd.f32 %v1568, %v1588
    %v1599 = vadd.f32 %v1569, %v1589
    %v1600 = vadd.f32 %v1570, %v1590
    %v1601 = vadd.f32 %v1571, %v1591
    %v1602 = vmul.f32 %v682, 0.6666667
    %v1603 = vmul.f32 %v683, 0.6666667
    %v1604 = vmul.f32 %v684, 0.6666667
    %v1605 = vmul.f32 %v685, 0.6666667
    %v1606 = vmul.f32 %v686, 0.6666667
    %v1607 = vmul.f32 %v687, 0.6666667
    %v1608 = vmul.f32 %v688, 0.6666667
    %v1609 = vmul.f32 %v689, 0.6666667
    %v1610 = vmul.f32 %v690, 0.6666667
    %v1611 = vmul.f32 %v691, 0.6666667
    %v1612 = vmul.f32 %v1602, %v1282
    %v1613 = vmul.f32 %v1603, %v1283
    %v1614 = vmul.f32 %v1604, %v1284
    %v1615 = vmul.f32 %v1605, %v1285
    %v1616 = vmul.f32 %v1606, %v1286
    %v1617 = vmul.f32 %v1607, %v1287
    %v1618 = vmul.f32 %v1608, %v1288
    %v1619 = vmul.f32 %v1609, %v1289
    %v1620 = vmul.f32 %v1610, %v1290
    %v1621 = vmul.f32 %v1611, %v1291
    %v1622 = vmul.f32 %v912, -0.6666667
    %v1623 = vmul.f32 %v913, -0.6666667
    %v1624 = vmul.f32 %v914, -0.6666667
    %v1625 = vmul.f32 %v915, -0.6666667
    %v1626 = vmul.f32 %v916, -0.6666667
    %v1627 = vmul.f32 %v917, -0.6666667
    %v1628 = vmul.f32 %v918, -0.6666667
    %v1629 = vmul.f32 %v919, -0.6666667
    %v1630 = vmul.f32 %v920, -0.6666667
    %v1631 = vmul.f32 %v921, -0.6666667
    %v1632 = vmul.f32 %v1622, %v1322
    %v1633 = vmul.f32 %v1623, %v1323
    %v1634 = vmul.f32 %v1624, %v1324
    %v1635 = vmul.f32 %v1625, %v1325
    %v1636 = vmul.f32 %v1626, %v1326
    %v1637 = vmul.f32 %v1627, %v1327
    %v1638 = vmul.f32 %v1628, %v1328
    %v1639 = vmul.f32 %v1629, %v1329
    %v1640 = vmul.f32 %v1630, %v1330
    %v1641 = vmul.f32 %v1631, %v1331
    %v1642 = vadd.f32 %v1612, %v1632
    %v1643 = vadd.f32 %v1613, %v1633
    %v1644 = vadd.f32 %v1614, %v1634
    %v1645 = vadd.f32 %v1615, %v1635
    %v1646 = vadd.f32 %v1616, %v1636
    %v1647 = vadd.f32 %v1617, %v1637
    %v1648 = vadd.f32 %v1618, %v1638
    %v1649 = vadd.f32 %v1619, %v1639
    %v1650 = vadd.f32 %v1620, %v1640
    %v1651 = vadd.f32 %v1621, %v1641
    %v1652 = vmul.f32 %v742, 0.6666667
    %v1653 = vmul.f32 %v743, 0.6666667
    %v1654 = vmul.f32 %v744, 0.6666667
    %v1655 = vmul.f32 %v745, 0.6666667
    %v1656 = vmul.f32 %v746, 0.6666667
    %v1657 = vmul.f32 %v747, 0.6666667
    %v1658 = vmul.f32 %v748, 0.6666667
    %v1659 = vmul.f32 %v749, 0.6666667
    %v1660 = vmul.f32 %v750, 0.6666667
    %v1661 = vmul.f32 %v751, 0.6666667
    %v1662 = vmul.f32 %v1652, %v1322
    %v1663 = vmul.f32 %v1653, %v1323
    %v1664 = vmul.f32 %v1654, %v1324
    %v1665 = vmul.f32 %v1655, %v1325
    %v1666 = vmul.f32 %v1656, %v1326
    %v1667 = vmul.f32 %v1657, %v1327
    %v1668 = vmul.f32 %v1658, %v1328
    %v1669 = vmul.f32 %v1659, %v1329
    %v1670 = vmul.f32 %v1660, %v1330
    %v1671 = vmul.f32 %v1661, %v1331
    %v1672 = vmul.f32 %v972, -0.6666667
    %v1673 = vmul.f32 %v973, -0.6666667
    %v1674 = vmul.f32 %v974, -0.6666667
    %v1675 = vmul.f32 %v975, -0.6666667
    %v1676 = vmul.f32 %v976, -0.6666667
    %v1677 = vmul.f32 %v977, -0.6666667
    %v1678 = vmul.f32 %v978, -0.6666667
    %v1679 = vmul.f32 %v979, -0.6666667
    %v1680 = vmul.f32 %v980, -0.6666667
    %v1681 = vmul.f32 %v981, -0.6666667
    %v1682 = vmul.f32 %v1672, %v1362
    %v1683 = vmul.f32 %v1673, %v1363
    %v1684 = vmul.f32 %v1674, %v1364
    %v1685 = vmul.f32 %v1675, %v1365
    %v1686 = vmul.f32 %v1676, %v1366
    %v1687 = vmul.f32 %v1677, %v1367
    %v1688 = vmul.f32 %v1678, %v1368
    %v1689 = vmul.f32 %v1679, %v1369
    %v1690 = vmul.f32 %v1680, %v1370
    %v1691 = vmul.f32 %v1681, %v1371
    %v1692 = vadd.f32 %v1662, %v1682
    %v1693 = vadd.f32 %v1663, %v1683
    %v1694 = vadd.f32 %v1664, %v1684
    %v1695 = vadd.f32 %v1665, %v1685
    %v1696 = vadd.f32 %v1666, %v1686
    %v1697 = vadd.f32 %v1667, %v1687
    %v1698 = vadd.f32 %v1668, %v1688
    %v1699 = vadd.f32 %v1669, %v1689
    %v1700 = vadd.f32 %v1670, %v1690
    %v1701 = vadd.f32 %v1671, %v1691
    %v1702 = vmul.f32 %v42, 0.6666667
    %v1703 = vmul.f32 %v43, 0.6666667
    %v1704 = vmul.f32 %v44, 0.6666667
    %v1705 = vmul.f32 %v45, 0.6666667
    %v1706 = vmul.f32 %v46, 0.6666667
    %v1707 = vmul.f32 %v47, 0.6666667
    %v1708 = vmul.f32 %v48, 0.6666667
    %v1709 = vmul.f32 %v49, 0.6666667
    %v1710 = vmul.f32 %v50, 0.6666667
    %v1711 = vmul.f32 %v51, 0.6666667
    %v1712 = vmul.f32 %v1702, %v1362
    %v1713 = vmul.f32 %v1703, %v1363
    %v1714 = vmul.f32 %v1704, %v1364
    %v1715 = vmul.f32 %v1705, %v1365
    %v1716 = vmul.f32 %v1706, %v1366
    %v1717 = vmul.f32 %v1707, %v1367
    %v1718 = vmul.f32 %v1708, %v1368
    %v1719 = vmul.f32 %v1709, %v1369
    %v1720 = vmul.f32 %v1710, %v1370
    %v1721 = vmul.f32 %v1711, %v1371
    %v1722 = vmul.f32 %v1032, -0.6666667
    %v1723 = vmul.f32 %v1033, -0.6666667
    %v1724 = vmul.f32 %v1034, -0.6666667
    %v1725 = vmul.f32 %v1035, -0.6666667
    %v1726 = vmul.f32 %v1036, -0.6666667
    %v1727 = vmul.f32 %v1037, -0.6666667
    %v1728 = vmul.f32 %v1038, -0.6666667
    %v1729 = vmul.f32 %v1039, -0.6666667
    %v1730 = vmul.f32 %v1040, -0.6666667
    %v1731 = vmul.f32 %v1041, -0.6666667
    %v1732 = vmul.f32 %v1722, %v1402
    %v1733 = vmul.f32 %v1723, %v1403
    %v1734 = vmul.f32 %v1724, %v1404
    %v1735 = vmul.f32 %v1725, %v1405
    %v1736 = vmul.f32 %v1726, %v1406
    %v1737 = vmul.f32 %v1727, %v1407
    %v1738 = vmul.f32 %v1728, %v1408
    %v1739 = vmul.f32 %v1729, %v1409
    %v1740 = vmul.f32 %v1730, %v1410
    %v1741 = vmul.f32 %v1731, %v1411
    %v1742 = vadd.f32 %v1712, %v1732
    %v1743 = vadd.f32 %v1713, %v1733
    %v1744 = vadd.f32 %v1714, %v1734
    %v1745 = vadd.f32 %v1715, %v1735
    %v1746 = vadd.f32 %v1716, %v1736
    %v1747 = vadd.f32 %v1717, %v1737
    %v1748 = vadd.f32 %v1718, %v1738
    %v1749 = vadd.f32 %v1719, %v1739
    %v1750 = vadd.f32 %v1720, %v1740
    %v1751 = vadd.f32 %v1721, %v1741
    %v1752 = vmul.f32 %v852, 0.6666667
    %v1753 = vmul.f32 %v853, 0.6666667
    %v1754 = vmul.f32 %v854, 0.6666667
    %v1755 = vmul.f32 %v855, 0.6666667
    %v1756 = vmul.f32 %v856, 0.6666667
    %v1757 = vmul.f32 %v857, 0.6666667
    %v1758 = vmul.f32 %v858, 0.6666667
    %v1759 = vmul.f32 %v859, 0.6666667
    %v1760 = vmul.f32 %v860, 0.6666667
    %v1761 = vmul.f32 %v861, 0.6666667
    %v1762 = vmul.f32 %v1752, %v1402
    %v1763 = vmul.f32 %v1753, %v1403
    %v1764 = vmul.f32 %v1754, %v1404
    %v1765 = vmul.f32 %v1755, %v1405
    %v1766 = vmul.f32 %v1756, %v1406
    %v1767 = vmul.f32 %v1757, %v1407
    %v1768 = vmul.f32 %v1758, %v1408
    %v1769 = vmul.f32 %v1759, %v1409
    %v1770 = vmul.f32 %v1760, %v1410
    %v1771 = vmul.f32 %v1761, %v1411
    %v1772 = vmul.f32 %v1092, -0.6666667
    %v1773 = vmul.f32 %v1093, -0.6666667
    %v1774 = vmul.f32 %v1094, -0.6666667
    %v1775 = vmul.f32 %v1095, -0.6666667
    %v1776 = vmul.f32 %v1096, -0.6666667
    %v1777 = vmul.f32 %v1097, -0.6666667
    %v1778 = vmul.f32 %v1098, -0.6666667
    %v1779 = vmul.f32 %v1099, -0.6666667
    %v1780 = vmul.f32 %v1100, -0.6666667
    %v1781 = vmul.f32 %v1101, -0.6666667
    %v1782 = vmul.f32 %v1772, %v1442
    %v1783 = vmul.f32 %v1773, %v1443
    %v1784 = vmul.f32 %v1774, %v1444
    %v1785 = vmul.f32 %v1775, %v1445
    %v1786 = vmul.f32 %v1776, %v1446
    %v1787 = vmul.f32 %v1777, %v1447
    %v1788 = vmul.f32 %v1778, %v1448
    %v1789 = vmul.f32 %v1779, %v1449
    %v1790 = vmul.f32 %v1780, %v1450
    %v1791 = vmul.f32 %v1781, %v1451
    %v1792 = vadd.f32 %v1762, %v1782
    %v1793 = vadd.f32 %v1763, %v1783
    %v1794 = vadd.f32 %v1764, %v1784
    %v1795 = vadd.f32 %v1765, %v1785
    %v1796 = vadd.f32 %v1766, %v1786
    %v1797 = vadd.f32 %v1767, %v1787
    %v1798 = vadd.f32 %v1768, %v1788
    %v1799 = vadd.f32 %v1769, %v1789
    %v1800 = vadd.f32 %v1770, %v1790
    %v1801 = vadd.f32 %v1771, %v1791
    %1802 = vst [vmem:[#allocation2 + $0xa0] sm:$0xff] %v1492
    %1803 = vst [vmem:[#allocation2 + $0xa8] sm:$0xff] %v1493
    %1804 = vst [vmem:[#allocation2 + $0xc0] sm:$0xff] %v1494
    %1805 = vst [vmem:[#allocation2 + $0xc8] sm:$0xff] %v1495
    %1806 = vst [vmem:[#allocation2 + $0xe0] sm:$0xff] %v1496
    %1807 = vst [vmem:[#allocation2 + $0xe8] sm:$0xff] %v1497
    %1808 = vst [vmem:[#allocation2 + $0x100] sm:$0xff] %v1498
    %1809 = vst [vmem:[#allocation2 + $0x108] sm:$0xff] %v1499
    %1810 = vst [vmem:[#allocation2 + $0x120] sm:$0xff] %v1500
    %1811 = vst [vmem:[#allocation2 + $0x128] sm:$0xff] %v1501
    %1812 = vst [vmem:[#allocation2 + $0x140] sm:$0xff] %v1542
    %1813 = vst [vmem:[#allocation2 + $0x148] sm:$0xff] %v1543
    %1814 = vst [vmem:[#allocation2 + $0x160] sm:$0xff] %v1544
    %1815 = vst [vmem:[#allocation2 + $0x168] sm:$0xff] %v1545
    %1816 = vst [vmem:[#allocation2 + $0x180] sm:$0xff] %v1546
    %1817 = vst [vmem:[#allocation2 + $0x188] sm:$0xff] %v1547
    %1818 = vst [vmem:[#allocation2 + $0x1a0] sm:$0xff] %v1548
    %1819 = vst [vmem:[#allocation2 + $0x1a8] sm:$0xff] %v1549
    %1820 = vst [vmem:[#allocation2 + $0x1c0] sm:$0xff] %v1550
    %1821 = vst [vmem:[#allocation2 + $0x1c8] sm:$0xff] %v1551
    %1822 = vst [vmem:[#allocation2 + $0x1e0] sm:$0xff] %v1592
    %1823 = vst [vmem:[#allocation2 + $0x1e8] sm:$0xff] %v1593
    %1824 = vst [vmem:[#allocation2 + $0x200] sm:$0xff] %v1594
    %1825 = vst [vmem:[#allocation2 + $0x208] sm:$0xff] %v1595
    %1826 = vst [vmem:[#allocation2 + $0x220] sm:$0xff] %v1596
    %1827 = vst [vmem:[#allocation2 + $0x228] sm:$0xff] %v1597
    %1828 = vst [vmem:[#allocation2 + $0x240] sm:$0xff] %v1598
    %1829 = vst [vmem:[#allocation2 + $0x248] sm:$0xff] %v1599
    %1830 = vst [vmem:[#allocation2 + $0x260] sm:$0xff] %v1600
    %1831 = vst [vmem:[#allocation2 + $0x268] sm:$0xff] %v1601
    %1832 = vst [vmem:[#allocation2 + $0x280] sm:$0xff] %v1642
    %1833 = vst [vmem:[#allocation2 + $0x288] sm:$0xff] %v1643
    %1834 = vst [vmem:[#allocation2 + $0x2a0] sm:$0xff] %v1644
    %1835 = vst [vmem:[#allocation2 + $0x2a8] sm:$0xff] %v1645
    %1836 = vst [vmem:[#allocation2 + $0x2c0] sm:$0xff] %v1646
    %1837 = vst [vmem:[#allocation2 + $0x2c8] sm:$0xff] %v1647
    %1838 = vst [vmem:[#allocation2 + $0x2e0] sm:$0xff] %v1648
    %1839 = vst [vmem:[#allocation2 + $0x2e8] sm:$0xff] %v1649
    %1840 = vst [vmem:[#allocation2 + $0x300] sm:$0xff] %v1650
    %1841 = vst [vmem:[#allocation2 + $0x308] sm:$0xff] %v1651
    %1842 = vst [vmem:[#allocation2 + $0x320] sm:$0xff] %v1692
    %1843 = vst [vmem:[#allocation2 + $0x328] sm:$0xff] %v1693
    %1844 = vst [vmem:[#allocation2 + $0x340] sm:$0xff] %v1694
    %1845 = vst [vmem:[#allocation2 + $0x348] sm:$0xff] %v1695
    %1846 = vst [vmem:[#allocation2 + $0x360] sm:$0xff] %v1696
    %1847 = vst [vmem:[#allocation2 + $0x368] sm:$0xff] %v1697
    %1848 = vst [vmem:[#allocation2 + $0x380] sm:$0xff] %v1698
    %1849 = vst [vmem:[#allocation2 + $0x388] sm:$0xff] %v1699
    %1850 = vst [vmem:[#allocation2 + $0x3a0] sm:$0xff] %v1700
    %1851 = vst [vmem:[#allocation2 + $0x3a8] sm:$0xff] %v1701
    %1852 = vst [vmem:[#allocation2 + $0x3c0] sm:$0xff] %v1742
    %1853 = vst [vmem:[#allocation2 + $0x3c8] sm:$0xff] %v1743
    %1854 = vst [vmem:[#allocation2 + $0x3e0] sm:$0xff] %v1744
    %1855 = vst [vmem:[#allocation2 + $0x3e8] sm:$0xff] %v1745
    %1856 = vst [vmem:[#allocation2 + $0x400] sm:$0xff] %v1746
    %1857 = vst [vmem:[#allocation2 + $0x408] sm:$0xff] %v1747
    %1858 = vst [vmem:[#allocation2 + $0x420] sm:$0xff] %v1748
    %1859 = vst [vmem:[#allocation2 + $0x428] sm:$0xff] %v1749
    %1860 = vst [vmem:[#allocation2 + $0x440] sm:$0xff] %v1750
    %1861 = vst [vmem:[#allocation2 + $0x448] sm:$0xff] %v1751
    %1862 = vst [vmem:[#allocation2 + $0x460] sm:$0xff] %v1792
    %1863 = vst [vmem:[#allocation2 + $0x468] sm:$0xff] %v1793
    %1864 = vst [vmem:[#allocation2 + $0x480] sm:$0xff] %v1794
    %1865 = vst [vmem:[#allocation2 + $0x488] sm:$0xff] %v1795
    %1866 = vst [vmem:[#allocation2 + $0x4a0] sm:$0xff] %v1796
    %1867 = vst [vmem:[#allocation2 + $0x4a8] sm:$0xff] %v1797
    %1868 = vst [vmem:[#allocation2 + $0x4c0] sm:$0xff] %v1798
    %1869 = vst [vmem:[#allocation2 + $0x4c8] sm:$0xff] %v1799
    %1870 = vst [vmem:[#allocation2 + $0x4e0] sm:$0xff] %v1800
    %1871 = vst [vmem:[#allocation2 + $0x4e8] sm:$0xff] %v1801
    %v1872 = vld [vmem:[#allocation3 + $0x10] sm:$0xff]
    %v1873 = vld [vmem:[#allocation3 + $0x18] sm:$0xff]
    %v1874 = vld [vmem:[#allocation3 + $0x30] sm:$0xff]
    %v1875 = vld [vmem:[#allocation3 + $0x38] sm:$0xff]
    %v1876 = vld [vmem:[#allocation3 + $0x50] sm:$0xff]
    %v1877 = vld [vmem:[#allocation3 + $0x58] sm:$0xff]
    %v1878 = vld [vmem:[#allocation3 + $0x70] sm:$0xff]
    %v1879 = vld [vmem:[#allocation3 + $0x78] sm:$0xff]
    %v1880 = vld [vmem:[#allocation3 + $0x90] sm:$0xff]
    %v1881 = vld [vmem:[#allocation3 + $0x98] sm:$0xff]
    %v1882 = vxor.u32 %v1872, 2147483648
    %v1883 = vxor.u32 %v1873, 2147483648
    %v1884 = vxor.u32 %v1874, 2147483648
    %v1885 = vxor.u32 %v1875, 2147483648
    %v1886 = vxor.u32 %v1876, 2147483648
    %v1887 = vxor.u32 %v1877, 2147483648
    %v1888 = vxor.u32 %v1878, 2147483648
    %v1889 = vxor.u32 %v1879, 2147483648
    %v1890 = vxor.u32 %v1880, 2147483648
    %v1891 = vxor.u32 %v1881, 2147483648
    %v1892 = vmul.f32 %v1882, 1.442695
    %v1893 = vpow.pop %v1892
    %v1894 = vmul.f32 %v1883, 1.442695
    %v1895 = vpow.pop %v1894
    %v1896 = vmul.f32 %v1884, 1.442695
    %v1897 = vpow.pop %v1896
    %v1898 = vmul.f32 %v1885, 1.442695
    %v1899 = vpow.pop %v1898
    %v1900 = vmul.f32 %v1886, 1.442695
    %v1901 = vpow.pop %v1900
    %v1902 = vmul.f32 %v1887, 1.442695
    %v1903 = vpow.pop %v1902
    %v1904 = vmul.f32 %v1888, 1.442695
    %v1905 = vpow.pop %v1904
    %v1906 = vmul.f32 %v1889, 1.442695
    %v1907 = vpow.pop %v1906
    %v1908 = vmul.f32 %v1890, 1.442695
    %v1909 = vpow.pop %v1908
    %v1910 = vmul.f32 %v1891, 1.442695
    %v1911 = vpow.pop %v1910
    %v1912 = vadd.f32 %v1893, 1.0
    %v1913 = vadd.f32 %v1895, 1.0
    %v1914 = vadd.f32 %v1897, 1.0
    %v1915 = vadd.f32 %v1899, 1.0
    %v1916 = vadd.f32 %v1901, 1.0
    %v1917 = vadd.f32 %v1903, 1.0
    %v1918 = vadd.f32 %v1905, 1.0
    %v1919 = vadd.f32 %v1907, 1.0
    %v1920 = vadd.f32 %v1909, 1.0
    %v1921 = vadd.f32 %v1911, 1.0
    %v1922 = vrcp.pop %v1912
    %v1923 = vmul.f32 %v1912, %v1922
    %v1924 = vsub.f32 1.0, %v1923
    %v1925 = vmul.f32 %v1922, %v1924
    %v1926 = vadd.f32 %v1922, %v1925
    %vm1927 = vweird.f32 %v1912
    %vm1928 = vweird.f32 %v1922
    %vm1929 = vmor %vm1927, %vm1928
    %v1930 = vsel %vm1929, %v1922, %v1926
    %v1931 = vand.u32 2147483647, %v1912
    %vm1932 = vcmp.eq.f32.partialorder %v1931, 8.507059e+37
    %v1933 = vand.u32 %v1912, 2147483648
    %v1934 = vor.u32 1.1754944e-38, %v1933
    %v1935 = vsel %vm1932, %v1934, %v1930
    %v1936 = vmul.f32 1.0, %v1935
    %v1937 = vrcp.pop %v1913
    %v1938 = vmul.f32 %v1913, %v1937
    %v1939 = vsub.f32 1.0, %v1938
    %v1940 = vmul.f32 %v1937, %v1939
    %v1941 = vadd.f32 %v1937, %v1940
    %vm1942 = vweird.f32 %v1913
    %vm1943 = vweird.f32 %v1937
    %vm1944 = vmor %vm1942, %vm1943
    %v1945 = vsel %vm1944, %v1937, %v1941
    %v1946 = vand.u32 2147483647, %v1913
    %vm1947 = vcmp.eq.f32.partialorder %v1946, 8.507059e+37
    %v1948 = vand.u32 %v1913, 2147483648
    %v1949 = vor.u32 1.1754944e-38, %v1948
    %v1950 = vsel %vm1947, %v1949, %v1945
    %v1951 = vmul.f32 1.0, %v1950
    %v1952 = vrcp.pop %v1914
    %v1953 = vmul.f32 %v1914, %v1952
    %v1954 = vsub.f32 1.0, %v1953
    %v1955 = vmul.f32 %v1952, %v1954
    %v1956 = vadd.f32 %v1952, %v1955
    %vm1957 = vweird.f32 %v1914
    %vm1958 = vweird.f32 %v1952
    %vm1959 = vmor %vm1957, %vm1958
    %v1960 = vsel %vm1959, %v1952, %v1956
    %v1961 = vand.u32 2147483647, %v1914
    %vm1962 = vcmp.eq.f32.partialorder %v1961, 8.507059e+37
    %v1963 = vand.u32 %v1914, 2147483648
    %v1964 = vor.u32 1.1754944e-38, %v1963
    %v1965 = vsel %vm1962, %v1964, %v1960
    %v1966 = vmul.f32 1.0, %v1965
    %v1967 = vrcp.pop %v1915
    %v1968 = vmul.f32 %v1915, %v1967
    %v1969 = vsub.f32 1.0, %v1968
    %v1970 = vmul.f32 %v1967, %v1969
    %v1971 = vadd.f32 %v1967, %v1970
    %vm1972 = vweird.f32 %v1915
    %vm1973 = vweird.f32 %v1967
    %vm1974 = vmor %vm1972, %vm1973
    %v1975 = vsel %vm1974, %v1967, %v1971
    %v1976 = vand.u32 2147483647, %v1915
    %vm1977 = vcmp.eq.f32.partialorder %v1976, 8.507059e+37
    %v1978 = vand.u32 %v1915, 2147483648
    %v1979 = vor.u32 1.1754944e-38, %v1978
    %v1980 = vsel %vm1977, %v1979, %v1975
    %v1981 = vmul.f32 1.0, %v1980
    %v1982 = vrcp.pop %v1916
    %v1983 = vmul.f32 %v1916, %v1982
    %v1984 = vsub.f32 1.0, %v1983
    %v1985 = vmul.f32 %v1982, %v1984
    %v1986 = vadd.f32 %v1982, %v1985
    %vm1987 = vweird.f32 %v1916
    %vm1988 = vweird.f32 %v1982
    %vm1989 = vmor %vm1987, %vm1988
    %v1990 = vsel %vm1989, %v1982, %v1986
    %v1991 = vand.u32 2147483647, %v1916
    %vm1992 = vcmp.eq.f32.partialorder %v1991, 8.507059e+37
    %v1993 = vand.u32 %v1916, 2147483648
    %v1994 = vor.u32 1.1754944e-38, %v1993
    %v1995 = vsel %vm1992, %v1994, %v1990
    %v1996 = vmul.f32 1.0, %v1995
    %v1997 = vrcp.pop %v1917
    %v1998 = vmul.f32 %v1917, %v1997
    %v1999 = vsub.f32 1.0, %v1998
    %v2000 = vmul.f32 %v1997, %v1999
    %v2001 = vadd.f32 %v1997, %v2000
    %vm2002 = vweird.f32 %v1917
    %vm2003 = vweird.f32 %v1997
    %vm2004 = vmor %vm2002, %vm2003
    %v2005 = vsel %vm2004, %v1997, %v2001
    %v2006 = vand.u32 2147483647, %v1917
    %vm2007 = vcmp.eq.f32.partialorder %v2006, 8.507059e+37
    %v2008 = vand.u32 %v1917, 2147483648
    %v2009 = vor.u32 1.1754944e-38, %v2008
    %v2010 = vsel %vm2007, %v2009, %v2005
    %v2011 = vmul.f32 1.0, %v2010
    %v2012 = vrcp.pop %v1918
    %v2013 = vmul.f32 %v1918, %v2012
    %v2014 = vsub.f32 1.0, %v2013
    %v2015 = vmul.f32 %v2012, %v2014
    %v2016 = vadd.f32 %v2012, %v2015
    %vm2017 = vweird.f32 %v1918
    %vm2018 = vweird.f32 %v2012
    %vm2019 = vmor %vm2017, %vm2018
    %v2020 = vsel %vm2019, %v2012, %v2016
    %v2021 = vand.u32 2147483647, %v1918
    %vm2022 = vcmp.eq.f32.partialorder %v2021, 8.507059e+37
    %v2023 = vand.u32 %v1918, 2147483648
    %v2024 = vor.u32 1.1754944e-38, %v2023
    %v2025 = vsel %vm2022, %v2024, %v2020
    %v2026 = vmul.f32 1.0, %v2025
    %v2027 = vrcp.pop %v1919
    %v2028 = vmul.f32 %v1919, %v2027
    %v2029 = vsub.f32 1.0, %v2028
    %v2030 = vmul.f32 %v2027, %v2029
    %v2031 = vadd.f32 %v2027, %v2030
    %vm2032 = vweird.f32 %v1919
    %vm2033 = vweird.f32 %v2027
    %vm2034 = vmor %vm2032, %vm2033
    %v2035 = vsel %vm2034, %v2027, %v2031
    %v2036 = vand.u32 2147483647, %v1919
    %vm2037 = vcmp.eq.f32.partialorder %v2036, 8.507059e+37
    %v2038 = vand.u32 %v1919, 2147483648
    %v2039 = vor.u32 1.1754944e-38, %v2038
    %v2040 = vsel %vm2037, %v2039, %v2035
    %v2041 = vmul.f32 1.0, %v2040
    %v2042 = vrcp.pop %v1920
    %v2043 = vmul.f32 %v1920, %v2042
    %v2044 = vsub.f32 1.0, %v2043
    %v2045 = vmul.f32 %v2042, %v2044
    %v2046 = vadd.f32 %v2042, %v2045
    %vm2047 = vweird.f32 %v1920
    %vm2048 = vweird.f32 %v2042
    %vm2049 = vmor %vm2047, %vm2048
    %v2050 = vsel %vm2049, %v2042, %v2046
    %v2051 = vand.u32 2147483647, %v1920
    %vm2052 = vcmp.eq.f32.partialorder %v2051, 8.507059e+37
    %v2053 = vand.u32 %v1920, 2147483648
    %v2054 = vor.u32 1.1754944e-38, %v2053
    %v2055 = vsel %vm2052, %v2054, %v2050
    %v2056 = vmul.f32 1.0, %v2055
    %v2057 = vrcp.pop %v1921
    %v2058 = vmul.f32 %v1921, %v2057
    %v2059 = vsub.f32 1.0, %v2058
    %v2060 = vmul.f32 %v2057, %v2059
    %v2061 = vadd.f32 %v2057, %v2060
    %vm2062 = vweird.f32 %v1921
    %vm2063 = vweird.f32 %v2057
    %vm2064 = vmor %vm2062, %vm2063
    %v2065 = vsel %vm2064, %v2057, %v2061
    %v2066 = vand.u32 2147483647, %v1921
    %vm2067 = vcmp.eq.f32.partialorder %v2066, 8.507059e+37
    %v2068 = vand.u32 %v1921, 2147483648
    %v2069 = vor.u32 1.1754944e-38, %v2068
    %v2070 = vsel %vm2067, %v2069, %v2065
    %v2071 = vmul.f32 1.0, %v2070
    %v2072 = vmul.f32 %v1872, %v1936
    %v2073 = vmul.f32 %v1873, %v1951
    %v2074 = vmul.f32 %v1874, %v1966
    %v2075 = vmul.f32 %v1875, %v1981
    %v2076 = vmul.f32 %v1876, %v1996
    %v2077 = vmul.f32 %v1877, %v2011
    %v2078 = vmul.f32 %v1878, %v2026
    %v2079 = vmul.f32 %v1879, %v2041
    %v2080 = vmul.f32 %v1880, %v2056
    %v2081 = vmul.f32 %v1881, %v2071
    %2082 = vst [vmem:[#allocation2 + $0x10] sm:$0xff] %v2072
    %2083 = vst [vmem:[#allocation2 + $0x18] sm:$0xff] %v2073
    %2084 = vst [vmem:[#allocation2 + $0x30] sm:$0xff] %v2074
    %2085 = vst [vmem:[#allocation2 + $0x38] sm:$0xff] %v2075
    %2086 = vst [vmem:[#allocation2 + $0x50] sm:$0xff] %v2076
    %2087 = vst [vmem:[#allocation2 + $0x58] sm:$0xff] %v2077
    %2088 = vst [vmem:[#allocation2 + $0x70] sm:$0xff] %v2078
    %2089 = vst [vmem:[#allocation2 + $0x78] sm:$0xff] %v2079
    %2090 = vst [vmem:[#allocation2 + $0x90] sm:$0xff] %v2080
    %2091 = vst [vmem:[#allocation2 + $0x98] sm:$0xff] %v2081
    %vm2092 = vcmp.ge.f32.partialorder %v1872, -2.5
    %vm2093 = vcmp.ge.f32.partialorder %v1873, -2.5
    %vm2094 = vcmp.ge.f32.partialorder %v1874, -2.5
    %vm2095 = vcmp.ge.f32.partialorder %v1875, -2.5
    %vm2096 = vcmp.ge.f32.partialorder %v1876, -2.5
    %vm2097 = vcmp.ge.f32.partialorder %v1877, -2.5
    %vm2098 = vcmp.ge.f32.partialorder %v1878, -2.5
    %vm2099 = vcmp.ge.f32.partialorder %v1879, -2.5
    %vm2100 = vcmp.ge.f32.partialorder %v1880, -2.5
    %vm2101 = vcmp.ge.f32.partialorder %v1881, -2.5
    %v2102 = vsel %vm2092, 1.0, 0.0
    %v2103 = vsel %vm2093, 1.0, 0.0
    %v2104 = vsel %vm2094, 1.0, 0.0
    %v2105 = vsel %vm2095, 1.0, 0.0
    %v2106 = vsel %vm2096, 1.0, 0.0
    %v2107 = vsel %vm2097, 1.0, 0.0
    %v2108 = vsel %vm2098, 1.0, 0.0
    %v2109 = vsel %vm2099, 1.0, 0.0
    %v2110 = vsel %vm2100, 1.0, 0.0
    %v2111 = vsel %vm2101, 1.0, 0.0
    %vm2112 = vcmp.ge.f32.partialorder %v1872, -2.0
    %vm2113 = vcmp.ge.f32.partialorder %v1873, -2.0
    %vm2114 = vcmp.ge.f32.partialorder %v1874, -2.0
    %vm2115 = vcmp.ge.f32.partialorder %v1875, -2.0
    %vm2116 = vcmp.ge.f32.partialorder %v1876, -2.0
    %vm2117 = vcmp.ge.f32.partialorder %v1877, -2.0
    %vm2118 = vcmp.ge.f32.partialorder %v1878, -2.0
    %vm2119 = vcmp.ge.f32.partialorder %v1879, -2.0
    %vm2120 = vcmp.ge.f32.partialorder %v1880, -2.0
    %vm2121 = vcmp.ge.f32.partialorder %v1881, -2.0
    %v2122 = vsel %vm2112, 1.0, 0.0
    %v2123 = vsel %vm2113, 1.0, 0.0
    %v2124 = vsel %vm2114, 1.0, 0.0
    %v2125 = vsel %vm2115, 1.0, 0.0
    %v2126 = vsel %vm2116, 1.0, 0.0
    %v2127 = vsel %vm2117, 1.0, 0.0
    %v2128 = vsel %vm2118, 1.0, 0.0
    %v2129 = vsel %vm2119, 1.0, 0.0
    %v2130 = vsel %vm2120, 1.0, 0.0
    %v2131 = vsel %vm2121, 1.0, 0.0
    %vm2132 = vcmp.ge.f32.partialorder %v1872, -1.5
    %vm2133 = vcmp.ge.f32.partialorder %v1873, -1.5
    %vm2134 = vcmp.ge.f32.partialorder %v1874, -1.5
    %vm2135 = vcmp.ge.f32.partialorder %v1875, -1.5
    %vm2136 = vcmp.ge.f32.partialorder %v1876, -1.5
    %vm2137 = vcmp.ge.f32.partialorder %v1877, -1.5
    %vm2138 = vcmp.ge.f32.partialorder %v1878, -1.5
    %vm2139 = vcmp.ge.f32.partialorder %v1879, -1.5
    %vm2140 = vcmp.ge.f32.partialorder %v1880, -1.5
    %vm2141 = vcmp.ge.f32.partialorder %v1881, -1.5
    %v2142 = vsel %vm2132, 1.0, 0.0
    %v2143 = vsel %vm2133, 1.0, 0.0
    %v2144 = vsel %vm2134, 1.0, 0.0
    %v2145 = vsel %vm2135, 1.0, 0.0
    %v2146 = vsel %vm2136, 1.0, 0.0
    %v2147 = vsel %vm2137, 1.0, 0.0
    %v2148 = vsel %vm2138, 1.0, 0.0
    %v2149 = vsel %vm2139, 1.0, 0.0
    %v2150 = vsel %vm2140, 1.0, 0.0
    %v2151 = vsel %vm2141, 1.0, 0.0
    %vm2152 = vcmp.ge.f32.partialorder %v1872, -1.0
    %vm2153 = vcmp.ge.f32.partialorder %v1873, -1.0
    %vm2154 = vcmp.ge.f32.partialorder %v1874, -1.0
    %vm2155 = vcmp.ge.f32.partialorder %v1875, -1.0
    %vm2156 = vcmp.ge.f32.partialorder %v1876, -1.0
    %vm2157 = vcmp.ge.f32.partialorder %v1877, -1.0
    %vm2158 = vcmp.ge.f32.partialorder %v1878, -1.0
    %vm2159 = vcmp.ge.f32.partialorder %v1879, -1.0
    %vm2160 = vcmp.ge.f32.partialorder %v1880, -1.0
    %vm2161 = vcmp.ge.f32.partialorder %v1881, -1.0
    %v2162 = vsel %vm2152, 1.0, 0.0
    %v2163 = vsel %vm2153, 1.0, 0.0
    %v2164 = vsel %vm2154, 1.0, 0.0
    %v2165 = vsel %vm2155, 1.0, 0.0
    %v2166 = vsel %vm2156, 1.0, 0.0
    %v2167 = vsel %vm2157, 1.0, 0.0
    %v2168 = vsel %vm2158, 1.0, 0.0
    %v2169 = vsel %vm2159, 1.0, 0.0
    %v2170 = vsel %vm2160, 1.0, 0.0
    %v2171 = vsel %vm2161, 1.0, 0.0
    %vm2172 = vcmp.ge.f32.partialorder %v1872, -0.5
    %vm2173 = vcmp.ge.f32.partialorder %v1873, -0.5
    %vm2174 = vcmp.ge.f32.partialorder %v1874, -0.5
    %vm2175 = vcmp.ge.f32.partialorder %v1875, -0.5
    %vm2176 = vcmp.ge.f32.partialorder %v1876, -0.5
    %vm2177 = vcmp.ge.f32.partialorder %v1877, -0.5
    %vm2178 = vcmp.ge.f32.partialorder %v1878, -0.5
    %vm2179 = vcmp.ge.f32.partialorder %v1879, -0.5
    %vm2180 = vcmp.ge.f32.partialorder %v1880, -0.5
    %vm2181 = vcmp.ge.f32.partialorder %v1881, -0.5
    %v2182 = vsel %vm2172, 1.0, 0.0
    %v2183 = vsel %vm2173, 1.0, 0.0
    %v2184 = vsel %vm2174, 1.0, 0.0
    %v2185 = vsel %vm2175, 1.0, 0.0
    %v2186 = vsel %vm2176, 1.0, 0.0
    %v2187 = vsel %vm2177, 1.0, 0.0
    %v2188 = vsel %vm2178, 1.0, 0.0
    %v2189 = vsel %vm2179, 1.0, 0.0
    %v2190 = vsel %vm2180, 1.0, 0.0
    %v2191 = vsel %vm2181, 1.0, 0.0
    %vm2192 = vcmp.ge.f32.partialorder %v1872, 0.0
    %vm2193 = vcmp.ge.f32.partialorder %v1873, 0.0
    %vm2194 = vcmp.ge.f32.partialorder %v1874, 0.0
    %vm2195 = vcmp.ge.f32.partialorder %v1875, 0.0
    %vm2196 = vcmp.ge.f32.partialorder %v1876, 0.0
    %vm2197 = vcmp.ge.f32.partialorder %v1877, 0.0
    %vm2198 = vcmp.ge.f32.partialorder %v1878, 0.0
    %vm2199 = vcmp.ge.f32.partialorder %v1879, 0.0
    %vm2200 = vcmp.ge.f32.partialorder %v1880, 0.0
    %vm2201 = vcmp.ge.f32.partialorder %v1881, 0.0
    %v2202 = vsel %vm2192, 1.0, 0.0
    %v2203 = vsel %vm2193, 1.0, 0.0
    %v2204 = vsel %vm2194, 1.0, 0.0
    %v2205 = vsel %vm2195, 1.0, 0.0
    %v2206 = vsel %vm2196, 1.0, 0.0
    %v2207 = vsel %vm2197, 1.0, 0.0
    %v2208 = vsel %vm2198, 1.0, 0.0
    %v2209 = vsel %vm2199, 1.0, 0.0
    %v2210 = vsel %vm2200, 1.0, 0.0
    %v2211 = vsel %vm2201, 1.0, 0.0
    %vm2212 = vcmp.ge.f32.partialorder %v1872, 0.5
    %vm2213 = vcmp.ge.f32.partialorder %v1873, 0.5
    %vm2214 = vcmp.ge.f32.partialorder %v1874, 0.5
    %vm2215 = vcmp.ge.f32.partialorder %v1875, 0.5
    %vm2216 = vcmp.ge.f32.partialorder %v1876, 0.5
    %vm2217 = vcmp.ge.f32.partialorder %v1877, 0.5
    %vm2218 = vcmp.ge.f32.partialorder %v1878, 0.5
    %vm2219 = vcmp.ge.f32.partialorder %v1879, 0.5
    %vm2220 = vcmp.ge.f32.partialorder %v1880, 0.5
    %vm2221 = vcmp.ge.f32.partialorder %v1881, 0.5
    %v2222 = vsel %vm2212, 1.0, 0.0
    %v2223 = vsel %vm2213, 1.0, 0.0
    %v2224 = vsel %vm2214, 1.0, 0.0
    %v2225 = vsel %vm2215, 1.0, 0.0
    %v2226 = vsel %vm2216, 1.0, 0.0
    %v2227 = vsel %vm2217, 1.0, 0.0
    %v2228 = vsel %vm2218, 1.0, 0.0
    %v2229 = vsel %vm2219, 1.0, 0.0
    %v2230 = vsel %vm2220, 1.0, 0.0
    %v2231 = vsel %vm2221, 1.0, 0.0
    %vm2232 = vcmp.ge.f32.partialorder %v1872, 1.0
    %vm2233 = vcmp.ge.f32.partialorder %v1873, 1.0
    %vm2234 = vcmp.ge.f32.partialorder %v1874, 1.0
    %vm2235 = vcmp.ge.f32.partialorder %v1875, 1.0
    %vm2236 = vcmp.ge.f32.partialorder %v1876, 1.0
    %vm2237 = vcmp.ge.f32.partialorder %v1877, 1.0
    %vm2238 = vcmp.ge.f32.partialorder %v1878, 1.0
    %vm2239 = vcmp.ge.f32.partialorder %v1879, 1.0
    %vm2240 = vcmp.ge.f32.partialorder %v1880, 1.0
    %vm2241 = vcmp.ge.f32.partialorder %v1881, 1.0
    %v2242 = vsel %vm2232, 1.0, 0.0
    %v2243 = vsel %vm2233, 1.0, 0.0
    %v2244 = vsel %vm2234, 1.0, 0.0
    %v2245 = vsel %vm2235, 1.0, 0.0
    %v2246 = vsel %vm2236, 1.0, 0.0
    %v2247 = vsel %vm2237, 1.0, 0.0
    %v2248 = vsel %vm2238, 1.0, 0.0
    %v2249 = vsel %vm2239, 1.0, 0.0
    %v2250 = vsel %vm2240, 1.0, 0.0
    %v2251 = vsel %vm2241, 1.0, 0.0
    %vm2252 = vcmp.ge.f32.partialorder %v1872, 1.5
    %vm2253 = vcmp.ge.f32.partialorder %v1873, 1.5
    %vm2254 = vcmp.ge.f32.partialorder %v1874, 1.5
    %vm2255 = vcmp.ge.f32.partialorder %v1875, 1.5
    %vm2256 = vcmp.ge.f32.partialorder %v1876, 1.5
    %vm2257 = vcmp.ge.f32.partialorder %v1877, 1.5
    %vm2258 = vcmp.ge.f32.partialorder %v1878, 1.5
    %vm2259 = vcmp.ge.f32.partialorder %v1879, 1.5
    %vm2260 = vcmp.ge.f32.partialorder %v1880, 1.5
    %vm2261 = vcmp.ge.f32.partialorder %v1881, 1.5
    %v2262 = vsel %vm2252, 1.0, 0.0
    %v2263 = vsel %vm2253, 1.0, 0.0
    %v2264 = vsel %vm2254, 1.0, 0.0
    %v2265 = vsel %vm2255, 1.0, 0.0
    %v2266 = vsel %vm2256, 1.0, 0.0
    %v2267 = vsel %vm2257, 1.0, 0.0
    %v2268 = vsel %vm2258, 1.0, 0.0
    %v2269 = vsel %vm2259, 1.0, 0.0
    %v2270 = vsel %vm2260, 1.0, 0.0
    %v2271 = vsel %vm2261, 1.0, 0.0
    %vm2272 = vcmp.ge.f32.partialorder %v1872, 2.0
    %vm2273 = vcmp.ge.f32.partialorder %v1873, 2.0
    %vm2274 = vcmp.ge.f32.partialorder %v1874, 2.0
    %vm2275 = vcmp.ge.f32.partialorder %v1875, 2.0
    %vm2276 = vcmp.ge.f32.partialorder %v1876, 2.0
    %vm2277 = vcmp.ge.f32.partialorder %v1877, 2.0
    %vm2278 = vcmp.ge.f32.partialorder %v1878, 2.0
    %vm2279 = vcmp.ge.f32.partialorder %v1879, 2.0
    %vm2280 = vcmp.ge.f32.partialorder %v1880, 2.0
    %vm2281 = vcmp.ge.f32.partialorder %v1881, 2.0
    %v2282 = vsel %vm2272, 1.0, 0.0
    %v2283 = vsel %vm2273, 1.0, 0.0
    %v2284 = vsel %vm2274, 1.0, 0.0
    %v2285 = vsel %vm2275, 1.0, 0.0
    %v2286 = vsel %vm2276, 1.0, 0.0
    %v2287 = vsel %vm2277, 1.0, 0.0
    %v2288 = vsel %vm2278, 1.0, 0.0
    %v2289 = vsel %vm2279, 1.0, 0.0
    %v2290 = vsel %vm2280, 1.0, 0.0
    %v2291 = vsel %vm2281, 1.0, 0.0
    %vm2292 = vcmp.ge.f32.partialorder %v1872, 2.5
    %vm2293 = vcmp.ge.f32.partialorder %v1873, 2.5
    %vm2294 = vcmp.ge.f32.partialorder %v1874, 2.5
    %vm2295 = vcmp.ge.f32.partialorder %v1875, 2.5
    %vm2296 = vcmp.ge.f32.partialorder %v1876, 2.5
    %vm2297 = vcmp.ge.f32.partialorder %v1877, 2.5
    %vm2298 = vcmp.ge.f32.partialorder %v1878, 2.5
    %vm2299 = vcmp.ge.f32.partialorder %v1879, 2.5
    %vm2300 = vcmp.ge.f32.partialorder %v1880, 2.5
    %vm2301 = vcmp.ge.f32.partialorder %v1881, 2.5
    %v2302 = vsel %vm2292, 1.0, 0.0
    %v2303 = vsel %vm2293, 1.0, 0.0
    %v2304 = vsel %vm2294, 1.0, 0.0
    %v2305 = vsel %vm2295, 1.0, 0.0
    %v2306 = vsel %vm2296, 1.0, 0.0
    %v2307 = vsel %vm2297, 1.0, 0.0
    %v2308 = vsel %vm2298, 1.0, 0.0
    %v2309 = vsel %vm2299, 1.0, 0.0
    %v2310 = vsel %vm2300, 1.0, 0.0
    %v2311 = vsel %vm2301, 1.0, 0.0
    %v2312 = vsub.f32 %v2102, %v2122
    %v2313 = vsub.f32 %v2103, %v2123
    %v2314 = vsub.f32 %v2104, %v2124
    %v2315 = vsub.f32 %v2105, %v2125
    %v2316 = vsub.f32 %v2106, %v2126
    %v2317 = vsub.f32 %v2107, %v2127
    %v2318 = vsub.f32 %v2108, %v2128
    %v2319 = vsub.f32 %v2109, %v2129
    %v2320 = vsub.f32 %v2110, %v2130
    %v2321 = vsub.f32 %v2111, %v2131
    %v2322 = vsub.f32 %v2122, %v2142
    %v2323 = vsub.f32 %v2123, %v2143
    %v2324 = vsub.f32 %v2124, %v2144
    %v2325 = vsub.f32 %v2125, %v2145
    %v2326 = vsub.f32 %v2126, %v2146
    %v2327 = vsub.f32 %v2127, %v2147
    %v2328 = vsub.f32 %v2128, %v2148
    %v2329 = vsub.f32 %v2129, %v2149
    %v2330 = vsub.f32 %v2130, %v2150
    %v2331 = vsub.f32 %v2131, %v2151
    %v2332 = vsub.f32 %v2142, %v2162
    %v2333 = vsub.f32 %v2143, %v2163
    %v2334 = vsub.f32 %v2144, %v2164
    %v2335 = vsub.f32 %v2145, %v2165
    %v2336 = vsub.f32 %v2146, %v2166
    %v2337 = vsub.f32 %v2147, %v2167
    %v2338 = vsub.f32 %v2148, %v2168
    %v2339 = vsub.f32 %v2149, %v2169
    %v2340 = vsub.f32 %v2150, %v2170
    %v2341 = vsub.f32 %v2151, %v2171
    %v2342 = vsub.f32 %v2162, %v2182
    %v2343 = vsub.f32 %v2163, %v2183
    %v2344 = vsub.f32 %v2164, %v2184
    %v2345 = vsub.f32 %v2165, %v2185
    %v2346 = vsub.f32 %v2166, %v2186
    %v2347 = vsub.f32 %v2167, %v2187
    %v2348 = vsub.f32 %v2168, %v2188
    %v2349 = vsub.f32 %v2169, %v2189
    %v2350 = vsub.f32 %v2170, %v2190
    %v2351 = vsub.f32 %v2171, %v2191
    %v2352 = vsub.f32 %v2182, %v2202
    %v2353 = vsub.f32 %v2183, %v2203
    %v2354 = vsub.f32 %v2184, %v2204
    %v2355 = vsub.f32 %v2185, %v2205
    %v2356 = vsub.f32 %v2186, %v2206
    %v2357 = vsub.f32 %v2187, %v2207
    %v2358 = vsub.f32 %v2188, %v2208
    %v2359 = vsub.f32 %v2189, %v2209
    %v2360 = vsub.f32 %v2190, %v2210
    %v2361 = vsub.f32 %v2191, %v2211
    %v2362 = vsub.f32 %v2202, %v2222
    %v2363 = vsub.f32 %v2203, %v2223
    %v2364 = vsub.f32 %v2204, %v2224
    %v2365 = vsub.f32 %v2205, %v2225
    %v2366 = vsub.f32 %v2206, %v2226
    %v2367 = vsub.f32 %v2207, %v2227
    %v2368 = vsub.f32 %v2208, %v2228
    %v2369 = vsub.f32 %v2209, %v2229
    %v2370 = vsub.f32 %v2210, %v2230
    %v2371 = vsub.f32 %v2211, %v2231
    %v2372 = vsub.f32 %v2222, %v2242
    %v2373 = vsub.f32 %v2223, %v2243
    %v2374 = vsub.f32 %v2224, %v2244
    %v2375 = vsub.f32 %v2225, %v2245
    %v2376 = vsub.f32 %v2226, %v2246
    %v2377 = vsub.f32 %v2227, %v2247
    %v2378 = vsub.f32 %v2228, %v2248
    %v2379 = vsub.f32 %v2229, %v2249
    %v2380 = vsub.f32 %v2230, %v2250
    %v2381 = vsub.f32 %v2231, %v2251
    %v2382 = vsub.f32 %v2242, %v2262
    %v2383 = vsub.f32 %v2243, %v2263
    %v2384 = vsub.f32 %v2244, %v2264
    %v2385 = vsub.f32 %v2245, %v2265
    %v2386 = vsub.f32 %v2246, %v2266
    %v2387 = vsub.f32 %v2247, %v2267
    %v2388 = vsub.f32 %v2248, %v2268
    %v2389 = vsub.f32 %v2249, %v2269
    %v2390 = vsub.f32 %v2250, %v2270
    %v2391 = vsub.f32 %v2251, %v2271
    %v2392 = vsub.f32 %v2262, %v2282
    %v2393 = vsub.f32 %v2263, %v2283
    %v2394 = vsub.f32 %v2264, %v2284
    %v2395 = vsub.f32 %v2265, %v2285
    %v2396 = vsub.f32 %v2266, %v2286
    %v2397 = vsub.f32 %v2267, %v2287
    %v2398 = vsub.f32 %v2268, %v2288
    %v2399 = vsub.f32 %v2269, %v2289
    %v2400 = vsub.f32 %v2270, %v2290
    %v2401 = vsub.f32 %v2271, %v2291
    %v2402 = vsub.f32 %v2282, %v2302
    %v2403 = vsub.f32 %v2283, %v2303
    %v2404 = vsub.f32 %v2284, %v2304
    %v2405 = vsub.f32 %v2285, %v2305
    %v2406 = vsub.f32 %v2286, %v2306
    %v2407 = vsub.f32 %v2287, %v2307
    %v2408 = vsub.f32 %v2288, %v2308
    %v2409 = vsub.f32 %v2289, %v2309
    %v2410 = vsub.f32 %v2290, %v2310
    %v2411 = vsub.f32 %v2291, %v2311
    %v2412 = vsub.f32 %v1872, -2.5
    %v2413 = vsub.f32 %v1873, -2.5
    %v2414 = vsub.f32 %v1874, -2.5
    %v2415 = vsub.f32 %v1875, -2.5
    %v2416 = vsub.f32 %v1876, -2.5
    %v2417 = vsub.f32 %v1877, -2.5
    %v2418 = vsub.f32 %v1878, -2.5
    %v2419 = vsub.f32 %v1879, -2.5
    %v2420 = vsub.f32 %v1880, -2.5
    %v2421 = vsub.f32 %v1881, -2.5
    %v2422 = vmul.f32 %v2412, 2.0
    %v2423 = vmul.f32 %v2413, 2.0
    %v2424 = vmul.f32 %v2414, 2.0
    %v2425 = vmul.f32 %v2415, 2.0
    %v2426 = vmul.f32 %v2416, 2.0
    %v2427 = vmul.f32 %v2417, 2.0
    %v2428 = vmul.f32 %v2418, 2.0
    %v2429 = vmul.f32 %v2419, 2.0
    %v2430 = vmul.f32 %v2420, 2.0
    %v2431 = vmul.f32 %v2421, 2.0
    %v2432 = vmul.f32 %v2422, %v2312
    %v2433 = vmul.f32 %v2423, %v2313
    %v2434 = vmul.f32 %v2424, %v2314
    %v2435 = vmul.f32 %v2425, %v2315
    %v2436 = vmul.f32 %v2426, %v2316
    %v2437 = vmul.f32 %v2427, %v2317
    %v2438 = vmul.f32 %v2428, %v2318
    %v2439 = vmul.f32 %v2429, %v2319
    %v2440 = vmul.f32 %v2430, %v2320
    %v2441 = vmul.f32 %v2431, %v2321
    %v2442 = vsub.f32 %v1872, -1.5
    %v2443 = vsub.f32 %v1873, -1.5
    %v2444 = vsub.f32 %v1874, -1.5
    %v2445 = vsub.f32 %v1875, -1.5
    %v2446 = vsub.f32 %v1876, -1.5
    %v2447 = vsub.f32 %v1877, -1.5
    %v2448 = vsub.f32 %v1878, -1.5
    %v2449 = vsub.f32 %v1879, -1.5
    %v2450 = vsub.f32 %v1880, -1.5
    %v2451 = vsub.f32 %v1881, -1.5
    %v2452 = vmul.f32 %v2442, -2.0
    %v2453 = vmul.f32 %v2443, -2.0
    %v2454 = vmul.f32 %v2444, -2.0
    %v2455 = vmul.f32 %v2445, -2.0
    %v2456 = vmul.f32 %v2446, -2.0
    %v2457 = vmul.f32 %v2447, -2.0
    %v2458 = vmul.f32 %v2448, -2.0
    %v2459 = vmul.f32 %v2449, -2.0
    %v2460 = vmul.f32 %v2450, -2.0
    %v2461 = vmul.f32 %v2451, -2.0
    %v2462 = vmul.f32 %v2452, %v2322
    %v2463 = vmul.f32 %v2453, %v2323
    %v2464 = vmul.f32 %v2454, %v2324
    %v2465 = vmul.f32 %v2455, %v2325
    %v2466 = vmul.f32 %v2456, %v2326
    %v2467 = vmul.f32 %v2457, %v2327
    %v2468 = vmul.f32 %v2458, %v2328
    %v2469 = vmul.f32 %v2459, %v2329
    %v2470 = vmul.f32 %v2460, %v2330
    %v2471 = vmul.f32 %v2461, %v2331
    %v2472 = vadd.f32 %v2432, %v2462
    %v2473 = vadd.f32 %v2433, %v2463
    %v2474 = vadd.f32 %v2434, %v2464
    %v2475 = vadd.f32 %v2435, %v2465
    %v2476 = vadd.f32 %v2436, %v2466
    %v2477 = vadd.f32 %v2437, %v2467
    %v2478 = vadd.f32 %v2438, %v2468
    %v2479 = vadd.f32 %v2439, %v2469
    %v2480 = vadd.f32 %v2440, %v2470
    %v2481 = vadd.f32 %v2441, %v2471
    %v2482 = vsub.f32 %v1872, -2.0
    %v2483 = vsub.f32 %v1873, -2.0
    %v2484 = vsub.f32 %v1874, -2.0
    %v2485 = vsub.f32 %v1875, -2.0
    %v2486 = vsub.f32 %v1876, -2.0
    %v2487 = vsub.f32 %v1877, -2.0
    %v2488 = vsub.f32 %v1878, -2.0
    %v2489 = vsub.f32 %v1879, -2.0
    %v2490 = vsub.f32 %v1880, -2.0
    %v2491 = vsub.f32 %v1881, -2.0
    %v2492 = vmul.f32 %v2482, 2.0
    %v2493 = vmul.f32 %v2483, 2.0
    %v2494 = vmul.f32 %v2484, 2.0
    %v2495 = vmul.f32 %v2485, 2.0
    %v2496 = vmul.f32 %v2486, 2.0
    %v2497 = vmul.f32 %v2487, 2.0
    %v2498 = vmul.f32 %v2488, 2.0
    %v2499 = vmul.f32 %v2489, 2.0
    %v2500 = vmul.f32 %v2490, 2.0
    %v2501 = vmul.f32 %v2491, 2.0
    %v2502 = vmul.f32 %v2492, %v2322
    %v2503 = vmul.f32 %v2493, %v2323
    %v2504 = vmul.f32 %v2494, %v2324
    %v2505 = vmul.f32 %v2495, %v2325
    %v2506 = vmul.f32 %v2496, %v2326
    %v2507 = vmul.f32 %v2497, %v2327
    %v2508 = vmul.f32 %v2498, %v2328
    %v2509 = vmul.f32 %v2499, %v2329
    %v2510 = vmul.f32 %v2500, %v2330
    %v2511 = vmul.f32 %v2501, %v2331
    %v2512 = vsub.f32 %v1872, -1.0
    %v2513 = vsub.f32 %v1873, -1.0
    %v2514 = vsub.f32 %v1874, -1.0
    %v2515 = vsub.f32 %v1875, -1.0
    %v2516 = vsub.f32 %v1876, -1.0
    %v2517 = vsub.f32 %v1877, -1.0
    %v2518 = vsub.f32 %v1878, -1.0
    %v2519 = vsub.f32 %v1879, -1.0
    %v2520 = vsub.f32 %v1880, -1.0
    %v2521 = vsub.f32 %v1881, -1.0
    %v2522 = vmul.f32 %v2512, -2.0
    %v2523 = vmul.f32 %v2513, -2.0
    %v2524 = vmul.f32 %v2514, -2.0
    %v2525 = vmul.f32 %v2515, -2.0
    %v2526 = vmul.f32 %v2516, -2.0
    %v2527 = vmul.f32 %v2517, -2.0
    %v2528 = vmul.f32 %v2518, -2.0
    %v2529 = vmul.f32 %v2519, -2.0
    %v2530 = vmul.f32 %v2520, -2.0
    %v2531 = vmul.f32 %v2521, -2.0
    %v2532 = vmul.f32 %v2522, %v2332
    %v2533 = vmul.f32 %v2523, %v2333
    %v2534 = vmul.f32 %v2524, %v2334
    %v2535 = vmul.f32 %v2525, %v2335
    %v2536 = vmul.f32 %v2526, %v2336
    %v2537 = vmul.f32 %v2527, %v2337
    %v2538 = vmul.f32 %v2528, %v2338
    %v2539 = vmul.f32 %v2529, %v2339
    %v2540 = vmul.f32 %v2530, %v2340
    %v2541 = vmul.f32 %v2531, %v2341
    %v2542 = vadd.f32 %v2502, %v2532
    %v2543 = vadd.f32 %v2503, %v2533
    %v2544 = vadd.f32 %v2504, %v2534
    %v2545 = vadd.f32 %v2505, %v2535
    %v2546 = vadd.f32 %v2506, %v2536
    %v2547 = vadd.f32 %v2507, %v2537
    %v2548 = vadd.f32 %v2508, %v2538
    %v2549 = vadd.f32 %v2509, %v2539
    %v2550 = vadd.f32 %v2510, %v2540
    %v2551 = vadd.f32 %v2511, %v2541
    %v2552 = vmul.f32 %v2442, 2.0
    %v2553 = vmul.f32 %v2443, 2.0
    %v2554 = vmul.f32 %v2444, 2.0
    %v2555 = vmul.f32 %v2445, 2.0
    %v2556 = vmul.f32 %v2446, 2.0
    %v2557 = vmul.f32 %v2447, 2.0
    %v2558 = vmul.f32 %v2448, 2.0
    %v2559 = vmul.f32 %v2449, 2.0
    %v2560 = vmul.f32 %v2450, 2.0
    %v2561 = vmul.f32 %v2451, 2.0
    %v2562 = vmul.f32 %v2552, %v2332
    %v2563 = vmul.f32 %v2553, %v2333
    %v2564 = vmul.f32 %v2554, %v2334
    %v2565 = vmul.f32 %v2555, %v2335
    %v2566 = vmul.f32 %v2556, %v2336
    %v2567 = vmul.f32 %v2557, %v2337
    %v2568 = vmul.f32 %v2558, %v2338
    %v2569 = vmul.f32 %v2559, %v2339
    %v2570 = vmul.f32 %v2560, %v2340
    %v2571 = vmul.f32 %v2561, %v2341
    %v2572 = vsub.f32 %v1872, -0.5
    %v2573 = vsub.f32 %v1873, -0.5
    %v2574 = vsub.f32 %v1874, -0.5
    %v2575 = vsub.f32 %v1875, -0.5
    %v2576 = vsub.f32 %v1876, -0.5
    %v2577 = vsub.f32 %v1877, -0.5
    %v2578 = vsub.f32 %v1878, -0.5
    %v2579 = vsub.f32 %v1879, -0.5
    %v2580 = vsub.f32 %v1880, -0.5
    %v2581 = vsub.f32 %v1881, -0.5
    %v2582 = vmul.f32 %v2572, -2.0
    %v2583 = vmul.f32 %v2573, -2.0
    %v2584 = vmul.f32 %v2574, -2.0
    %v2585 = vmul.f32 %v2575, -2.0
    %v2586 = vmul.f32 %v2576, -2.0
    %v2587 = vmul.f32 %v2577, -2.0
    %v2588 = vmul.f32 %v2578, -2.0
    %v2589 = vmul.f32 %v2579, -2.0
    %v2590 = vmul.f32 %v2580, -2.0
    %v2591 = vmul.f32 %v2581, -2.0
    %v2592 = vmul.f32 %v2582, %v2342
    %v2593 = vmul.f32 %v2583, %v2343
    %v2594 = vmul.f32 %v2584, %v2344
    %v2595 = vmul.f32 %v2585, %v2345
    %v2596 = vmul.f32 %v2586, %v2346
    %v2597 = vmul.f32 %v2587, %v2347
    %v2598 = vmul.f32 %v2588, %v2348
    %v2599 = vmul.f32 %v2589, %v2349
    %v2600 = vmul.f32 %v2590, %v2350
    %v2601 = vmul.f32 %v2591, %v2351
    %v2602 = vadd.f32 %v2562, %v2592
    %v2603 = vadd.f32 %v2563, %v2593
    %v2604 = vadd.f32 %v2564, %v2594
    %v2605 = vadd.f32 %v2565, %v2595
    %v2606 = vadd.f32 %v2566, %v2596
    %v2607 = vadd.f32 %v2567, %v2597
    %v2608 = vadd.f32 %v2568, %v2598
    %v2609 = vadd.f32 %v2569, %v2599
    %v2610 = vadd.f32 %v2570, %v2600
    %v2611 = vadd.f32 %v2571, %v2601
    %v2612 = vmul.f32 %v2512, 2.0
    %v2613 = vmul.f32 %v2513, 2.0
    %v2614 = vmul.f32 %v2514, 2.0
    %v2615 = vmul.f32 %v2515, 2.0
    %v2616 = vmul.f32 %v2516, 2.0
    %v2617 = vmul.f32 %v2517, 2.0
    %v2618 = vmul.f32 %v2518, 2.0
    %v2619 = vmul.f32 %v2519, 2.0
    %v2620 = vmul.f32 %v2520, 2.0
    %v2621 = vmul.f32 %v2521, 2.0
    %v2622 = vmul.f32 %v2612, %v2342
    %v2623 = vmul.f32 %v2613, %v2343
    %v2624 = vmul.f32 %v2614, %v2344
    %v2625 = vmul.f32 %v2615, %v2345
    %v2626 = vmul.f32 %v2616, %v2346
    %v2627 = vmul.f32 %v2617, %v2347
    %v2628 = vmul.f32 %v2618, %v2348
    %v2629 = vmul.f32 %v2619, %v2349
    %v2630 = vmul.f32 %v2620, %v2350
    %v2631 = vmul.f32 %v2621, %v2351
    %v2632 = vmul.f32 %v1872, -2.0
    %v2633 = vmul.f32 %v1873, -2.0
    %v2634 = vmul.f32 %v1874, -2.0
    %v2635 = vmul.f32 %v1875, -2.0
    %v2636 = vmul.f32 %v1876, -2.0
    %v2637 = vmul.f32 %v1877, -2.0
    %v2638 = vmul.f32 %v1878, -2.0
    %v2639 = vmul.f32 %v1879, -2.0
    %v2640 = vmul.f32 %v1880, -2.0
    %v2641 = vmul.f32 %v1881, -2.0
    %v2642 = vmul.f32 %v2632, %v2352
    %v2643 = vmul.f32 %v2633, %v2353
    %v2644 = vmul.f32 %v2634, %v2354
    %v2645 = vmul.f32 %v2635, %v2355
    %v2646 = vmul.f32 %v2636, %v2356
    %v2647 = vmul.f32 %v2637, %v2357
    %v2648 = vmul.f32 %v2638, %v2358
    %v2649 = vmul.f32 %v2639, %v2359
    %v2650 = vmul.f32 %v2640, %v2360
    %v2651 = vmul.f32 %v2641, %v2361
    %v2652 = vadd.f32 %v2622, %v2642
    %v2653 = vadd.f32 %v2623, %v2643
    %v2654 = vadd.f32 %v2624, %v2644
    %v2655 = vadd.f32 %v2625, %v2645
    %v2656 = vadd.f32 %v2626, %v2646
    %v2657 = vadd.f32 %v2627, %v2647
    %v2658 = vadd.f32 %v2628, %v2648
    %v2659 = vadd.f32 %v2629, %v2649
    %v2660 = vadd.f32 %v2630, %v2650
    %v2661 = vadd.f32 %v2631, %v2651
    %v2662 = vmul.f32 %v2572, 2.0
    %v2663 = vmul.f32 %v2573, 2.0
    %v2664 = vmul.f32 %v2574, 2.0
    %v2665 = vmul.f32 %v2575, 2.0
    %v2666 = vmul.f32 %v2576, 2.0
    %v2667 = vmul.f32 %v2577, 2.0
    %v2668 = vmul.f32 %v2578, 2.0
    %v2669 = vmul.f32 %v2579, 2.0
    %v2670 = vmul.f32 %v2580, 2.0
    %v2671 = vmul.f32 %v2581, 2.0
    %v2672 = vmul.f32 %v2662, %v2352
    %v2673 = vmul.f32 %v2663, %v2353
    %v2674 = vmul.f32 %v2664, %v2354
    %v2675 = vmul.f32 %v2665, %v2355
    %v2676 = vmul.f32 %v2666, %v2356
    %v2677 = vmul.f32 %v2667, %v2357
    %v2678 = vmul.f32 %v2668, %v2358
    %v2679 = vmul.f32 %v2669, %v2359
    %v2680 = vmul.f32 %v2670, %v2360
    %v2681 = vmul.f32 %v2671, %v2361
    %v2682 = vsub.f32 %v1872, 0.5
    %v2683 = vsub.f32 %v1873, 0.5
    %v2684 = vsub.f32 %v1874, 0.5
    %v2685 = vsub.f32 %v1875, 0.5
    %v2686 = vsub.f32 %v1876, 0.5
    %v2687 = vsub.f32 %v1877, 0.5
    %v2688 = vsub.f32 %v1878, 0.5
    %v2689 = vsub.f32 %v1879, 0.5
    %v2690 = vsub.f32 %v1880, 0.5
    %v2691 = vsub.f32 %v1881, 0.5
    %v2692 = vmul.f32 %v2682, -2.0
    %v2693 = vmul.f32 %v2683, -2.0
    %v2694 = vmul.f32 %v2684, -2.0
    %v2695 = vmul.f32 %v2685, -2.0
    %v2696 = vmul.f32 %v2686, -2.0
    %v2697 = vmul.f32 %v2687, -2.0
    %v2698 = vmul.f32 %v2688, -2.0
    %v2699 = vmul.f32 %v2689, -2.0
    %v2700 = vmul.f32 %v2690, -2.0
    %v2701 = vmul.f32 %v2691, -2.0
    %v2702 = vmul.f32 %v2692, %v2362
    %v2703 = vmul.f32 %v2693, %v2363
    %v2704 = vmul.f32 %v2694, %v2364
    %v2705 = vmul.f32 %v2695, %v2365
    %v2706 = vmul.f32 %v2696, %v2366
    %v2707 = vmul.f32 %v2697, %v2367
    %v2708 = vmul.f32 %v2698, %v2368
    %v2709 = vmul.f32 %v2699, %v2369
    %v2710 = vmul.f32 %v2700, %v2370
    %v2711 = vmul.f32 %v2701, %v2371
    %v2712 = vadd.f32 %v2672, %v2702
    %v2713 = vadd.f32 %v2673, %v2703
    %v2714 = vadd.f32 %v2674, %v2704
    %v2715 = vadd.f32 %v2675, %v2705
    %v2716 = vadd.f32 %v2676, %v2706
    %v2717 = vadd.f32 %v2677, %v2707
    %v2718 = vadd.f32 %v2678, %v2708
    %v2719 = vadd.f32 %v2679, %v2709
    %v2720 = vadd.f32 %v2680, %v2710
    %v2721 = vadd.f32 %v2681, %v2711
    %v2722 = vmul.f32 %v1872, 2.0
    %v2723 = vmul.f32 %v1873, 2.0
    %v2724 = vmul.f32 %v1874, 2.0
    %v2725 = vmul.f32 %v1875, 2.0
    %v2726 = vmul.f32 %v1876, 2.0
    %v2727 = vmul.f32 %v1877, 2.0
    %v2728 = vmul.f32 %v1878, 2.0
    %v2729 = vmul.f32 %v1879, 2.0
    %v2730 = vmul.f32 %v1880, 2.0
    %v2731 = vmul.f32 %v1881, 2.0
    %v2732 = vmul.f32 %v2722, %v2362
    %v2733 = vmul.f32 %v2723, %v2363
    %v2734 = vmul.f32 %v2724, %v2364
    %v2735 = vmul.f32 %v2725, %v2365
    %v2736 = vmul.f32 %v2726, %v2366
    %v2737 = vmul.f32 %v2727, %v2367
    %v2738 = vmul.f32 %v2728, %v2368
    %v2739 = vmul.f32 %v2729, %v2369
    %v2740 = vmul.f32 %v2730, %v2370
    %v2741 = vmul.f32 %v2731, %v2371
    %v2742 = vsub.f32 %v1872, 1.0
    %v2743 = vsub.f32 %v1873, 1.0
    %v2744 = vsub.f32 %v1874, 1.0
    %v2745 = vsub.f32 %v1875, 1.0
    %v2746 = vsub.f32 %v1876, 1.0
    %v2747 = vsub.f32 %v1877, 1.0
    %v2748 = vsub.f32 %v1878, 1.0
    %v2749 = vsub.f32 %v1879, 1.0
    %v2750 = vsub.f32 %v1880, 1.0
    %v2751 = vsub.f32 %v1881, 1.0
    %v2752 = vmul.f32 %v2742, -2.0
    %v2753 = vmul.f32 %v2743, -2.0
    %v2754 = vmul.f32 %v2744, -2.0
    %v2755 = vmul.f32 %v2745, -2.0
    %v2756 = vmul.f32 %v2746, -2.0
    %v2757 = vmul.f32 %v2747, -2.0
    %v2758 = vmul.f32 %v2748, -2.0
    %v2759 = vmul.f32 %v2749, -2.0
    %v2760 = vmul.f32 %v2750, -2.0
    %v2761 = vmul.f32 %v2751, -2.0
    %v2762 = vmul.f32 %v2752, %v2372
    %v2763 = vmul.f32 %v2753, %v2373
    %v2764 = vmul.f32 %v2754, %v2374
    %v2765 = vmul.f32 %v2755, %v2375
    %v2766 = vmul.f32 %v2756, %v2376
    %v2767 = vmul.f32 %v2757, %v2377
    %v2768 = vmul.f32 %v2758, %v2378
    %v2769 = vmul.f32 %v2759, %v2379
    %v2770 = vmul.f32 %v2760, %v2380
    %v2771 = vmul.f32 %v2761, %v2381
    %v2772 = vadd.f32 %v2732, %v2762
    %v2773 = vadd.f32 %v2733, %v2763
    %v2774 = vadd.f32 %v2734, %v2764
    %v2775 = vadd.f32 %v2735, %v2765
    %v2776 = vadd.f32 %v2736, %v2766
    %v2777 = vadd.f32 %v2737, %v2767
    %v2778 = vadd.f32 %v2738, %v2768
    %v2779 = vadd.f32 %v2739, %v2769
    %v2780 = vadd.f32 %v2740, %v2770
    %v2781 = vadd.f32 %v2741, %v2771
    %v2782 = vmul.f32 %v2682, 2.0
    %v2783 = vmul.f32 %v2683, 2.0
    %v2784 = vmul.f32 %v2684, 2.0
    %v2785 = vmul.f32 %v2685, 2.0
    %v2786 = vmul.f32 %v2686, 2.0
    %v2787 = vmul.f32 %v2687, 2.0
    %v2788 = vmul.f32 %v2688, 2.0
    %v2789 = vmul.f32 %v2689, 2.0
    %v2790 = vmul.f32 %v2690, 2.0
    %v2791 = vmul.f32 %v2691, 2.0
    %v2792 = vmul.f32 %v2782, %v2372
    %v2793 = vmul.f32 %v2783, %v2373
    %v2794 = vmul.f32 %v2784, %v2374
    %v2795 = vmul.f32 %v2785, %v2375
    %v2796 = vmul.f32 %v2786, %v2376
    %v2797 = vmul.f32 %v2787, %v2377
    %v2798 = vmul.f32 %v2788, %v2378
    %v2799 = vmul.f32 %v2789, %v2379
    %v2800 = vmul.f32 %v2790, %v2380
    %v2801 = vmul.f32 %v2791, %v2381
    %v2802 = vsub.f32 %v1872, 1.5
    %v2803 = vsub.f32 %v1873, 1.5
    %v2804 = vsub.f32 %v1874, 1.5
    %v2805 = vsub.f32 %v1875, 1.5
    %v2806 = vsub.f32 %v1876, 1.5
    %v2807 = vsub.f32 %v1877, 1.5
    %v2808 = vsub.f32 %v1878, 1.5
    %v2809 = vsub.f32 %v1879, 1.5
    %v2810 = vsub.f32 %v1880, 1.5
    %v2811 = vsub.f32 %v1881, 1.5
    %v2812 = vmul.f32 %v2802, -2.0
    %v2813 = vmul.f32 %v2803, -2.0
    %v2814 = vmul.f32 %v2804, -2.0
    %v2815 = vmul.f32 %v2805, -2.0
    %v2816 = vmul.f32 %v2806, -2.0
    %v2817 = vmul.f32 %v2807, -2.0
    %v2818 = vmul.f32 %v2808, -2.0
    %v2819 = vmul.f32 %v2809, -2.0
    %v2820 = vmul.f32 %v2810, -2.0
    %v2821 = vmul.f32 %v2811, -2.0
    %v2822 = vmul.f32 %v2812, %v2382
    %v2823 = vmul.f32 %v2813, %v2383
    %v2824 = vmul.f32 %v2814, %v2384
    %v2825 = vmul.f32 %v2815, %v2385
    %v2826 = vmul.f32 %v2816, %v2386
    %v2827 = vmul.f32 %v2817, %v2387
    %v2828 = vmul.f32 %v2818, %v2388
    %v2829 = vmul.f32 %v2819, %v2389
    %v2830 = vmul.f32 %v2820, %v2390
    %v2831 = vmul.f32 %v2821, %v2391
    %v2832 = vadd.f32 %v2792, %v2822
    %v2833 = vadd.f32 %v2793, %v2823
    %v2834 = vadd.f32 %v2794, %v2824
    %v2835 = vadd.f32 %v2795, %v2825
    %v2836 = vadd.f32 %v2796, %v2826
    %v2837 = vadd.f32 %v2797, %v2827
    %v2838 = vadd.f32 %v2798, %v2828
    %v2839 = vadd.f32 %v2799, %v2829
    %v2840 = vadd.f32 %v2800, %v2830
    %v2841 = vadd.f32 %v2801, %v2831
    %v2842 = vmul.f32 %v2742, 2.0
    %v2843 = vmul.f32 %v2743, 2.0
    %v2844 = vmul.f32 %v2744, 2.0
    %v2845 = vmul.f32 %v2745, 2.0
    %v2846 = vmul.f32 %v2746, 2.0
    %v2847 = vmul.f32 %v2747, 2.0
    %v2848 = vmul.f32 %v2748, 2.0
    %v2849 = vmul.f32 %v2749, 2.0
    %v2850 = vmul.f32 %v2750, 2.0
    %v2851 = vmul.f32 %v2751, 2.0
    %v2852 = vmul.f32 %v2842, %v2382
    %v2853 = vmul.f32 %v2843, %v2383
    %v2854 = vmul.f32 %v2844, %v2384
    %v2855 = vmul.f32 %v2845, %v2385
    %v2856 = vmul.f32 %v2846, %v2386
    %v2857 = vmul.f32 %v2847, %v2387
    %v2858 = vmul.f32 %v2848, %v2388
    %v2859 = vmul.f32 %v2849, %v2389
    %v2860 = vmul.f32 %v2850, %v2390
    %v2861 = vmul.f32 %v2851, %v2391
    %v2862 = vsub.f32 %v1872, 2.0
    %v2863 = vsub.f32 %v1873, 2.0
    %v2864 = vsub.f32 %v1874, 2.0
    %v2865 = vsub.f32 %v1875, 2.0
    %v2866 = vsub.f32 %v1876, 2.0
    %v2867 = vsub.f32 %v1877, 2.0
    %v2868 = vsub.f32 %v1878, 2.0
    %v2869 = vsub.f32 %v1879, 2.0
    %v2870 = vsub.f32 %v1880, 2.0
    %v2871 = vsub.f32 %v1881, 2.0
    %v2872 = vmul.f32 %v2862, -2.0
    %v2873 = vmul.f32 %v2863, -2.0
    %v2874 = vmul.f32 %v2864, -2.0
    %v2875 = vmul.f32 %v2865, -2.0
    %v2876 = vmul.f32 %v2866, -2.0
    %v2877 = vmul.f32 %v2867, -2.0
    %v2878 = vmul.f32 %v2868, -2.0
    %v2879 = vmul.f32 %v2869, -2.0
    %v2880 = vmul.f32 %v2870, -2.0
    %v2881 = vmul.f32 %v2871, -2.0
    %v2882 = vmul.f32 %v2872, %v2392
    %v2883 = vmul.f32 %v2873, %v2393
    %v2884 = vmul.f32 %v2874, %v2394
    %v2885 = vmul.f32 %v2875, %v2395
    %v2886 = vmul.f32 %v2876, %v2396
    %v2887 = vmul.f32 %v2877, %v2397
    %v2888 = vmul.f32 %v2878, %v2398
    %v2889 = vmul.f32 %v2879, %v2399
    %v2890 = vmul.f32 %v2880, %v2400
    %v2891 = vmul.f32 %v2881, %v2401
    %v2892 = vadd.f32 %v2852, %v2882
    %v2893 = vadd.f32 %v2853, %v2883
    %v2894 = vadd.f32 %v2854, %v2884
    %v2895 = vadd.f32 %v2855, %v2885
    %v2896 = vadd.f32 %v2856, %v2886
    %v2897 = vadd.f32 %v2857, %v2887
    %v2898 = vadd.f32 %v2858, %v2888
    %v2899 = vadd.f32 %v2859, %v2889
    %v2900 = vadd.f32 %v2860, %v2890
    %v2901 = vadd.f32 %v2861, %v2891
    %v2902 = vmul.f32 %v2802, 2.0
    %v2903 = vmul.f32 %v2803, 2.0
    %v2904 = vmul.f32 %v2804, 2.0
    %v2905 = vmul.f32 %v2805, 2.0
    %v2906 = vmul.f32 %v2806, 2.0
    %v2907 = vmul.f32 %v2807, 2.0
    %v2908 = vmul.f32 %v2808, 2.0
    %v2909 = vmul.f32 %v2809, 2.0
    %v2910 = vmul.f32 %v2810, 2.0
    %v2911 = vmul.f32 %v2811, 2.0
    %v2912 = vmul.f32 %v2902, %v2392
    %v2913 = vmul.f32 %v2903, %v2393
    %v2914 = vmul.f32 %v2904, %v2394
    %v2915 = vmul.f32 %v2905, %v2395
    %v2916 = vmul.f32 %v2906, %v2396
    %v2917 = vmul.f32 %v2907, %v2397
    %v2918 = vmul.f32 %v2908, %v2398
    %v2919 = vmul.f32 %v2909, %v2399
    %v2920 = vmul.f32 %v2910, %v2400
    %v2921 = vmul.f32 %v2911, %v2401
    %v2922 = vsub.f32 %v1872, 2.5
    %v2923 = vsub.f32 %v1873, 2.5
    %v2924 = vsub.f32 %v1874, 2.5
    %v2925 = vsub.f32 %v1875, 2.5
    %v2926 = vsub.f32 %v1876, 2.5
    %v2927 = vsub.f32 %v1877, 2.5
    %v2928 = vsub.f32 %v1878, 2.5
    %v2929 = vsub.f32 %v1879, 2.5
    %v2930 = vsub.f32 %v1880, 2.5
    %v2931 = vsub.f32 %v1881, 2.5
    %v2932 = vmul.f32 %v2922, -2.0
    %v2933 = vmul.f32 %v2923, -2.0
    %v2934 = vmul.f32 %v2924, -2.0
    %v2935 = vmul.f32 %v2925, -2.0
    %v2936 = vmul.f32 %v2926, -2.0
    %v2937 = vmul.f32 %v2927, -2.0
    %v2938 = vmul.f32 %v2928, -2.0
    %v2939 = vmul.f32 %v2929, -2.0
    %v2940 = vmul.f32 %v2930, -2.0
    %v2941 = vmul.f32 %v2931, -2.0
    %v2942 = vmul.f32 %v2932, %v2402
    %v2943 = vmul.f32 %v2933, %v2403
    %v2944 = vmul.f32 %v2934, %v2404
    %v2945 = vmul.f32 %v2935, %v2405
    %v2946 = vmul.f32 %v2936, %v2406
    %v2947 = vmul.f32 %v2937, %v2407
    %v2948 = vmul.f32 %v2938, %v2408
    %v2949 = vmul.f32 %v2939, %v2409
    %v2950 = vmul.f32 %v2940, %v2410
    %v2951 = vmul.f32 %v2941, %v2411
    %v2952 = vadd.f32 %v2912, %v2942
    %v2953 = vadd.f32 %v2913, %v2943
    %v2954 = vadd.f32 %v2914, %v2944
    %v2955 = vadd.f32 %v2915, %v2945
    %v2956 = vadd.f32 %v2916, %v2946
    %v2957 = vadd.f32 %v2917, %v2947
    %v2958 = vadd.f32 %v2918, %v2948
    %v2959 = vadd.f32 %v2919, %v2949
    %v2960 = vadd.f32 %v2920, %v2950
    %v2961 = vadd.f32 %v2921, %v2951
    %v2962 = vmul.f32 %v2412, %v2472
    %v2963 = vmul.f32 %v2413, %v2473
    %v2964 = vmul.f32 %v2414, %v2474
    %v2965 = vmul.f32 %v2415, %v2475
    %v2966 = vmul.f32 %v2416, %v2476
    %v2967 = vmul.f32 %v2417, %v2477
    %v2968 = vmul.f32 %v2418, %v2478
    %v2969 = vmul.f32 %v2419, %v2479
    %v2970 = vmul.f32 %v2420, %v2480
    %v2971 = vmul.f32 %v2421, %v2481
    %v2972 = vmul.f32 %v2512, -1.0
    %v2973 = vmul.f32 %v2513, -1.0
    %v2974 = vmul.f32 %v2514, -1.0
    %v2975 = vmul.f32 %v2515, -1.0
    %v2976 = vmul.f32 %v2516, -1.0
    %v2977 = vmul.f32 %v2517, -1.0
    %v2978 = vmul.f32 %v2518, -1.0
    %v2979 = vmul.f32 %v2519, -1.0
    %v2980 = vmul.f32 %v2520, -1.0
    %v2981 = vmul.f32 %v2521, -1.0
    %v2982 = vmul.f32 %v2972, %v2542
    %v2983 = vmul.f32 %v2973, %v2543
    %v2984 = vmul.f32 %v2974, %v2544
    %v2985 = vmul.f32 %v2975, %v2545
    %v2986 = vmul.f32 %v2976, %v2546
    %v2987 = vmul.f32 %v2977, %v2547
    %v2988 = vmul.f32 %v2978, %v2548
    %v2989 = vmul.f32 %v2979, %v2549
    %v2990 = vmul.f32 %v2980, %v2550
    %v2991 = vmul.f32 %v2981, %v2551
    %v2992 = vadd.f32 %v2962, %v2982
    %v2993 = vadd.f32 %v2963, %v2983
    %v2994 = vadd.f32 %v2964, %v2984
    %v2995 = vadd.f32 %v2965, %v2985
    %v2996 = vadd.f32 %v2966, %v2986
    %v2997 = vadd.f32 %v2967, %v2987
    %v2998 = vadd.f32 %v2968, %v2988
    %v2999 = vadd.f32 %v2969, %v2989
    %v3000 = vadd.f32 %v2970, %v2990
    %v3001 = vadd.f32 %v2971, %v2991
    %v3002 = vmul.f32 %v2482, %v2542
    %v3003 = vmul.f32 %v2483, %v2543
    %v3004 = vmul.f32 %v2484, %v2544
    %v3005 = vmul.f32 %v2485, %v2545
    %v3006 = vmul.f32 %v2486, %v2546
    %v3007 = vmul.f32 %v2487, %v2547
    %v3008 = vmul.f32 %v2488, %v2548
    %v3009 = vmul.f32 %v2489, %v2549
    %v3010 = vmul.f32 %v2490, %v2550
    %v3011 = vmul.f32 %v2491, %v2551
    %v3012 = vmul.f32 %v2572, -1.0
    %v3013 = vmul.f32 %v2573, -1.0
    %v3014 = vmul.f32 %v2574, -1.0
    %v3015 = vmul.f32 %v2575, -1.0
    %v3016 = vmul.f32 %v2576, -1.0
    %v3017 = vmul.f32 %v2577, -1.0
    %v3018 = vmul.f32 %v2578, -1.0
    %v3019 = vmul.f32 %v2579, -1.0
    %v3020 = vmul.f32 %v2580, -1.0
    %v3021 = vmul.f32 %v2581, -1.0
    %v3022 = vmul.f32 %v3012, %v2602
    %v3023 = vmul.f32 %v3013, %v2603
    %v3024 = vmul.f32 %v3014, %v2604
    %v3025 = vmul.f32 %v3015, %v2605
    %v3026 = vmul.f32 %v3016, %v2606
    %v3027 = vmul.f32 %v3017, %v2607
    %v3028 = vmul.f32 %v3018, %v2608
    %v3029 = vmul.f32 %v3019, %v2609
    %v3030 = vmul.f32 %v3020, %v2610
    %v3031 = vmul.f32 %v3021, %v2611
    %v3032 = vadd.f32 %v3002, %v3022
    %v3033 = vadd.f32 %v3003, %v3023
    %v3034 = vadd.f32 %v3004, %v3024
    %v3035 = vadd.f32 %v3005, %v3025
    %v3036 = vadd.f32 %v3006, %v3026
    %v3037 = vadd.f32 %v3007, %v3027
    %v3038 = vadd.f32 %v3008, %v3028
    %v3039 = vadd.f32 %v3009, %v3029
    %v3040 = vadd.f32 %v3010, %v3030
    %v3041 = vadd.f32 %v3011, %v3031
    %v3042 = vmul.f32 %v2442, %v2602
    %v3043 = vmul.f32 %v2443, %v2603
    %v3044 = vmul.f32 %v2444, %v2604
    %v3045 = vmul.f32 %v2445, %v2605
    %v3046 = vmul.f32 %v2446, %v2606
    %v3047 = vmul.f32 %v2447, %v2607
    %v3048 = vmul.f32 %v2448, %v2608
    %v3049 = vmul.f32 %v2449, %v2609
    %v3050 = vmul.f32 %v2450, %v2610
    %v3051 = vmul.f32 %v2451, %v2611
    %v3052 = vmul.f32 %v1872, -1.0
    %v3053 = vmul.f32 %v1873, -1.0
    %v3054 = vmul.f32 %v1874, -1.0
    %v3055 = vmul.f32 %v1875, -1.0
    %v3056 = vmul.f32 %v1876, -1.0
    %v3057 = vmul.f32 %v1877, -1.0
    %v3058 = vmul.f32 %v1878, -1.0
    %v3059 = vmul.f32 %v1879, -1.0
    %v3060 = vmul.f32 %v1880, -1.0
    %v3061 = vmul.f32 %v1881, -1.0
    %v3062 = vmul.f32 %v3052, %v2652
    %v3063 = vmul.f32 %v3053, %v2653
    %v3064 = vmul.f32 %v3054, %v2654
    %v3065 = vmul.f32 %v3055, %v2655
    %v3066 = vmul.f32 %v3056, %v2656
    %v3067 = vmul.f32 %v3057, %v2657
    %v3068 = vmul.f32 %v3058, %v2658
    %v3069 = vmul.f32 %v3059, %v2659
    %v3070 = vmul.f32 %v3060, %v2660
    %v3071 = vmul.f32 %v3061, %v2661
    %v3072 = vadd.f32 %v3042, %v3062
    %v3073 = vadd.f32 %v3043, %v3063
    %v3074 = vadd.f32 %v3044, %v3064
    %v3075 = vadd.f32 %v3045, %v3065
    %v3076 = vadd.f32 %v3046, %v3066
    %v3077 = vadd.f32 %v3047, %v3067
    %v3078 = vadd.f32 %v3048, %v3068
    %v3079 = vadd.f32 %v3049, %v3069
    %v3080 = vadd.f32 %v3050, %v3070
    %v3081 = vadd.f32 %v3051, %v3071
    %v3082 = vmul.f32 %v2512, %v2652
    %v3083 = vmul.f32 %v2513, %v2653
    %v3084 = vmul.f32 %v2514, %v2654
    %v3085 = vmul.f32 %v2515, %v2655
    %v3086 = vmul.f32 %v2516, %v2656
    %v3087 = vmul.f32 %v2517, %v2657
    %v3088 = vmul.f32 %v2518, %v2658
    %v3089 = vmul.f32 %v2519, %v2659
    %v3090 = vmul.f32 %v2520, %v2660
    %v3091 = vmul.f32 %v2521, %v2661
    %v3092 = vmul.f32 %v2682, -1.0
    %v3093 = vmul.f32 %v2683, -1.0
    %v3094 = vmul.f32 %v2684, -1.0
    %v3095 = vmul.f32 %v2685, -1.0
    %v3096 = vmul.f32 %v2686, -1.0
    %v3097 = vmul.f32 %v2687, -1.0
    %v3098 = vmul.f32 %v2688, -1.0
    %v3099 = vmul.f32 %v2689, -1.0
    %v3100 = vmul.f32 %v2690, -1.0
    %v3101 = vmul.f32 %v2691, -1.0
    %v3102 = vmul.f32 %v3092, %v2712
    %v3103 = vmul.f32 %v3093, %v2713
    %v3104 = vmul.f32 %v3094, %v2714
    %v3105 = vmul.f32 %v3095, %v2715
    %v3106 = vmul.f32 %v3096, %v2716
    %v3107 = vmul.f32 %v3097, %v2717
    %v3108 = vmul.f32 %v3098, %v2718
    %v3109 = vmul.f32 %v3099, %v2719
    %v3110 = vmul.f32 %v3100, %v2720
    %v3111 = vmul.f32 %v3101, %v2721
    %v3112 = vadd.f32 %v3082, %v3102
    %v3113 = vadd.f32 %v3083, %v3103
    %v3114 = vadd.f32 %v3084, %v3104
    %v3115 = vadd.f32 %v3085, %v3105
    %v3116 = vadd.f32 %v3086, %v3106
    %v3117 = vadd.f32 %v3087, %v3107
    %v3118 = vadd.f32 %v3088, %v3108
    %v3119 = vadd.f32 %v3089, %v3109
    %v3120 = vadd.f32 %v3090, %v3110
    %v3121 = vadd.f32 %v3091, %v3111
    %v3122 = vmul.f32 %v2572, %v2712
    %v3123 = vmul.f32 %v2573, %v2713
    %v3124 = vmul.f32 %v2574, %v2714
    %v3125 = vmul.f32 %v2575, %v2715
    %v3126 = vmul.f32 %v2576, %v2716
    %v3127 = vmul.f32 %v2577, %v2717
    %v3128 = vmul.f32 %v2578, %v2718
    %v3129 = vmul.f32 %v2579, %v2719
    %v3130 = vmul.f32 %v2580, %v2720
    %v3131 = vmul.f32 %v2581, %v2721
    %v3132 = vmul.f32 %v2742, -1.0
    %v3133 = vmul.f32 %v2743, -1.0
    %v3134 = vmul.f32 %v2744, -1.0
    %v3135 = vmul.f32 %v2745, -1.0
    %v3136 = vmul.f32 %v2746, -1.0
    %v3137 = vmul.f32 %v2747, -1.0
    %v3138 = vmul.f32 %v2748, -1.0
    %v3139 = vmul.f32 %v2749, -1.0
    %v3140 = vmul.f32 %v2750, -1.0
    %v3141 = vmul.f32 %v2751, -1.0
    %v3142 = vmul.f32 %v3132, %v2772
    %v3143 = vmul.f32 %v3133, %v2773
    %v3144 = vmul.f32 %v3134, %v2774
    %v3145 = vmul.f32 %v3135, %v2775
    %v3146 = vmul.f32 %v3136, %v2776
    %v3147 = vmul.f32 %v3137, %v2777
    %v3148 = vmul.f32 %v3138, %v2778
    %v3149 = vmul.f32 %v3139, %v2779
    %v3150 = vmul.f32 %v3140, %v2780
    %v3151 = vmul.f32 %v3141, %v2781
    %v3152 = vadd.f32 %v3122, %v3142
    %v3153 = vadd.f32 %v3123, %v3143
    %v3154 = vadd.f32 %v3124, %v3144
    %v3155 = vadd.f32 %v3125, %v3145
    %v3156 = vadd.f32 %v3126, %v3146
    %v3157 = vadd.f32 %v3127, %v3147
    %v3158 = vadd.f32 %v3128, %v3148
    %v3159 = vadd.f32 %v3129, %v3149
    %v3160 = vadd.f32 %v3130, %v3150
    %v3161 = vadd.f32 %v3131, %v3151
    %v3162 = vmul.f32 %v1872, %v2772
    %v3163 = vmul.f32 %v1873, %v2773
    %v3164 = vmul.f32 %v1874, %v2774
    %v3165 = vmul.f32 %v1875, %v2775
    %v3166 = vmul.f32 %v1876, %v2776
    %v3167 = vmul.f32 %v1877, %v2777
    %v3168 = vmul.f32 %v1878, %v2778
    %v3169 = vmul.f32 %v1879, %v2779
    %v3170 = vmul.f32 %v1880, %v2780
    %v3171 = vmul.f32 %v1881, %v2781
    %v3172 = vmul.f32 %v2802, -1.0
    %v3173 = vmul.f32 %v2803, -1.0
    %v3174 = vmul.f32 %v2804, -1.0
    %v3175 = vmul.f32 %v2805, -1.0
    %v3176 = vmul.f32 %v2806, -1.0
    %v3177 = vmul.f32 %v2807, -1.0
    %v3178 = vmul.f32 %v2808, -1.0
    %v3179 = vmul.f32 %v2809, -1.0
    %v3180 = vmul.f32 %v2810, -1.0
    %v3181 = vmul.f32 %v2811, -1.0
    %v3182 = vmul.f32 %v3172, %v2832
    %v3183 = vmul.f32 %v3173, %v2833
    %v3184 = vmul.f32 %v3174, %v2834
    %v3185 = vmul.f32 %v3175, %v2835
    %v3186 = vmul.f32 %v3176, %v2836
    %v3187 = vmul.f32 %v3177, %v2837
    %v3188 = vmul.f32 %v3178, %v2838
    %v3189 = vmul.f32 %v3179, %v2839
    %v3190 = vmul.f32 %v3180, %v2840
    %v3191 = vmul.f32 %v3181, %v2841
    %v3192 = vadd.f32 %v3162, %v3182
    %v3193 = vadd.f32 %v3163, %v3183
    %v3194 = vadd.f32 %v3164, %v3184
    %v3195 = vadd.f32 %v3165, %v3185
    %v3196 = vadd.f32 %v3166, %v3186
    %v3197 = vadd.f32 %v3167, %v3187
    %v3198 = vadd.f32 %v3168, %v3188
    %v3199 = vadd.f32 %v3169, %v3189
    %v3200 = vadd.f32 %v3170, %v3190
    %v3201 = vadd.f32 %v3171, %v3191
    %v3202 = vmul.f32 %v2682, %v2832
    %v3203 = vmul.f32 %v2683, %v2833
    %v3204 = vmul.f32 %v2684, %v2834
    %v3205 = vmul.f32 %v2685, %v2835
    %v3206 = vmul.f32 %v2686, %v2836
    %v3207 = vmul.f32 %v2687, %v2837
    %v3208 = vmul.f32 %v2688, %v2838
    %v3209 = vmul.f32 %v2689, %v2839
    %v3210 = vmul.f32 %v2690, %v2840
    %v3211 = vmul.f32 %v2691, %v2841
    %v3212 = vmul.f32 %v2862, -1.0
    %v3213 = vmul.f32 %v2863, -1.0
    %v3214 = vmul.f32 %v2864, -1.0
    %v3215 = vmul.f32 %v2865, -1.0
    %v3216 = vmul.f32 %v2866, -1.0
    %v3217 = vmul.f32 %v2867, -1.0
    %v3218 = vmul.f32 %v2868, -1.0
    %v3219 = vmul.f32 %v2869, -1.0
    %v3220 = vmul.f32 %v2870, -1.0
    %v3221 = vmul.f32 %v2871, -1.0
    %v3222 = vmul.f32 %v3212, %v2892
    %v3223 = vmul.f32 %v3213, %v2893
    %v3224 = vmul.f32 %v3214, %v2894
    %v3225 = vmul.f32 %v3215, %v2895
    %v3226 = vmul.f32 %v3216, %v2896
    %v3227 = vmul.f32 %v3217, %v2897
    %v3228 = vmul.f32 %v3218, %v2898
    %v3229 = vmul.f32 %v3219, %v2899
    %v3230 = vmul.f32 %v3220, %v2900
    %v3231 = vmul.f32 %v3221, %v2901
    %v3232 = vadd.f32 %v3202, %v3222
    %v3233 = vadd.f32 %v3203, %v3223
    %v3234 = vadd.f32 %v3204, %v3224
    %v3235 = vadd.f32 %v3205, %v3225
    %v3236 = vadd.f32 %v3206, %v3226
    %v3237 = vadd.f32 %v3207, %v3227
    %v3238 = vadd.f32 %v3208, %v3228
    %v3239 = vadd.f32 %v3209, %v3229
    %v3240 = vadd.f32 %v3210, %v3230
    %v3241 = vadd.f32 %v3211, %v3231
    %v3242 = vmul.f32 %v2742, %v2892
    %v3243 = vmul.f32 %v2743, %v2893
    %v3244 = vmul.f32 %v2744, %v2894
    %v3245 = vmul.f32 %v2745, %v2895
    %v3246 = vmul.f32 %v2746, %v2896
    %v3247 = vmul.f32 %v2747, %v2897
    %v3248 = vmul.f32 %v2748, %v2898
    %v3249 = vmul.f32 %v2749, %v2899
    %v3250 = vmul.f32 %v2750, %v2900
    %v3251 = vmul.f32 %v2751, %v2901
    %v3252 = vmul.f32 %v2922, -1.0
    %v3253 = vmul.f32 %v2923, -1.0
    %v3254 = vmul.f32 %v2924, -1.0
    %v3255 = vmul.f32 %v2925, -1.0
    %v3256 = vmul.f32 %v2926, -1.0
    %v3257 = vmul.f32 %v2927, -1.0
    %v3258 = vmul.f32 %v2928, -1.0
    %v3259 = vmul.f32 %v2929, -1.0
    %v3260 = vmul.f32 %v2930, -1.0
    %v3261 = vmul.f32 %v2931, -1.0
    %v3262 = vmul.f32 %v3252, %v2952
    %v3263 = vmul.f32 %v3253, %v2953
    %v3264 = vmul.f32 %v3254, %v2954
    %v3265 = vmul.f32 %v3255, %v2955
    %v3266 = vmul.f32 %v3256, %v2956
    %v3267 = vmul.f32 %v3257, %v2957
    %v3268 = vmul.f32 %v3258, %v2958
    %v3269 = vmul.f32 %v3259, %v2959
    %v3270 = vmul.f32 %v3260, %v2960
    %v3271 = vmul.f32 %v3261, %v2961
    %v3272 = vadd.f32 %v3242, %v3262
    %v3273 = vadd.f32 %v3243, %v3263
    %v3274 = vadd.f32 %v3244, %v3264
    %v3275 = vadd.f32 %v3245, %v3265
    %v3276 = vadd.f32 %v3246, %v3266
    %v3277 = vadd.f32 %v3247, %v3267
    %v3278 = vadd.f32 %v3248, %v3268
    %v3279 = vadd.f32 %v3249, %v3269
    %v3280 = vadd.f32 %v3250, %v3270
    %v3281 = vadd.f32 %v3251, %v3271
    %v3282 = vmul.f32 %v2412, 0.6666667
    %v3283 = vmul.f32 %v2413, 0.6666667
    %v3284 = vmul.f32 %v2414, 0.6666667
    %v3285 = vmul.f32 %v2415, 0.6666667
    %v3286 = vmul.f32 %v2416, 0.6666667
    %v3287 = vmul.f32 %v2417, 0.6666667
    %v3288 = vmul.f32 %v2418, 0.6666667
    %v3289 = vmul.f32 %v2419, 0.6666667
    %v3290 = vmul.f32 %v2420, 0.6666667
    %v3291 = vmul.f32 %v2421, 0.6666667
    %v3292 = vmul.f32 %v3282, %v2992
    %v3293 = vmul.f32 %v3283, %v2993
    %v3294 = vmul.f32 %v3284, %v2994
    %v3295 = vmul.f32 %v3285, %v2995
    %v3296 = vmul.f32 %v3286, %v2996
    %v3297 = vmul.f32 %v3287, %v2997
    %v3298 = vmul.f32 %v3288, %v2998
    %v3299 = vmul.f32 %v3289, %v2999
    %v3300 = vmul.f32 %v3290, %v3000
    %v3301 = vmul.f32 %v3291, %v3001
    %v3302 = vmul.f32 %v2572, -0.6666667
    %v3303 = vmul.f32 %v2573, -0.6666667
    %v3304 = vmul.f32 %v2574, -0.6666667
    %v3305 = vmul.f32 %v2575, -0.6666667
    %v3306 = vmul.f32 %v2576, -0.6666667
    %v3307 = vmul.f32 %v2577, -0.6666667
    %v3308 = vmul.f32 %v2578, -0.6666667
    %v3309 = vmul.f32 %v2579, -0.6666667
    %v3310 = vmul.f32 %v2580, -0.6666667
    %v3311 = vmul.f32 %v2581, -0.6666667
    %v3312 = vmul.f32 %v3302, %v3032
    %v3313 = vmul.f32 %v3303, %v3033
    %v3314 = vmul.f32 %v3304, %v3034
    %v3315 = vmul.f32 %v3305, %v3035
    %v3316 = vmul.f32 %v3306, %v3036
    %v3317 = vmul.f32 %v3307, %v3037
    %v3318 = vmul.f32 %v3308, %v3038
    %v3319 = vmul.f32 %v3309, %v3039
    %v3320 = vmul.f32 %v3310, %v3040
    %v3321 = vmul.f32 %v3311, %v3041
    %v3322 = vadd.f32 %v3292, %v3312
    %v3323 = vadd.f32 %v3293, %v3313
    %v3324 = vadd.f32 %v3294, %v3314
    %v3325 = vadd.f32 %v3295, %v3315
    %v3326 = vadd.f32 %v3296, %v3316
    %v3327 = vadd.f32 %v3297, %v3317
    %v3328 = vadd.f32 %v3298, %v3318
    %v3329 = vadd.f32 %v3299, %v3319
    %v3330 = vadd.f32 %v3300, %v3320
    %v3331 = vadd.f32 %v3301, %v3321
    %v3332 = vmul.f32 %v2482, 0.6666667
    %v3333 = vmul.f32 %v2483, 0.6666667
    %v3334 = vmul.f32 %v2484, 0.6666667
    %v3335 = vmul.f32 %v2485, 0.6666667
    %v3336 = vmul.f32 %v2486, 0.6666667
    %v3337 = vmul.f32 %v2487, 0.6666667
    %v3338 = vmul.f32 %v2488, 0.6666667
    %v3339 = vmul.f32 %v2489, 0.6666667
    %v3340 = vmul.f32 %v2490, 0.6666667
    %v3341 = vmul.f32 %v2491, 0.6666667
    %v3342 = vmul.f32 %v3332, %v3032
    %v3343 = vmul.f32 %v3333, %v3033
    %v3344 = vmul.f32 %v3334, %v3034
    %v3345 = vmul.f32 %v3335, %v3035
    %v3346 = vmul.f32 %v3336, %v3036
    %v3347 = vmul.f32 %v3337, %v3037
    %v3348 = vmul.f32 %v3338, %v3038
    %v3349 = vmul.f32 %v3339, %v3039
    %v3350 = vmul.f32 %v3340, %v3040
    %v3351 = vmul.f32 %v3341, %v3041
    %v3352 = vmul.f32 %v1872, -0.6666667
    %v3353 = vmul.f32 %v1873, -0.6666667
    %v3354 = vmul.f32 %v1874, -0.6666667
    %v3355 = vmul.f32 %v1875, -0.6666667
    %v3356 = vmul.f32 %v1876, -0.6666667
    %v3357 = vmul.f32 %v1877, -0.6666667
    %v3358 = vmul.f32 %v1878, -0.6666667
    %v3359 = vmul.f32 %v1879, -0.6666667
    %v3360 = vmul.f32 %v1880, -0.6666667
    %v3361 = vmul.f32 %v1881, -0.6666667
    %v3362 = vmul.f32 %v3352, %v3072
    %v3363 = vmul.f32 %v3353, %v3073
    %v3364 = vmul.f32 %v3354, %v3074
    %v3365 = vmul.f32 %v3355, %v3075
    %v3366 = vmul.f32 %v3356, %v3076
    %v3367 = vmul.f32 %v3357, %v3077
    %v3368 = vmul.f32 %v3358, %v3078
    %v3369 = vmul.f32 %v3359, %v3079
    %v3370 = vmul.f32 %v3360, %v3080
    %v3371 = vmul.f32 %v3361, %v3081
    %v3372 = vadd.f32 %v3342, %v3362
    %v3373 = vadd.f32 %v3343, %v3363
    %v3374 = vadd.f32 %v3344, %v3364
    %v3375 = vadd.f32 %v3345, %v3365
    %v3376 = vadd.f32 %v3346, %v3366
    %v3377 = vadd.f32 %v3347, %v3367
    %v3378 = vadd.f32 %v3348, %v3368
    %v3379 = vadd.f32 %v3349, %v3369
    %v3380 = vadd.f32 %v3350, %v3370
    %v3381 = vadd.f32 %v3351, %v3371
    %v3382 = vmul.f32 %v2442, 0.6666667
    %v3383 = vmul.f32 %v2443, 0.6666667
    %v3384 = vmul.f32 %v2444, 0.6666667
    %v3385 = vmul.f32 %v2445, 0.6666667
    %v3386 = vmul.f32 %v2446, 0.6666667
    %v3387 = vmul.f32 %v2447, 0.6666667
    %v3388 = vmul.f32 %v2448, 0.6666667
    %v3389 = vmul.f32 %v2449, 0.6666667
    %v3390 = vmul.f32 %v2450, 0.6666667
    %v3391 = vmul.f32 %v2451, 0.6666667
    %v3392 = vmul.f32 %v3382, %v3072
    %v3393 = vmul.f32 %v3383, %v3073
    %v3394 = vmul.f32 %v3384, %v3074
    %v3395 = vmul.f32 %v3385, %v3075
    %v3396 = vmul.f32 %v3386, %v3076
    %v3397 = vmul.f32 %v3387, %v3077
    %v3398 = vmul.f32 %v3388, %v3078
    %v3399 = vmul.f32 %v3389, %v3079
    %v3400 = vmul.f32 %v3390, %v3080
    %v3401 = vmul.f32 %v3391, %v3081
    %v3402 = vmul.f32 %v2682, -0.6666667
    %v3403 = vmul.f32 %v2683, -0.6666667
    %v3404 = vmul.f32 %v2684, -0.6666667
    %v3405 = vmul.f32 %v2685, -0.6666667
    %v3406 = vmul.f32 %v2686, -0.6666667
    %v3407 = vmul.f32 %v2687, -0.6666667
    %v3408 = vmul.f32 %v2688, -0.6666667
    %v3409 = vmul.f32 %v2689, -0.6666667
    %v3410 = vmul.f32 %v2690, -0.6666667
    %v3411 = vmul.f32 %v2691, -0.6666667
    %v3412 = vmul.f32 %v3402, %v3112
    %v3413 = vmul.f32 %v3403, %v3113
    %v3414 = vmul.f32 %v3404, %v3114
    %v3415 = vmul.f32 %v3405, %v3115
    %v3416 = vmul.f32 %v3406, %v3116
    %v3417 = vmul.f32 %v3407, %v3117
    %v3418 = vmul.f32 %v3408, %v3118
    %v3419 = vmul.f32 %v3409, %v3119
    %v3420 = vmul.f32 %v3410, %v3120
    %v3421 = vmul.f32 %v3411, %v3121
    %v3422 = vadd.f32 %v3392, %v3412
    %v3423 = vadd.f32 %v3393, %v3413
    %v3424 = vadd.f32 %v3394, %v3414
    %v3425 = vadd.f32 %v3395, %v3415
    %v3426 = vadd.f32 %v3396, %v3416
    %v3427 = vadd.f32 %v3397, %v3417
    %v3428 = vadd.f32 %v3398, %v3418
    %v3429 = vadd.f32 %v3399, %v3419
    %v3430 = vadd.f32 %v3400, %v3420
    %v3431 = vadd.f32 %v3401, %v3421
    %v3432 = vmul.f32 %v2512, 0.6666667
    %v3433 = vmul.f32 %v2513, 0.6666667
    %v3434 = vmul.f32 %v2514, 0.6666667
    %v3435 = vmul.f32 %v2515, 0.6666667
    %v3436 = vmul.f32 %v2516, 0.6666667
    %v3437 = vmul.f32 %v2517, 0.6666667
    %v3438 = vmul.f32 %v2518, 0.6666667
    %v3439 = vmul.f32 %v2519, 0.6666667
    %v3440 = vmul.f32 %v2520, 0.6666667
    %v3441 = vmul.f32 %v2521, 0.6666667
    %v3442 = vmul.f32 %v3432, %v3112
    %v3443 = vmul.f32 %v3433, %v3113
    %v3444 = vmul.f32 %v3434, %v3114
    %v3445 = vmul.f32 %v3435, %v3115
    %v3446 = vmul.f32 %v3436, %v3116
    %v3447 = vmul.f32 %v3437, %v3117
    %v3448 = vmul.f32 %v3438, %v3118
    %v3449 = vmul.f32 %v3439, %v3119
    %v3450 = vmul.f32 %v3440, %v3120
    %v3451 = vmul.f32 %v3441, %v3121
    %v3452 = vmul.f32 %v2742, -0.6666667
    %v3453 = vmul.f32 %v2743, -0.6666667
    %v3454 = vmul.f32 %v2744, -0.6666667
    %v3455 = vmul.f32 %v2745, -0.6666667
    %v3456 = vmul.f32 %v2746, -0.6666667
    %v3457 = vmul.f32 %v2747, -0.6666667
    %v3458 = vmul.f32 %v2748, -0.6666667
    %v3459 = vmul.f32 %v2749, -0.6666667
    %v3460 = vmul.f32 %v2750, -0.6666667
    %v3461 = vmul.f32 %v2751, -0.6666667
    %v3462 = vmul.f32 %v3452, %v3152
    %v3463 = vmul.f32 %v3453, %v3153
    %v3464 = vmul.f32 %v3454, %v3154
    %v3465 = vmul.f32 %v3455, %v3155
    %v3466 = vmul.f32 %v3456, %v3156
    %v3467 = vmul.f32 %v3457, %v3157
    %v3468 = vmul.f32 %v3458, %v3158
    %v3469 = vmul.f32 %v3459, %v3159
    %v3470 = vmul.f32 %v3460, %v3160
    %v3471 = vmul.f32 %v3461, %v3161
    %v3472 = vadd.f32 %v3442, %v3462
    %v3473 = vadd.f32 %v3443, %v3463
    %v3474 = vadd.f32 %v3444, %v3464
    %v3475 = vadd.f32 %v3445, %v3465
    %v3476 = vadd.f32 %v3446, %v3466
    %v3477 = vadd.f32 %v3447, %v3467
    %v3478 = vadd.f32 %v3448, %v3468
    %v3479 = vadd.f32 %v3449, %v3469
    %v3480 = vadd.f32 %v3450, %v3470
    %v3481 = vadd.f32 %v3451, %v3471
    %v3482 = vmul.f32 %v2572, 0.6666667
    %v3483 = vmul.f32 %v2573, 0.6666667
    %v3484 = vmul.f32 %v2574, 0.6666667
    %v3485 = vmul.f32 %v2575, 0.6666667
    %v3486 = vmul.f32 %v2576, 0.6666667
    %v3487 = vmul.f32 %v2577, 0.6666667
    %v3488 = vmul.f32 %v2578, 0.6666667
    %v3489 = vmul.f32 %v2579, 0.6666667
    %v3490 = vmul.f32 %v2580, 0.6666667
    %v3491 = vmul.f32 %v2581, 0.6666667
    %v3492 = vmul.f32 %v3482, %v3152
    %v3493 = vmul.f32 %v3483, %v3153
    %v3494 = vmul.f32 %v3484, %v3154
    %v3495 = vmul.f32 %v3485, %v3155
    %v3496 = vmul.f32 %v3486, %v3156
    %v3497 = vmul.f32 %v3487, %v3157
    %v3498 = vmul.f32 %v3488, %v3158
    %v3499 = vmul.f32 %v3489, %v3159
    %v3500 = vmul.f32 %v3490, %v3160
    %v3501 = vmul.f32 %v3491, %v3161
    %v3502 = vmul.f32 %v2802, -0.6666667
    %v3503 = vmul.f32 %v2803, -0.6666667
    %v3504 = vmul.f32 %v2804, -0.6666667
    %v3505 = vmul.f32 %v2805, -0.6666667
    %v3506 = vmul.f32 %v2806, -0.6666667
    %v3507 = vmul.f32 %v2807, -0.6666667
    %v3508 = vmul.f32 %v2808, -0.6666667
    %v3509 = vmul.f32 %v2809, -0.6666667
    %v3510 = vmul.f32 %v2810, -0.6666667
    %v3511 = vmul.f32 %v2811, -0.6666667
    %v3512 = vmul.f32 %v3502, %v3192
    %v3513 = vmul.f32 %v3503, %v3193
    %v3514 = vmul.f32 %v3504, %v3194
    %v3515 = vmul.f32 %v3505, %v3195
    %v3516 = vmul.f32 %v3506, %v3196
    %v3517 = vmul.f32 %v3507, %v3197
    %v3518 = vmul.f32 %v3508, %v3198
    %v3519 = vmul.f32 %v3509, %v3199
    %v3520 = vmul.f32 %v3510, %v3200
    %v3521 = vmul.f32 %v3511, %v3201
    %v3522 = vadd.f32 %v3492, %v3512
    %v3523 = vadd.f32 %v3493, %v3513
    %v3524 = vadd.f32 %v3494, %v3514
    %v3525 = vadd.f32 %v3495, %v3515
    %v3526 = vadd.f32 %v3496, %v3516
    %v3527 = vadd.f32 %v3497, %v3517
    %v3528 = vadd.f32 %v3498, %v3518
    %v3529 = vadd.f32 %v3499, %v3519
    %v3530 = vadd.f32 %v3500, %v3520
    %v3531 = vadd.f32 %v3501, %v3521
    %v3532 = vmul.f32 %v1872, 0.6666667
    %v3533 = vmul.f32 %v1873, 0.6666667
    %v3534 = vmul.f32 %v1874, 0.6666667
    %v3535 = vmul.f32 %v1875, 0.6666667
    %v3536 = vmul.f32 %v1876, 0.6666667
    %v3537 = vmul.f32 %v1877, 0.6666667
    %v3538 = vmul.f32 %v1878, 0.6666667
    %v3539 = vmul.f32 %v1879, 0.6666667
    %v3540 = vmul.f32 %v1880, 0.6666667
    %v3541 = vmul.f32 %v1881, 0.6666667
    %v3542 = vmul.f32 %v3532, %v3192
    %v3543 = vmul.f32 %v3533, %v3193
    %v3544 = vmul.f32 %v3534, %v3194
    %v3545 = vmul.f32 %v3535, %v3195
    %v3546 = vmul.f32 %v3536, %v3196
    %v3547 = vmul.f32 %v3537, %v3197
    %v3548 = vmul.f32 %v3538, %v3198
    %v3549 = vmul.f32 %v3539, %v3199
    %v3550 = vmul.f32 %v3540, %v3200
    %v3551 = vmul.f32 %v3541, %v3201
    %v3552 = vmul.f32 %v2862, -0.6666667
    %v3553 = vmul.f32 %v2863, -0.6666667
    %v3554 = vmul.f32 %v2864, -0.6666667
    %v3555 = vmul.f32 %v2865, -0.6666667
    %v3556 = vmul.f32 %v2866, -0.6666667
    %v3557 = vmul.f32 %v2867, -0.6666667
    %v3558 = vmul.f32 %v2868, -0.6666667
    %v3559 = vmul.f32 %v2869, -0.6666667
    %v3560 = vmul.f32 %v2870, -0.6666667
    %v3561 = vmul.f32 %v2871, -0.6666667
    %v3562 = vmul.f32 %v3552, %v3232
    %v3563 = vmul.f32 %v3553, %v3233
    %v3564 = vmul.f32 %v3554, %v3234
    %v3565 = vmul.f32 %v3555, %v3235
    %v3566 = vmul.f32 %v3556, %v3236
    %v3567 = vmul.f32 %v3557, %v3237
    %v3568 = vmul.f32 %v3558, %v3238
    %v3569 = vmul.f32 %v3559, %v3239
    %v3570 = vmul.f32 %v3560, %v3240
    %v3571 = vmul.f32 %v3561, %v3241
    %v3572 = vadd.f32 %v3542, %v3562
    %v3573 = vadd.f32 %v3543, %v3563
    %v3574 = vadd.f32 %v3544, %v3564
    %v3575 = vadd.f32 %v3545, %v3565
    %v3576 = vadd.f32 %v3546, %v3566
    %v3577 = vadd.f32 %v3547, %v3567
    %v3578 = vadd.f32 %v3548, %v3568
    %v3579 = vadd.f32 %v3549, %v3569
    %v3580 = vadd.f32 %v3550, %v3570
    %v3581 = vadd.f32 %v3551, %v3571
    %v3582 = vmul.f32 %v2682, 0.6666667
    %v3583 = vmul.f32 %v2683, 0.6666667
    %v3584 = vmul.f32 %v2684, 0.6666667
    %v3585 = vmul.f32 %v2685, 0.6666667
    %v3586 = vmul.f32 %v2686, 0.6666667
    %v3587 = vmul.f32 %v2687, 0.6666667
    %v3588 = vmul.f32 %v2688, 0.6666667
    %v3589 = vmul.f32 %v2689, 0.6666667
    %v3590 = vmul.f32 %v2690, 0.6666667
    %v3591 = vmul.f32 %v2691, 0.6666667
    %v3592 = vmul.f32 %v3582, %v3232
    %v3593 = vmul.f32 %v3583, %v3233
    %v3594 = vmul.f32 %v3584, %v3234
    %v3595 = vmul.f32 %v3585, %v3235
    %v3596 = vmul.f32 %v3586, %v3236
    %v3597 = vmul.f32 %v3587, %v3237
    %v3598 = vmul.f32 %v3588, %v3238
    %v3599 = vmul.f32 %v3589, %v3239
    %v3600 = vmul.f32 %v3590, %v3240
    %v3601 = vmul.f32 %v3591, %v3241
    %v3602 = vmul.f32 %v2922, -0.6666667
    %v3603 = vmul.f32 %v2923, -0.6666667
    %v3604 = vmul.f32 %v2924, -0.6666667
    %v3605 = vmul.f32 %v2925, -0.6666667
    %v3606 = vmul.f32 %v2926, -0.6666667
    %v3607 = vmul.f32 %v2927, -0.6666667
    %v3608 = vmul.f32 %v2928, -0.6666667
    %v3609 = vmul.f32 %v2929, -0.6666667
    %v3610 = vmul.f32 %v2930, -0.6666667
    %v3611 = vmul.f32 %v2931, -0.6666667
    %v3612 = vmul.f32 %v3602, %v3272
    %v3613 = vmul.f32 %v3603, %v3273
    %v3614 = vmul.f32 %v3604, %v3274
    %v3615 = vmul.f32 %v3605, %v3275
    %v3616 = vmul.f32 %v3606, %v3276
    %v3617 = vmul.f32 %v3607, %v3277
    %v3618 = vmul.f32 %v3608, %v3278
    %v3619 = vmul.f32 %v3609, %v3279
    %v3620 = vmul.f32 %v3610, %v3280
    %v3621 = vmul.f32 %v3611, %v3281
    %v3622 = vadd.f32 %v3592, %v3612
    %v3623 = vadd.f32 %v3593, %v3613
    %v3624 = vadd.f32 %v3594, %v3614
    %v3625 = vadd.f32 %v3595, %v3615
    %v3626 = vadd.f32 %v3596, %v3616
    %v3627 = vadd.f32 %v3597, %v3617
    %v3628 = vadd.f32 %v3598, %v3618
    %v3629 = vadd.f32 %v3599, %v3619
    %v3630 = vadd.f32 %v3600, %v3620
    %v3631 = vadd.f32 %v3601, %v3621
    %3632 = vst [vmem:[#allocation2 + $0xb0] sm:$0xff] %v3322
    %3633 = vst [vmem:[#allocation2 + $0xb8] sm:$0xff] %v3323
    %3634 = vst [vmem:[#allocation2 + $0xd0] sm:$0xff] %v3324
    %3635 = vst [vmem:[#allocation2 + $0xd8] sm:$0xff] %v3325
    %3636 = vst [vmem:[#allocation2 + $0xf0] sm:$0xff] %v3326
    %3637 = vst [vmem:[#allocation2 + $0xf8] sm:$0xff] %v3327
    %3638 = vst [vmem:[#allocation2 + $0x110] sm:$0xff] %v3328
    %3639 = vst [vmem:[#allocation2 + $0x118] sm:$0xff] %v3329
    %3640 = vst [vmem:[#allocation2 + $0x130] sm:$0xff] %v3330
    %3641 = vst [vmem:[#allocation2 + $0x138] sm:$0xff] %v3331
    %3642 = vst [vmem:[#allocation2 + $0x150] sm:$0xff] %v3372
    %3643 = vst [vmem:[#allocation2 + $0x158] sm:$0xff] %v3373
    %3644 = vst [vmem:[#allocation2 + $0x170] sm:$0xff] %v3374
    %3645 = vst [vmem:[#allocation2 + $0x178] sm:$0xff] %v3375
    %3646 = vst [vmem:[#allocation2 + $0x190] sm:$0xff] %v3376
    %3647 = vst [vmem:[#allocation2 + $0x198] sm:$0xff] %v3377
    %3648 = vst [vmem:[#allocation2 + $0x1b0] sm:$0xff] %v3378
    %3649 = vst [vmem:[#allocation2 + $0x1b8] sm:$0xff] %v3379
    %3650 = vst [vmem:[#allocation2 + $0x1d0] sm:$0xff] %v3380
    %3651 = vst [vmem:[#allocation2 + $0x1d8] sm:$0xff] %v3381
    %3652 = vst [vmem:[#allocation2 + $0x1f0] sm:$0xff] %v3422
    %3653 = vst [vmem:[#allocation2 + $0x1f8] sm:$0xff] %v3423
    %3654 = vst [vmem:[#allocation2 + $0x210] sm:$0xff] %v3424
    %3655 = vst [vmem:[#allocation2 + $0x218] sm:$0xff] %v3425
    %3656 = vst [vmem:[#allocation2 + $0x230] sm:$0xff] %v3426
    %3657 = vst [vmem:[#allocation2 + $0x238] sm:$0xff] %v3427
    %3658 = vst [vmem:[#allocation2 + $0x250] sm:$0xff] %v3428
    %3659 = vst [vmem:[#allocation2 + $0x258] sm:$0xff] %v3429
    %3660 = vst [vmem:[#allocation2 + $0x270] sm:$0xff] %v3430
    %3661 = vst [vmem:[#allocation2 + $0x278] sm:$0xff] %v3431
    %3662 = vst [vmem:[#allocation2 + $0x290] sm:$0xff] %v3472
    %3663 = vst [vmem:[#allocation2 + $0x298] sm:$0xff] %v3473
    %3664 = vst [vmem:[#allocation2 + $0x2b0] sm:$0xff] %v3474
    %3665 = vst [vmem:[#allocation2 + $0x2b8] sm:$0xff] %v3475
    %3666 = vst [vmem:[#allocation2 + $0x2d0] sm:$0xff] %v3476
    %3667 = vst [vmem:[#allocation2 + $0x2d8] sm:$0xff] %v3477
    %3668 = vst [vmem:[#allocation2 + $0x2f0] sm:$0xff] %v3478
    %3669 = vst [vmem:[#allocation2 + $0x2f8] sm:$0xff] %v3479
    %3670 = vst [vmem:[#allocation2 + $0x310] sm:$0xff] %v3480
    %3671 = vst [vmem:[#allocation2 + $0x318] sm:$0xff] %v3481
    %3672 = vst [vmem:[#allocation2 + $0x330] sm:$0xff] %v3522
    %3673 = vst [vmem:[#allocation2 + $0x338] sm:$0xff] %v3523
    %3674 = vst [vmem:[#allocation2 + $0x350] sm:$0xff] %v3524
    %3675 = vst [vmem:[#allocation2 + $0x358] sm:$0xff] %v3525
    %3676 = vst [vmem:[#allocation2 + $0x370] sm:$0xff] %v3526
    %3677 = vst [vmem:[#allocation2 + $0x378] sm:$0xff] %v3527
    %3678 = vst [vmem:[#allocation2 + $0x390] sm:$0xff] %v3528
    %3679 = vst [vmem:[#allocation2 + $0x398] sm:$0xff] %v3529
    %3680 = vst [vmem:[#allocation2 + $0x3b0] sm:$0xff] %v3530
    %3681 = vst [vmem:[#allocation2 + $0x3b8] sm:$0xff] %v3531
    %3682 = vst [vmem:[#allocation2 + $0x3d0] sm:$0xff] %v3572
    %3683 = vst [vmem:[#allocation2 + $0x3d8] sm:$0xff] %v3573
    %3684 = vst [vmem:[#allocation2 + $0x3f0] sm:$0xff] %v3574
    %3685 = vst [vmem:[#allocation2 + $0x3f8] sm:$0xff] %v3575
    %3686 = vst [vmem:[#allocation2 + $0x410] sm:$0xff] %v3576
    %3687 = vst [vmem:[#allocation2 + $0x418] sm:$0xff] %v3577
    %3688 = vst [vmem:[#allocation2 + $0x430] sm:$0xff] %v3578
    %3689 = vst [vmem:[#allocation2 + $0x438] sm:$0xff] %v3579
    %3690 = vst [vmem:[#allocation2 + $0x450] sm:$0xff] %v3580
    %3691 = vst [vmem:[#allocation2 + $0x458] sm:$0xff] %v3581
    %3692 = vst [vmem:[#allocation2 + $0x470] sm:$0xff] %v3622
    %3693 = vst [vmem:[#allocation2 + $0x478] sm:$0xff] %v3623
    %3694 = vst [vmem:[#allocation2 + $0x490] sm:$0xff] %v3624
    %3695 = vst [vmem:[#allocation2 + $0x498] sm:$0xff] %v3625
    %3696 = vst [vmem:[#allocation2 + $0x4b0] sm:$0xff] %v3626
    %3697 = vst [vmem:[#allocation2 + $0x4b8] sm:$0xff] %v3627
    %3698 = vst [vmem:[#allocation2 + $0x4d0] sm:$0xff] %v3628
    %3699 = vst [vmem:[#allocation2 + $0x4d8] sm:$0xff] %v3629
    %3700 = vst [vmem:[#allocation2 + $0x4f0] sm:$0xff] %v3630
    %3701 = vst [vmem:[#allocation2 + $0x4f8] sm:$0xff] %v3631
    %v3702 = vld [vmem:[#allocation6] sm:$0xff]
    %v3703 = vld [vmem:[#allocation6 + $0x8] sm:$0xff]
    %v3704 = vld [vmem:[#allocation6 + $0x10] sm:$0xff]
    %v3705 = vld [vmem:[#allocation2] sm:$0xff]
    %v3706 = vld [vmem:[#allocation2 + $0x8] sm:$0xff]
    %v3707 = vld [vmem:[#allocation2 + $0x10] sm:$0xff]
    %v3708 = vld [vmem:[#allocation2 + $0x18] sm:$0xff]
    %v3709 = vld [vmem:[#allocation2 + $0x20] sm:$0xff]
    %v3710 = vld [vmem:[#allocation2 + $0x28] sm:$0xff]
    %v3711 = vld [vmem:[#allocation2 + $0x30] sm:$0xff]
    %v3712 = vld [vmem:[#allocation2 + $0x38] sm:$0xff]
    %v3713 = vld [vmem:[#allocation2 + $0x40] sm:$0xff]
    %v3714 = vld [vmem:[#allocation2 + $0x48] sm:$0xff]
    %v3715 = vld [vmem:[#allocation2 + $0x50] sm:$0xff]
    %v3716 = vld [vmem:[#allocation2 + $0x58] sm:$0xff]
    %v3717 = vld [vmem:[#allocation2 + $0x60] sm:$0xff]
    %v3718 = vld [vmem:[#allocation2 + $0x68] sm:$0xff]
    %v3719 = vld [vmem:[#allocation2 + $0x70] sm:$0xff]
    %v3720 = vld [vmem:[#allocation2 + $0x78] sm:$0xff]
    %v3721 = vld [vmem:[#allocation2 + $0x80] sm:$0xff]
    %v3722 = vld [vmem:[#allocation2 + $0x88] sm:$0xff]
    %v3723 = vld [vmem:[#allocation2 + $0x90] sm:$0xff]
    %v3724 = vld [vmem:[#allocation2 + $0x98] sm:$0xff]
    %v3725 = vld [vmem:[#allocation2 + $0xa0] sm:$0xff]
    %v3726 = vld [vmem:[#allocation2 + $0xa8] sm:$0xff]
    %v3727 = vld [vmem:[#allocation2 + $0xb0] sm:$0xff]
    %v3728 = vld [vmem:[#allocation2 + $0xb8] sm:$0xff]
    %v3729 = vld [vmem:[#allocation2 + $0xc0] sm:$0xff]
    %v3730 = vld [vmem:[#allocation2 + $0xc8] sm:$0xff]
    %v3731 = vld [vmem:[#allocation2 + $0xd0] sm:$0xff]
    %v3732 = vld [vmem:[#allocation2 + $0xd8] sm:$0xff]
    %v3733 = vld [vmem:[#allocation2 + $0xe0] sm:$0xff]
    %v3734 = vld [vmem:[#allocation2 + $0xe8] sm:$0xff]
    %v3735 = vld [vmem:[#allocation2 + $0xf0] sm:$0xff]
    %v3736 = vld [vmem:[#allocation2 + $0xf8] sm:$0xff]
    %v3737 = vld [vmem:[#allocation2 + $0x100] sm:$0xff]
    %v3738 = vld [vmem:[#allocation2 + $0x108] sm:$0xff]
    %v3739 = vld [vmem:[#allocation2 + $0x110] sm:$0xff]
    %v3740 = vld [vmem:[#allocation2 + $0x118] sm:$0xff]
    %v3741 = vld [vmem:[#allocation2 + $0x120] sm:$0xff]
    %v3742 = vld [vmem:[#allocation2 + $0x128] sm:$0xff]
    %v3743 = vld [vmem:[#allocation2 + $0x130] sm:$0xff]
    %v3744 = vld [vmem:[#allocation2 + $0x138] sm:$0xff]
    %v3745 = vld [vmem:[#allocation2 + $0x140] sm:$0xff]
    %v3746 = vld [vmem:[#allocation2 + $0x148] sm:$0xff]
    %v3747 = vld [vmem:[#allocation2 + $0x150] sm:$0xff]
    %v3748 = vld [vmem:[#allocation2 + $0x158] sm:$0xff]
    %v3749 = vld [vmem:[#allocation2 + $0x160] sm:$0xff]
    %v3750 = vld [vmem:[#allocation2 + $0x168] sm:$0xff]
    %v3751 = vld [vmem:[#allocation2 + $0x170] sm:$0xff]
    %v3752 = vld [vmem:[#allocation2 + $0x178] sm:$0xff]
    %v3753 = vld [vmem:[#allocation2 + $0x180] sm:$0xff]
    %v3754 = vld [vmem:[#allocation2 + $0x188] sm:$0xff]
    %v3755 = vld [vmem:[#allocation2 + $0x190] sm:$0xff]
    %v3756 = vld [vmem:[#allocation2 + $0x198] sm:$0xff]
    %v3757 = vld [vmem:[#allocation2 + $0x1a0] sm:$0xff]
    %v3758 = vld [vmem:[#allocation2 + $0x1a8] sm:$0xff]
    %v3759 = vld [vmem:[#allocation2 + $0x1b0] sm:$0xff]
    %v3760 = vld [vmem:[#allocation2 + $0x1b8] sm:$0xff]
    %v3761 = vld [vmem:[#allocation2 + $0x1c0] sm:$0xff]
    %v3762 = vld [vmem:[#allocation2 + $0x1c8] sm:$0xff]
    %v3763 = vld [vmem:[#allocation2 + $0x1d0] sm:$0xff]
    %v3764 = vld [vmem:[#allocation2 + $0x1d8] sm:$0xff]
    %v3765 = vld [vmem:[#allocation2 + $0x1e0] sm:$0xff]
    %v3766 = vld [vmem:[#allocation2 + $0x1e8] sm:$0xff]
    %v3767 = vld [vmem:[#allocation2 + $0x1f0] sm:$0xff]
    %v3768 = vld [vmem:[#allocation2 + $0x1f8] sm:$0xff]
    %v3769 = vld [vmem:[#allocation2 + $0x200] sm:$0xff]
    %v3770 = vld [vmem:[#allocation2 + $0x208] sm:$0xff]
    %v3771 = vld [vmem:[#allocation2 + $0x210] sm:$0xff]
    %v3772 = vld [vmem:[#allocation2 + $0x218] sm:$0xff]
    %v3773 = vld [vmem:[#allocation2 + $0x220] sm:$0xff]
    %v3774 = vld [vmem:[#allocation2 + $0x228] sm:$0xff]
    %v3775 = vld [vmem:[#allocation2 + $0x230] sm:$0xff]
    %v3776 = vld [vmem:[#allocation2 + $0x238] sm:$0xff]
    %v3777 = vld [vmem:[#allocation2 + $0x240] sm:$0xff]
    %v3778 = vld [vmem:[#allocation2 + $0x248] sm:$0xff]
    %v3779 = vld [vmem:[#allocation2 + $0x250] sm:$0xff]
    %v3780 = vld [vmem:[#allocation2 + $0x258] sm:$0xff]
    %v3781 = vld [vmem:[#allocation2 + $0x260] sm:$0xff]
    %v3782 = vld [vmem:[#allocation2 + $0x268] sm:$0xff]
    %v3783 = vld [vmem:[#allocation2 + $0x270] sm:$0xff]
    %v3784 = vld [vmem:[#allocation2 + $0x278] sm:$0xff]
    %v3785 = vld [vmem:[#allocation2 + $0x280] sm:$0xff]
    %v3786 = vld [vmem:[#allocation2 + $0x288] sm:$0xff]
    %v3787 = vld [vmem:[#allocation2 + $0x290] sm:$0xff]
    %v3788 = vld [vmem:[#allocation2 + $0x298] sm:$0xff]
    %v3789 = vld [vmem:[#allocation2 + $0x2a0] sm:$0xff]
    %v3790 = vld [vmem:[#allocation2 + $0x2a8] sm:$0xff]
    %v3791 = vld [vmem:[#allocation2 + $0x2b0] sm:$0xff]
    %v3792 = vld [vmem:[#allocation2 + $0x2b8] sm:$0xff]
    %v3793 = vld [vmem:[#allocation2 + $0x2c0] sm:$0xff]
    %v3794 = vld [vmem:[#allocation2 + $0x2c8] sm:$0xff]
    %v3795 = vld [vmem:[#allocation2 + $0x2d0] sm:$0xff]
    %v3796 = vld [vmem:[#allocation2 + $0x2d8] sm:$0xff]
    %v3797 = vld [vmem:[#allocation2 + $0x2e0] sm:$0xff]
    %v3798 = vld [vmem:[#allocation2 + $0x2e8] sm:$0xff]
    %v3799 = vld [vmem:[#allocation2 + $0x2f0] sm:$0xff]
    %v3800 = vld [vmem:[#allocation2 + $0x2f8] sm:$0xff]
    %v3801 = vld [vmem:[#allocation2 + $0x300] sm:$0xff]
    %v3802 = vld [vmem:[#allocation2 + $0x308] sm:$0xff]
    %v3803 = vld [vmem:[#allocation2 + $0x310] sm:$0xff]
    %v3804 = vld [vmem:[#allocation2 + $0x318] sm:$0xff]
    %v3805 = vld [vmem:[#allocation2 + $0x320] sm:$0xff]
    %v3806 = vld [vmem:[#allocation2 + $0x328] sm:$0xff]
    %v3807 = vld [vmem:[#allocation2 + $0x330] sm:$0xff]
    %v3808 = vld [vmem:[#allocation2 + $0x338] sm:$0xff]
    %v3809 = vld [vmem:[#allocation2 + $0x340] sm:$0xff]
    %v3810 = vld [vmem:[#allocation2 + $0x348] sm:$0xff]
    %v3811 = vld [vmem:[#allocation2 + $0x350] sm:$0xff]
    %v3812 = vld [vmem:[#allocation2 + $0x358] sm:$0xff]
    %v3813 = vld [vmem:[#allocation2 + $0x360] sm:$0xff]
    %v3814 = vld [vmem:[#allocation2 + $0x368] sm:$0xff]
    %v3815 = vld [vmem:[#allocation2 + $0x370] sm:$0xff]
    %v3816 = vld [vmem:[#allocation2 + $0x378] sm:$0xff]
    %v3817 = vld [vmem:[#allocation2 + $0x380] sm:$0xff]
    %v3818 = vld [vmem:[#allocation2 + $0x388] sm:$0xff]
    %v3819 = vld [vmem:[#allocation2 + $0x390] sm:$0xff]
    %v3820 = vld [vmem:[#allocation2 + $0x398] sm:$0xff]
    %v3821 = vld [vmem:[#allocation2 + $0x3a0] sm:$0xff]
    %v3822 = vld [vmem:[#allocation2 + $0x3a8] sm:$0xff]
    %v3823 = vld [vmem:[#allocation2 + $0x3b0] sm:$0xff]
    %v3824 = vld [vmem:[#allocation2 + $0x3b8] sm:$0xff]
    %v3825 = vld [vmem:[#allocation2 + $0x3c0] sm:$0xff]
    %v3826 = vld [vmem:[#allocation2 + $0x3c8] sm:$0xff]
    %v3827 = vld [vmem:[#allocation2 + $0x3d0] sm:$0xff]
    %v3828 = vld [vmem:[#allocation2 + $0x3d8] sm:$0xff]
    %v3829 = vld [vmem:[#allocation2 + $0x3e0] sm:$0xff]
    %v3830 = vld [vmem:[#allocation2 + $0x3e8] sm:$0xff]
    %v3831 = vld [vmem:[#allocation2 + $0x3f0] sm:$0xff]
    %v3832 = vld [vmem:[#allocation2 + $0x3f8] sm:$0xff]
    %v3833 = vld [vmem:[#allocation2 + $0x400] sm:$0xff]
    %v3834 = vld [vmem:[#allocation2 + $0x408] sm:$0xff]
    %v3835 = vld [vmem:[#allocation2 + $0x410] sm:$0xff]
    %v3836 = vld [vmem:[#allocation2 + $0x418] sm:$0xff]
    %v3837 = vld [vmem:[#allocation2 + $0x420] sm:$0xff]
    %v3838 = vld [vmem:[#allocation2 + $0x428] sm:$0xff]
    %v3839 = vld [vmem:[#allocation2 + $0x430] sm:$0xff]
    %v3840 = vld [vmem:[#allocation2 + $0x438] sm:$0xff]
    %v3841 = vld [vmem:[#allocation2 + $0x440] sm:$0xff]
    %v3842 = vld [vmem:[#allocation2 + $0x448] sm:$0xff]
    %v3843 = vld [vmem:[#allocation2 + $0x450] sm:$0xff]
    %v3844 = vld [vmem:[#allocation2 + $0x458] sm:$0xff]
    %v3845 = vld [vmem:[#allocation2 + $0x460] sm:$0xff]
    %v3846 = vld [vmem:[#allocation2 + $0x468] sm:$0xff]
    %v3847 = vld [vmem:[#allocation2 + $0x470] sm:$0xff]
    %v3848 = vld [vmem:[#allocation2 + $0x478] sm:$0xff]
    %v3849 = vld [vmem:[#allocation2 + $0x480] sm:$0xff]
    %v3850 = vld [vmem:[#allocation2 + $0x488] sm:$0xff]
    %v3851 = vld [vmem:[#allocation2 + $0x490] sm:$0xff]
    %v3852 = vld [vmem:[#allocation2 + $0x498] sm:$0xff]
    %v3853 = vld [vmem:[#allocation2 + $0x4a0] sm:$0xff]
    %v3854 = vld [vmem:[#allocation2 + $0x4a8] sm:$0xff]
    %v3855 = vld [vmem:[#allocation2 + $0x4b0] sm:$0xff]
    %v3856 = vld [vmem:[#allocation2 + $0x4b8] sm:$0xff]
    %v3857 = vld [vmem:[#allocation2 + $0x4c0] sm:$0xff]
    %v3858 = vld [vmem:[#allocation2 + $0x4c8] sm:$0xff]
    %v3859 = vld [vmem:[#allocation2 + $0x4d0] sm:$0xff]
    %v3860 = vld [vmem:[#allocation2 + $0x4d8] sm:$0xff]
    %v3861 = vld [vmem:[#allocation2 + $0x4e0] sm:$0xff]
    %v3862 = vld [vmem:[#allocation2 + $0x4e8] sm:$0xff]
    %v3863 = vld [vmem:[#allocation2 + $0x4f0] sm:$0xff]
    %v3864 = vld [vmem:[#allocation2 + $0x4f8] sm:$0xff]
    %vm3865 = vcmask 523264
    %v3867 = vsel %vm3865, %v3704, 0
    %3869 = vmatpush.msra.mxu0 %v3765
    %3870 = vmatpush.msra.mxu0 %v3761
    %3871 = vmatpush.msra.mxu0 %v3757
    %3872 = vmatpush.msra.mxu0 %v3753
    %3873 = vmatpush.msra.mxu0 %v3749
    %3874 = vmatpush.msra.mxu0 %v3745
    %3875 = vmatpush.msra.mxu0 %v3741
    %3876 = vmatpush.msra.mxu0 %v3737
    %3877 = vmatpush.msra.mxu0 %v3733
    %3878 = vmatpush.msra.mxu0 %v3729
    %3879 = vmatpush.msra.mxu0 %v3725
    %3880 = vmatpush.msra.mxu0 %v3721
    %3881 = vmatpush.msra.mxu0 %v3717
    %3882 = vmatpush.msra.mxu0 %v3713
    %3883 = vmatpush.msra.mxu0 %v3709
    %3884 = vmatpush.msra.mxu0 %v3705
    %3885 = vmatmul.f32.gmra.mxu0 %v3702
    %v3886 = vpop.f32.mrf.mxu0
    %v3887 = vadd.f32 0.0, %v3886
    %3888 = vdwg.mxu0
    %3889 = vmatpush.msra.mxu0 %v3829
    %3890 = vmatpush.msra.mxu0 %v3825
    %3891 = vmatpush.msra.mxu0 %v3821
    %3892 = vmatpush.msra.mxu0 %v3817
    %3893 = vmatpush.msra.mxu0 %v3813
    %3894 = vmatpush.msra.mxu0 %v3809
    %3895 = vmatpush.msra.mxu0 %v3805
    %3896 = vmatpush.msra.mxu0 %v3801
    %3897 = vmatpush.msra.mxu0 %v3797
    %3898 = vmatpush.msra.mxu0 %v3793
    %3899 = vmatpush.msra.mxu0 %v3789
    %3900 = vmatpush.msra.mxu0 %v3785
    %3901 = vmatpush.msra.mxu0 %v3781
    %3902 = vmatpush.msra.mxu0 %v3777
    %3903 = vmatpush.msra.mxu0 %v3773
    %3904 = vmatpush.msra.mxu0 %v3769
    %3905 = vmatmul.f32.gmra.mxu0 %v3703
    %v3906 = vpop.f32.mrf.mxu0
    %v3907 = vadd.f32 %v3887, %v3906
    %3908 = vdwg.mxu0
    %3909 = vmatpush.msra.mxu0 0.0
    %3910 = vmatpush.msra.mxu0 0.0
    %3911 = vmatpush.msra.mxu0 0.0
    %3912 = vmatpush.msra.mxu0 0.0
    %3913 = vmatpush.msra.mxu0 0.0
    %3914 = vmatpush.msra.mxu0 0.0
    %3915 = vmatpush.msra.mxu0 0.0
    %3916 = vmatpush.msra.mxu0 0.0
    %3917 = vmatpush.msra.mxu0 %v3861
    %3918 = vmatpush.msra.mxu0 %v3857
    %3919 = vmatpush.msra.mxu0 %v3853
    %3920 = vmatpush.msra.mxu0 %v3849
    %3921 = vmatpush.msra.mxu0 %v3845
    %3922 = vmatpush.msra.mxu0 %v3841
    %3923 = vmatpush.msra.mxu0 %v3837
    %3924 = vmatpush.msra.mxu0 %v3833
    %3925 = vmatmul.f32.gmra.mxu0 %v3867
    %v3926 = vpop.f32.mrf.mxu0
    %v3927 = vadd.f32 %v3907, %v3926
    %3928 = vdwg.mxu0
    %3929 = vmatpush.msra.mxu0 %v3766
    %3930 = vmatpush.msra.mxu0 %v3762
    %3931 = vmatpush.msra.mxu0 %v3758
    %3932 = vmatpush.msra.mxu0 %v3754
    %3933 = vmatpush.msra.mxu0 %v3750
    %3934 = vmatpush.msra.mxu0 %v3746
    %3935 = vmatpush.msra.mxu0 %v3742
    %3936 = vmatpush.msra.mxu0 %v3738
    %3937 = vmatpush.msra.mxu0 %v3734
    %3938 = vmatpush.msra.mxu0 %v3730
    %3939 = vmatpush.msra.mxu0 %v3726
    %3940 = vmatpush.msra.mxu0 %v3722
    %3941 = vmatpush.msra.mxu0 %v3718
    %3942 = vmatpush.msra.mxu0 %v3714
    %3943 = vmatpush.msra.mxu0 %v3710
    %3944 = vmatpush.msra.mxu0 %v3706
    %3945 = vmatmul.f32.gmra.mxu0 %v3702
    %v3946 = vpop.f32.mrf.mxu0
    %v3947 = vadd.f32 0.0, %v3946
    %3948 = vdwg.mxu0
    %3949 = vmatpush.msra.mxu0 %v3830
    %3950 = vmatpush.msra.mxu0 %v3826
    %3951 = vmatpush.msra.mxu0 %v3822
    %3952 = vmatpush.msra.mxu0 %v3818
    %3953 = vmatpush.msra.mxu0 %v3814
    %3954 = vmatpush.msra.mxu0 %v3810
    %3955 = vmatpush.msra.mxu0 %v3806
    %3956 = vmatpush.msra.mxu0 %v3802
    %3957 = vmatpush.msra.mxu0 %v3798
    %3958 = vmatpush.msra.mxu0 %v3794
    %3959 = vmatpush.msra.mxu0 %v3790
    %3960 = vmatpush.msra.mxu0 %v3786
    %3961 = vmatpush.msra.mxu0 %v3782
    %3962 = vmatpush.msra.mxu0 %v3778
    %3963 = vmatpush.msra.mxu0 %v3774
    %3964 = vmatpush.msra.mxu0 %v3770
    %3965 = vmatmul.f32.gmra.mxu0 %v3703
    %v3966 = vpop.f32.mrf.mxu0
    %v3967 = vadd.f32 %v3947, %v3966
    %3968 = vdwg.mxu0
    %3969 = vmatpush.msra.mxu0 0.0
    %3970 = vmatpush.msra.mxu0 0.0
    %3971 = vmatpush.msra.mxu0 0.0
    %3972 = vmatpush.msra.mxu0 0.0
    %3973 = vmatpush.msra.mxu0 0.0
    %3974 = vmatpush.msra.mxu0 0.0
    %3975 = vmatpush.msra.mxu0 0.0
    %3976 = vmatpush.msra.mxu0 0.0
    %3977 = vmatpush.msra.mxu0 %v3862
    %3978 = vmatpush.msra.mxu0 %v3858
    %3979 = vmatpush.msra.mxu0 %v3854
    %3980 = vmatpush.msra.mxu0 %v3850
    %3981 = vmatpush.msra.mxu0 %v3846
    %3982 = vmatpush.msra.mxu0 %v3842
    %3983 = vmatpush.msra.mxu0 %v3838
    %3984 = vmatpush.msra.mxu0 %v3834
    %3985 = vmatmul.f32.gmra.mxu0 %v3867
    %v3986 = vpop.f32.mrf.mxu0
    %v3987 = vadd.f32 %v3967, %v3986
    %3988 = vdwg.mxu0
    %3989 = vmatpush.msra.mxu0 %v3767
    %3990 = vmatpush.msra.mxu0 %v3763
    %3991 = vmatpush.msra.mxu0 %v3759
    %3992 = vmatpush.msra.mxu0 %v3755
    %3993 = vmatpush.msra.mxu0 %v3751
    %3994 = vmatpush.msra.mxu0 %v3747
    %3995 = vmatpush.msra.mxu0 %v3743
    %3996 = vmatpush.msra.mxu0 %v3739
    %3997 = vmatpush.msra.mxu0 %v3735
    %3998 = vmatpush.msra.mxu0 %v3731
    %3999 = vmatpush.msra.mxu0 %v3727
    %4000 = vmatpush.msra.mxu0 %v3723
    %4001 = vmatpush.msra.mxu0 %v3719
    %4002 = vmatpush.msra.mxu0 %v3715
    %4003 = vmatpush.msra.mxu0 %v3711
    %4004 = vmatpush.msra.mxu0 %v3707
    %4005 = vmatmul.f32.gmra.mxu0 %v3702
    %v4006 = vpop.f32.mrf.mxu0
    %v4007 = vadd.f32 0.0, %v4006
    %4008 = vdwg.mxu0
    %4009 = vmatpush.msra.mxu0 %v3831
    %4010 = vmatpush.msra.mxu0 %v3827
    %4011 = vmatpush.msra.mxu0 %v3823
    %4012 = vmatpush.msra.mxu0 %v3819
    %4013 = vmatpush.msra.mxu0 %v3815
    %4014 = vmatpush.msra.mxu0 %v3811
    %4015 = vmatpush.msra.mxu0 %v3807
    %4016 = vmatpush.msra.mxu0 %v3803
    %4017 = vmatpush.msra.mxu0 %v3799
    %4018 = vmatpush.msra.mxu0 %v3795
    %4019 = vmatpush.msra.mxu0 %v3791
    %4020 = vmatpush.msra.mxu0 %v3787
    %4021 = vmatpush.msra.mxu0 %v3783
    %4022 = vmatpush.msra.mxu0 %v3779
    %4023 = vmatpush.msra.mxu0 %v3775
    %4024 = vmatpush.msra.mxu0 %v3771
    %4025 = vmatmul.f32.gmra.mxu0 %v3703
    %v4026 = vpop.f32.mrf.mxu0
    %v4027 = vadd.f32 %v4007, %v4026
    %4028 = vdwg.mxu0
    %4029 = vmatpush.msra.mxu0 0.0
    %4030 = vmatpush.msra.mxu0 0.0
    %4031 = vmatpush.msra.mxu0 0.0
    %4032 = vmatpush.msra.mxu0 0.0
    %4033 = vmatpush.msra.mxu0 0.0
    %4034 = vmatpush.msra.mxu0 0.0
    %4035 = vmatpush.msra.mxu0 0.0
    %4036 = vmatpush.msra.mxu0 0.0
    %4037 = vmatpush.msra.mxu0 %v3863
    %4038 = vmatpush.msra.mxu0 %v3859
    %4039 = vmatpush.msra.mxu0 %v3855
    %4040 = vmatpush.msra.mxu0 %v3851
    %4041 = vmatpush.msra.mxu0 %v3847
    %4042 = vmatpush.msra.mxu0 %v3843
    %4043 = vmatpush.msra.mxu0 %v3839
    %4044 = vmatpush.msra.mxu0 %v3835
    %4045 = vmatmul.f32.gmra.mxu0 %v3867
    %v4046 = vpop.f32.mrf.mxu0
    %v4047 = vadd.f32 %v4027, %v4046
    %4048 = vdwg.mxu0
    %4049 = vmatpush.msra.mxu0 %v3768
    %4050 = vmatpush.msra.mxu0 %v3764
    %4051 = vmatpush.msra.mxu0 %v3760
    %4052 = vmatpush.msra.mxu0 %v3756
    %4053 = vmatpush.msra.mxu0 %v3752
    %4054 = vmatpush.msra.mxu0 %v3748
    %4055 = vmatpush.msra.mxu0 %v3744
    %4056 = vmatpush.msra.mxu0 %v3740
    %4057 = vmatpush.msra.mxu0 %v3736
    %4058 = vmatpush.msra.mxu0 %v3732
    %4059 = vmatpush.msra.mxu0 %v3728
    %4060 = vmatpush.msra.mxu0 %v3724
    %4061 = vmatpush.msra.mxu0 %v3720
    %4062 = vmatpush.msra.mxu0 %v3716
    %4063 = vmatpush.msra.mxu0 %v3712
    %4064 = vmatpush.msra.mxu0 %v3708
    %4065 = vmatmul.f32.gmra.mxu0 %v3702
    %v4066 = vpop.f32.mrf.mxu0
    %v4067 = vadd.f32 0.0, %v4066
    %4068 = vdwg.mxu0
    %4069 = vmatpush.msra.mxu0 %v3832
    %4070 = vmatpush.msra.mxu0 %v3828
    %4071 = vmatpush.msra.mxu0 %v3824
    %4072 = vmatpush.msra.mxu0 %v3820
    %4073 = vmatpush.msra.mxu0 %v3816
    %4074 = vmatpush.msra.mxu0 %v3812
    %4075 = vmatpush.msra.mxu0 %v3808
    %4076 = vmatpush.msra.mxu0 %v3804
    %4077 = vmatpush.msra.mxu0 %v3800
    %4078 = vmatpush.msra.mxu0 %v3796
    %4079 = vmatpush.msra.mxu0 %v3792
    %4080 = vmatpush.msra.mxu0 %v3788
    %4081 = vmatpush.msra.mxu0 %v3784
    %4082 = vmatpush.msra.mxu0 %v3780
    %4083 = vmatpush.msra.mxu0 %v3776
    %4084 = vmatpush.msra.mxu0 %v3772
    %4085 = vmatmul.f32.gmra.mxu0 %v3703
    %v4086 = vpop.f32.mrf.mxu0
    %v4087 = vadd.f32 %v4067, %v4086
    %4088 = vdwg.mxu0
    %4089 = vmatpush.msra.mxu0 0.0
    %4090 = vmatpush.msra.mxu0 0.0
    %4091 = vmatpush.msra.mxu0 0.0
    %4092 = vmatpush.msra.mxu0 0.0
    %4093 = vmatpush.msra.mxu0 0.0
    %4094 = vmatpush.msra.mxu0 0.0
    %4095 = vmatpush.msra.mxu0 0.0
    %4096 = vmatpush.msra.mxu0 0.0
    %4097 = vmatpush.msra.mxu0 %v3864
    %4098 = vmatpush.msra.mxu0 %v3860
    %4099 = vmatpush.msra.mxu0 %v3856
    %4100 = vmatpush.msra.mxu0 %v3852
    %4101 = vmatpush.msra.mxu0 %v3848
    %4102 = vmatpush.msra.mxu0 %v3844
    %4103 = vmatpush.msra.mxu0 %v3840
    %4104 = vmatpush.msra.mxu0 %v3836
    %4105 = vmatmul.f32.gmra.mxu0 %v3867
    %v4106 = vpop.f32.mrf.mxu0
    %v4107 = vadd.f32 %v4087, %v4106
    %4108 = vdwg.mxu0
    %4109 = vst [vmem:[#allocation8] sm:$0xff] %v3927
    %4110 = vst [vmem:[#allocation8 + $0x8] sm:$0xff] %v3987
    %4111 = vst [vmem:[#allocation8 + $0x10] sm:$0xff] %v4047
    %4112 = vst [vmem:[#allocation8 + $0x18] sm:$0xff] %v4107
    // Predicated region
    $region18: #{tpu_custom_call.1} parent=1 // pred_check
      _
    $region19: #{tpu_custom_call.1} parent=1 // pred_check_branch
      %4114 = sbr.rel (0) target = $region21
    $region20: #{tpu_custom_call.1} parent=1 // pred_region
      %4116 = vsyncadd [#allocation5], 0
      %s4118 = sshll.u32 [#allocation8], 4
      %s4119 = int_to_ptr.vmem [resolvable:$true] %s4118
      %s4120 = sshll.u32 %s2, 4
      %s4121 = int_to_ptr.hbm [resolvable:$true] %s4120
      %4123 = dma.vmem_to_hbm [thread:$0]  %s4119, 512, %s4121, [#allocation5]
    $region21: #{tpu_custom_call.1} parent=1 // pred_fallthru
      _
    // Predicated region
    $region22: #{tpu_custom_call.1} parent=1 // pred_check
      _
    $region23: #{tpu_custom_call.1} parent=1 // pred_check_branch
      %4125 = sbr.rel (0) target = $region25
    $region24: #{tpu_custom_call.1} parent=1 // pred_region
      %4127 = dma.done [#allocation5], 512
    $region25: #{tpu_custom_call.1} parent=1 // pred_fallthru
      _
    %4128 = vsyncpa [#allocation4], 1
    %4129 = vsyncpa [#allocation7], 1
    %4130 = vsyncpa [#allocation5], 1

</llo_original>
